<compile_context>
chip_gen: v6e
topology: v6e:2x2x1
jax: 0.10.0
libtpu: 0.0.40
codegen_flags: <defaults>
</compile_context>

<pallas_src>
import numpy as np
import jax
import jax.numpy as jnp
from jax.experimental import pallas as pl
from jax.experimental.pallas import tpu as pltpu

# ----------------------------- model hyper-parameters ------------------------------
B = 2                        # total batch (demo)
BT = 2                       # batch tile processed per grid step
H0 = W0 = 16                 # input / land-mask spatial size
C = 16                       # conv channels
K = 5                        # conv kernel
PAD = K // 2                 # 'same' padding
CA_HID = C // 8              # ChannelAttention hidden width
SAK = 7                      # SpatialAttention kernel
SPAD = SAK // 2
FHID = 128                   # classifier hidden width

HA, WA = H0, W0              # conv1 output 16x16
HB, WB = HA // 2, WA // 2    # after pool1  8x8
HC, WC = HB // 2, WB // 2    # after pool2  4x4
HD, WD = HC // 2, WC // 2    # after pool3  2x2  (1/8 downscale)
H3, W3 = HD, WD
NFLAT = C * H3 * W3          # classifier in_features at this input size

# padded buffer heights (height halo only; width halo is folded into the weights)
HPA, HPB, HPC, HPD = HA + 2 * PAD, HB + 2 * PAD, HC + 2 * PAD, HD + 2 * PAD
HPS = H3 + 2 * SPAD


# ---------------------- host-side constant / weight folding ------------------------
def _toeplitz_rhs(wt, wout):
    """Torch conv weight [cout,cin,kh,kw] -> [kh, wout*cin, wout*cout] block-Toeplitz
    slabs with the width 'same' zero-padding folded in (out-of-range taps dropped)."""
    wt = np.asarray(wt, np.float32)
    cout, cin, kh, kw = wt.shape
    pad = kw // 2
    rhs = np.zeros((kh, wout * cin, wout * cout), np.float32)
    for ky in range(kh):
        for j in range(wout):
            for kx in range(kw):
                x = j + kx - pad
                if 0 <= x < wout:
                    rhs[ky, x * cin:(x + 1) * cin,
                        j * cout:(j + 1) * cout] = wt[:, :, ky, kx].T
    return rhs


def _sa_toeplitz(wt, wout, rep):
    """SpatialAttention 7x7 (2->1, no bias) conv weight -> [kh, 2*wout, wout*rep].
    Input lanes are (channel, w) channel-major; output columns pre-replicated rep(=C)
    times so the sigmoid-ed map multiplies the [*, W*C] activations directly."""
    wt = np.asarray(wt, np.float32)
    _, cin, kh, kw = wt.shape
    pad = kw // 2
    rhs = np.zeros((kh, cin * wout, wout * rep), np.float32)
    for ky in range(kh):
        for j in range(wout):
            for kx in range(kw):
                x = j + kx - pad
                if 0 <= x < wout:
                    for ch in range(cin):
                        rhs[ky, ch * wout + x, j * rep:(j + 1) * rep] = wt[0, ch, ky, kx]
    return rhs


def _pool_row_mat(hout, hp, kh=K):
    """AvgPool2d row-pair matrix acting on the conv-output row stack."""
    rows = BT * hp - (kh - 1)
    m = np.zeros((BT * (hout // 2), rows), np.float32)
    for b in range(BT):
        for i in range(hout // 2):
            m[b * (hout // 2) + i, b * hp + 2 * i] = 0.5
            m[b * (hout // 2) + i, b * hp + 2 * i + 1] = 0.5
    return m


def _pool_col_mat(wout, c):
    """AvgPool2d column-pair matrix acting on (w, c) lanes."""
    m = np.zeros((wout * c, (wout // 2) * c), np.float32)
    eye = 0.5 * np.eye(c, dtype=np.float32)
    for j in range(wout // 2):
        for r in range(2):
            m[(2 * j + r) * c:(2 * j + r + 1) * c, j * c:(j + 1) * c] = eye
    return m


def _row_select_mat(hout, hp, kh):
    rows = BT * hp - (kh - 1)
    m = np.zeros((BT * hout, rows), np.float32)
    for b in range(BT):
        for i in range(hout):
            m[b * hout + i, b * hp + i] = 1.0
    return m


def _pack(blocks, lanes, align):
    """Row-stack small 2-D constants into one [rows, lanes] slab.
    Returns (slab, {name: (row_off, nrows, ncols)}); offsets are 'align'-row aligned
    so bf16 sub-lane packing stays tile aligned."""
    offs, off = {}, 0
    for name, a in blocks:
        off = ((off + align - 1) // align) * align
        offs[name] = (off, a.shape[0], a.shape[1])
        off += a.shape[0]
    total = ((off + align - 1) // align) * align
    slab = np.zeros((total, lanes), np.float32)
    for name, a in blocks:
        o, r, c = offs[name]
        slab[o:o + r, :c] = np.asarray(a, np.float32)
    return slab, offs


# ------------------------------------ builder ---------------------------------------
def build_attention_net(params, mask):
    """Fold weights/constants once and return a jitted forward(x_nchw)->[B,1]."""
    bf16, f32 = jnp.bfloat16, jnp.float32

    # conv weights as width-halo-folded block-Toeplitz slabs
    rhs1 = _toeplitz_rhs(params['conv1_w'], WA)                 # [5, 16, 256]
    rhs2 = _toeplitz_rhs(params['conv2_w'], WB)                 # [5,128,128]
    rhs3 = _toeplitz_rhs(params['conv3_w'], WC)                 # [5, 64, 64]
    rhs4 = _toeplitz_rhs(params['conv4_w'], WD)                 # [5, 32, 32]
    sarhs = _sa_toeplitz(params['sa_conv_w'], W3, C).reshape(SAK * 2 * W3, W3 * C)

    # pooling / selection matrices
    phb1, pw1 = _pool_row_mat(HA, HPA), _pool_col_mat(WA, C)
    phb2, pw2 = _pool_row_mat(HB, HPB), _pool_col_mat(WB, C)
    phb3, pw3 = _pool_row_mat(HC, HPC), _pool_col_mat(WC, C)
    fsel = _row_select_mat(H3, HPD, K)
    sasel = _row_select_mat(H3, HPS, SAK)

    # ChannelAttention / SpatialAttention helper matrices
    sbv = np.zeros((BT, BT * H3), np.float32)                   # per-image row sum
    selb = np.zeros((BT, BT * H3 - (H3 - 1)), np.float32)       # per-image max select
    reprow = np.zeros((BT * H3, BT), np.float32)                # per-image row repeat
    for b in range(BT):
        sbv[b, b * H3:(b + 1) * H3] = 1.0
        selb[b, b * H3] = 1.0
        reprow[b * H3:(b + 1) * H3, b] = 1.0
    swavg = np.zeros((W3 * C, C), np.float32)                   # width-block average
    texp = np.zeros((C, W3 * C), np.float32)                    # channel -> (w,c) expand
    pmean = np.zeros((W3 * C, W3), np.float32)                  # channel mean per column
    eye = np.eye(C, dtype=np.float32)
    for j in range(W3):
        swavg[j * C:(j + 1) * C, :] = eye / (H3 * W3)
        texp[:, j * C:(j + 1) * C] = eye
        pmean[j * C:(j + 1) * C, j] = 1.0 / C
    wfc1 = np.asarray(params['ca_fc1_w'], np.float32)[:, :, 0, 0].T   # [C, C//8]
    wfc2 = np.asarray(params['ca_fc2_w'], np.float32)[:, :, 0, 0].T   # [C//8, C]

    # classifier layer 1: torch (C,H,W) flatten order, nearest-downscaled land mask
    # folded in, h-blocks concatenated along N for one K=W3*C, N=H3*FHID matmul.
    mask_np = np.asarray(mask, np.float32)
    stride = H0 // H3
    mask_d = (mask_np[::stride, ::stride][:H3, :W3] > 0.5).astype(np.float32)
    w1 = np.asarray(params['cls_w1'], np.float32).reshape(FHID, C, H3, W3)
    w1 = np.transpose(w1, (2, 3, 1, 0)) * mask_d[:, :, None, None]    # [h, w, c, out]
    w1p = w1.reshape(H3, W3 * C, FHID)
    w1cat = np.concatenate([w1p[h] for h in range(H3)], axis=1)       # [W3*C, H3*FHID]
    rowsel = np.zeros((H3 * BT, BT * H3), np.float32)
    for h in range(H3):
        for b in range(BT):
            rowsel[h * BT + b, b * H3 + h] = 1.0
    cw2 = np.asarray(params['cls_w2'], np.float32).T                  # [FHID, 1]

    # one bf16 slab for all the tiny matmul constants (one DMA instead of ~18)
    smw_np, OFF = _pack([
        ('sarhs', sarhs), ('phb1', phb1), ('phb2', phb2), ('phb3', phb3),
        ('pw3', pw3), ('fsel', fsel), ('sasel', sasel), ('sbv', sbv),
        ('selb', selb), ('swavg', swavg), ('wfc1', wfc1), ('wfc2', wfc2),
        ('texp', texp), ('reprow', reprow), ('pmean', pmean),
        ('rowsel', rowsel), ('cw2', cw2)], lanes=128, align=16)

    # one f32 slab for the elementwise-add constants (conv biases + classifier biases)
    fct_np = np.zeros((8, WA * C), np.float32)
    fct_np[0, :WA * C] = np.tile(np.asarray(params['conv1_b'], np.float32), WA)
    fct_np[1, :WB * C] = np.tile(np.asarray(params['conv2_b'], np.float32), WB)
    fct_np[2, :WC * C] = np.tile(np.asarray(params['conv3_b'], np.float32), WC)
    fct_np[3, :WD * C] = np.tile(np.asarray(params['conv4_b'], np.float32), WD)
    fct_np[4, :FHID] = np.asarray(params['cls_b1'], np.float32)
    fct_np[5, 0] = float(np.asarray(params['cls_b2'], np.float32).reshape(-1)[0])

    rhs1_d = jnp.asarray(rhs1, bf16)
    rhs2_d = jnp.asarray(rhs2, bf16)
    rhs3_d = jnp.asarray(rhs3, bf16)
    rhs4_d = jnp.asarray(rhs4, bf16)
    pw1_d = jnp.asarray(pw1, bf16)
    pw2_d = jnp.asarray(pw2, bf16)
    w1cat_d = jnp.asarray(w1cat, bf16)
    smw_d = jnp.asarray(smw_np, bf16)
    fct_d = jnp.asarray(fct_np, f32)

    sa_o = OFF['sarhs'][0]

    def smw(ref, name):
        o, r, c = OFF[name]
        return ref[o:o + r, 0:c]          # static slice -> one small load

    # ------------------------------------ kernel ------------------------------------
    def kernel(x_ref, rhs1_ref, rhs2_ref, rhs3_ref, rhs4_ref, pw1_ref, pw2_ref,
               w1cat_ref, smw_ref, fct_ref, out_ref,
               pad2_ref, pad3_ref, pad4_ref, sapad_ref):
        bf = lambda v: v.astype(jnp.bfloat16)

        def mm(a, b):                      # bf16 MXU matmul, f32 accumulation
            return jnp.dot(bf(a), bf(b), preferred_element_type=jnp.float32)

        def sig_fast(v):                   # attention gates: exp + approx recip (EUP)
            return pl.reciprocal(1.0 + jnp.exp(-v), approx=True)

        def conv_rows(src_bf, get_w, kh):
            """'same' conv = kh row-shifted MXU matmuls vs block-Toeplitz weights."""
            rows = src_bf.shape[0] - (kh - 1)
            acc = jnp.dot(src_bf[0:rows], get_w(0), preferred_element_type=jnp.float32)
            for ky in range(1, kh):
                acc = acc + jnp.dot(src_bf[ky:ky + rows], get_w(ky),
                                    preferred_element_type=jnp.float32)
            return acc

        def zero_halo(dst_ref, hp, hint, pad):
            z = jnp.zeros((pad, dst_ref.shape[1]), jnp.float32)
            for b in range(BT):
                dst_ref[b * hp:b * hp + pad, :] = z
                dst_ref[b * hp + pad + hint:(b + 1) * hp, :] = z

        def store_interior(dst_ref, val, hout, hp, pad):
            for b in range(BT):            # full-lane unmasked slab store per image
                dst_ref[b * hp + pad:b * hp + pad + hout, :] = val[b * hout:(b + 1) * hout, :]

        # only the height-halo rows need zeros (interiors are fully rewritten below)
        zero_halo(pad2_ref, HPB, HB, PAD)
        zero_halo(pad3_ref, HPC, HC, PAD)
        zero_halo(pad4_ref, HPD, HD, PAD)
        zero_halo(sapad_ref, HPS, H3, SPAD)

        # ------------- convblock1: (conv5x5 'same' + ReLU [+ AvgPool2x2]) x4 --------
        r1 = jnp.maximum(conv_rows(bf(x_ref[...]), lambda t: rhs1_ref[t], K)
                         + fct_ref[0:1, 0:WA * C], 0.0)
        p1 = mm(mm(smw(smw_ref, 'phb1'), r1), pw1_ref[...])
        store_interior(pad2_ref, p1, HB, HPB, PAD)

        r2 = jnp.maximum(conv_rows(bf(pad2_ref[...]), lambda t: rhs2_ref[t], K)
                         + fct_ref[1:2, 0:WB * C], 0.0)
        p2 = mm(mm(smw(smw_ref, 'phb2'), r2), pw2_ref[...])
        store_interior(pad3_ref, p2, HC, HPC, PAD)

        r3 = jnp.maximum(conv_rows(bf(pad3_ref[...]), lambda t: rhs3_ref[t], K)
                         + fct_ref[2:3, 0:WC * C], 0.0)
        p3 = mm(mm(smw(smw_ref, 'phb3'), r3), smw(smw_ref, 'pw3'))
        store_interior(pad4_ref, p3, HD, HPD, PAD)

        r4 = jnp.maximum(conv_rows(bf(pad4_ref[...]), lambda t: rhs4_ref[t], K)
                         + fct_ref[3:4, 0:WD * C], 0.0)
        feat = mm(smw(smw_ref, 'fsel'), r4)                         # [BT*H3, W3*C]

        # ----------------------------- ChannelAttention ------------------------------
        avg_c = mm(mm(smw(smw_ref, 'sbv'), feat), smw(smw_ref, 'swavg'))   # [BT, C]
        m_lane = feat[:, 0:C]
        for j in range(1, W3):                                      # max over width blocks
            m_lane = jnp.maximum(m_lane, feat[:, j * C:(j + 1) * C])
        rows_v = BT * H3 - (H3 - 1)
        hmax = m_lane[0:rows_v, :]
        for t in range(1, H3):                                      # max over rows (in vregs)
            hmax = jnp.maximum(hmax, m_lane[t:t + rows_v, :])
        max_c = mm(smw(smw_ref, 'selb'), hmax)                      # [BT, C]

        def ca_fc(v):
            h = jnp.maximum(mm(v, smw(smw_ref, 'wfc1')), 0.0)
            return mm(h, smw(smw_ref, 'wfc2'))

        ca = sig_fast(ca_fc(avg_c) + ca_fc(max_c))                  # [BT, C]
        ca_rows = mm(smw(smw_ref, 'reprow'), mm(ca, smw(smw_ref, 'texp')))
        x1 = feat * ca_rows                                         # ca(x) * x

        # ----------------------------- SpatialAttention ------------------------------
        mean_all = mm(x1, smw(smw_ref, 'pmean'))                    # [BT*H3, W3]
        maxes = [jnp.max(x1[:, j * C:(j + 1) * C], axis=1, keepdims=True)
                 for j in range(W3)]
        sa_in = jnp.concatenate([mean_all] + maxes, axis=1)         # [BT*H3, 2*W3] ch-major
        store_interior(sapad_ref, sa_in, H3, HPS, SPAD)

        sa_full = conv_rows(
            bf(sapad_ref[...]),
            lambda t: smw_ref[sa_o + 2 * W3 * t:sa_o + 2 * W3 * (t + 1), 0:W3 * C],
            SAK)
        # row-select valid rows BEFORE the sigmoid (commutes with elementwise op)
        sa_act = sig_fast(mm(smw(smw_ref, 'sasel'), sa_full))       # [BT*H3, W3*C]
        x2 = sa_act * x1                                            # mask folded into w1cat

        # ---------- classifier: Linear(mask folded) -> Tanh -> Linear -> Sigmoid -----
        ybig = mm(x2, w1cat_ref[...])                               # [BT*H3, H3*FHID]
        rsel = smw(smw_ref, 'rowsel')                               # [H3*BT, BT*H3]
        hid = mm(rsel[0:BT, :], ybig[:, 0:FHID])
        for h in range(1, H3):
            hid = hid + mm(rsel[h * BT:(h + 1) * BT, :],
                           ybig[:, h * FHID:(h + 1) * FHID])
        hid = jnp.tanh(hid + fct_ref[4:5, 0:FHID])                  # [BT, FHID]
        logit = mm(hid, smw(smw_ref, 'cw2')) + fct_ref[5:6, 0:1]    # [BT, 1]
        out_ref[...] = 1.0 / (1.0 + jnp.exp(-logit))                # exact final sigmoid

    # ------------------------------- pallas_call ------------------------------------
    def wspec(shp):
        return pl.BlockSpec(shp, lambda i, _n=len(shp): (0,) * _n)  # resident weights

    grid = (B // BT,)
    fwd = pl.pallas_call(
        kernel,
        out_shape=jax.ShapeDtypeStruct((B, 1), jnp.float32),
        grid=grid,
        in_specs=[
            pl.BlockSpec((BT * HPA, W0), lambda i: (i, 0)),          # x (batch-tiled)
            wspec((K, W0, WA * C)), wspec((K, WB * C, WB * C)),
            wspec((K, WC * C, WC * C)), wspec((K, WD * C, WD * C)),
            wspec(pw1_d.shape), wspec(pw2_d.shape), wspec(w1cat_d.shape),
            wspec(smw_d.shape), wspec(fct_d.shape),
        ],
        # NOTE: for B > BT the out block's row count must become a multiple of 8
        # (pad the batch); at the demo size the block equals the full array.
        out_specs=pl.BlockSpec((BT, 1), lambda i: (i, 0)),
        scratch_shapes=[
            pltpu.VMEM((BT * HPB, WB * C), jnp.float32),             # pad2 (lane-dense)
            pltpu.VMEM((BT * HPC, WC * C), jnp.float32),             # pad3
            pltpu.VMEM((BT * HPD, WD * C), jnp.float32),             # pad4
            pltpu.VMEM((BT * HPS, 2 * W3), jnp.float32),             # SA padded map
        ],
        compiler_params=pltpu.CompilerParams(
            dimension_semantics=("parallel",)),                      # v7x: split batch tiles
    )

    @jax.jit
    def forward(x_nchw):
        x = jnp.asarray(x_nchw, jnp.float32)[:, 0]                   # [B, H0, W0]
        xpad = jnp.pad(x, ((0, 0), (PAD, PAD), (0, 0)))              # height halo only
        xpad = xpad.reshape(B * HPA, W0)
        return fwd(xpad, rhs1_d, rhs2_d, rhs3_d, rhs4_d, pw1_d, pw2_d,
                   w1cat_d, smw_d, fct_d)

    return forward


# ---------------------------- deterministic parameters ------------------------------
def init_params(key):
    ks = jax.random.split(key, 15)

    def t(k, shape):
        return 0.1 * jax.random.normal(k, shape, jnp.float32)

    return {
        'conv1_w': t(ks[0], (C, 1, K, K)), 'conv1_b': t(ks[1], (C,)),
        'conv2_w': t(ks[2], (C, C, K, K)), 'conv2_b': t(ks[3], (C,)),
        'conv3_w': t(ks[4], (C, C, K, K)), 'conv3_b': t(ks[5], (C,)),
        'conv4_w': t(ks[6], (C, C, K, K)), 'conv4_b': t(ks[7], (C,)),
        'ca_fc1_w': t(ks[8], (CA_HID, C, 1, 1)),        # Conv2d(16, 2, 1, bias=False)
        'ca_fc2_w': t(ks[9], (C, CA_HID, 1, 1)),        # Conv2d(2, 16, 1, bias=False)
        'sa_conv_w': t(ks[10], (1, 2, SAK, SAK)),       # Conv2d(2, 1, 7, bias=False)
        'cls_w1': t(ks[11], (FHID, NFLAT)),             # Linear(C*H3*W3, 128)
        'cls_b1': t(ks[12], (FHID,)),
        'cls_w2': t(ks[13], (1, FHID)),                 # Linear(128, 1)
        'cls_b2': t(ks[14], (1,)),
    }


# -------------------------------------- main -----------------------------------------
if __name__ == "__main__":
    key = jax.random.PRNGKey(0)
    kp, kx = jax.random.split(key)
    params = init_params(kp)

    # deterministic land mask: left half land (0), right half ocean (1)
    mask = jnp.ones((H0, W0), jnp.float32).at[:, :W0 // 2].set(0.0)

    x = jax.random.normal(kx, (B, 1, H0, W0), jnp.float32)   # NCHW, like PyTorch

    forward = build_attention_net(params, mask)
    out = jax.block_until_ready(forward(x))
    assert out.shape == (B, 1)
    assert bool(jnp.all(jnp.isfinite(out)))
    print("KERNEL_OK")
</pallas_src>

<mosaic_0001>
module attributes {stable_mosaic.version = 11 : i64} {
  func.func @kernel(%arg0: i32, %arg1: memref<40x16xf32, #tpu.memory_space<vmem>>, %arg2: memref<5x16x256xbf16, #tpu.memory_space<vmem>>, %arg3: memref<5x128x128xbf16, #tpu.memory_space<vmem>>, %arg4: memref<5x64x64xbf16, #tpu.memory_space<vmem>>, %arg5: memref<5x32x32xbf16, #tpu.memory_space<vmem>>, %arg6: memref<256x128xbf16, #tpu.memory_space<vmem>>, %arg7: memref<128x64xbf16, #tpu.memory_space<vmem>>, %arg8: memref<32x256xbf16, #tpu.memory_space<vmem>>, %arg9: memref<480x128xbf16, #tpu.memory_space<vmem>>, %arg10: memref<8x256xf32, #tpu.memory_space<vmem>>, %arg11: memref<2x1xf32, #tpu.memory_space<vmem>>, %arg12: memref<24x128xf32, #tpu.memory_space<vmem>>, %arg13: memref<16x64xf32, #tpu.memory_space<vmem>>, %arg14: memref<12x32xf32, #tpu.memory_space<vmem>>, %arg15: memref<16x4xf32, #tpu.memory_space<vmem>>) attributes {dimension_semantics = [#tpu.dimension_semantics<parallel>], iteration_bounds = array<i64: 1>, scalar_prefetch = 0 : i64, scratch_operands = 4 : i64, tpu.core_type = #tpu.core_type<tc>, window_params = [{transform_indices = @transform_0, window_bounds = array<i64: 40, 16>}, {pipeline_mode = #tpu.pipeline_mode<synchronous>, transform_indices = @transform_1, window_bounds = array<i64: 5, 16, 256>}, {pipeline_mode = #tpu.pipeline_mode<synchronous>, transform_indices = @transform_2, window_bounds = array<i64: 5, 128, 128>}, {pipeline_mode = #tpu.pipeline_mode<synchronous>, transform_indices = @transform_3, window_bounds = array<i64: 5, 64, 64>}, {pipeline_mode = #tpu.pipeline_mode<synchronous>, transform_indices = @transform_4, window_bounds = array<i64: 5, 32, 32>}, {pipeline_mode = #tpu.pipeline_mode<synchronous>, transform_indices = @transform_5, window_bounds = array<i64: 256, 128>}, {pipeline_mode = #tpu.pipeline_mode<synchronous>, transform_indices = @transform_6, window_bounds = array<i64: 128, 64>}, {pipeline_mode = #tpu.pipeline_mode<synchronous>, transform_indices = @transform_7, window_bounds = array<i64: 32, 256>}, {pipeline_mode = #tpu.pipeline_mode<synchronous>, transform_indices = @transform_8, window_bounds = array<i64: 480, 128>}, {pipeline_mode = #tpu.pipeline_mode<synchronous>, transform_indices = @transform_9, window_bounds = array<i64: 8, 256>}, {transform_indices = @transform_10, window_bounds = array<i64: 2, 1>}]} {
    %cst = arith.constant 0.000000e+00 : f32
    %0 = vector.broadcast %cst : f32 to vector<2x128xf32>
    %c0 = arith.constant 0 : index
    %c0_0 = arith.constant 0 : index
    %1 = vector.load %arg12[%c0, %c0_0] : memref<24x128xf32, #tpu.memory_space<vmem>>, vector<2x128xf32>
    tpu.vector_store %arg12[%c0, %c0_0], %0 {strides = array<i32>} : memref<24x128xf32, #tpu.memory_space<vmem>>, vector<2x128xf32>,
    %c10 = arith.constant 10 : index
    %c0_1 = arith.constant 0 : index
    %2 = vector.load %arg12[%c10, %c0_1] : memref<24x128xf32, #tpu.memory_space<vmem>>, vector<2x128xf32>
    tpu.vector_store %arg12[%c10, %c0_1], %0 {strides = array<i32>} : memref<24x128xf32, #tpu.memory_space<vmem>>, vector<2x128xf32>,
    %c12 = arith.constant 12 : index
    %c0_2 = arith.constant 0 : index
    %3 = vector.load %arg12[%c12, %c0_2] : memref<24x128xf32, #tpu.memory_space<vmem>>, vector<2x128xf32>
    tpu.vector_store %arg12[%c12, %c0_2], %0 {strides = array<i32>} : memref<24x128xf32, #tpu.memory_space<vmem>>, vector<2x128xf32>,
    %c22 = arith.constant 22 : index
    %c0_3 = arith.constant 0 : index
    %4 = vector.load %arg12[%c22, %c0_3] : memref<24x128xf32, #tpu.memory_space<vmem>>, vector<2x128xf32>
    tpu.vector_store %arg12[%c22, %c0_3], %0 {strides = array<i32>} : memref<24x128xf32, #tpu.memory_space<vmem>>, vector<2x128xf32>,
    %cst_4 = arith.constant 0.000000e+00 : f32
    %5 = vector.broadcast %cst_4 : f32 to vector<2x64xf32>
    %c0_5 = arith.constant 0 : index
    %c0_6 = arith.constant 0 : index
    %6 = vector.load %arg13[%c0_5, %c0_6] : memref<16x64xf32, #tpu.memory_space<vmem>>, vector<2x64xf32>
    tpu.vector_store %arg13[%c0_5, %c0_6], %5 {strides = array<i32>} : memref<16x64xf32, #tpu.memory_space<vmem>>, vector<2x64xf32>,
    %c6 = arith.constant 6 : index
    %c0_7 = arith.constant 0 : index
    %7 = vector.load %arg13[%c6, %c0_7] : memref<16x64xf32, #tpu.memory_space<vmem>>, vector<2x64xf32>
    tpu.vector_store %arg13[%c6, %c0_7], %5 {strides = array<i32>} : memref<16x64xf32, #tpu.memory_space<vmem>>, vector<2x64xf32>,
    %c8 = arith.constant 8 : index
    %c0_8 = arith.constant 0 : index
    %8 = vector.load %arg13[%c8, %c0_8] : memref<16x64xf32, #tpu.memory_space<vmem>>, vector<2x64xf32>
    tpu.vector_store %arg13[%c8, %c0_8], %5 {strides = array<i32>} : memref<16x64xf32, #tpu.memory_space<vmem>>, vector<2x64xf32>,
    %c14 = arith.constant 14 : index
    %c0_9 = arith.constant 0 : index
    %9 = vector.load %arg13[%c14, %c0_9] : memref<16x64xf32, #tpu.memory_space<vmem>>, vector<2x64xf32>
    tpu.vector_store %arg13[%c14, %c0_9], %5 {strides = array<i32>} : memref<16x64xf32, #tpu.memory_space<vmem>>, vector<2x64xf32>,
    %cst_10 = arith.constant 0.000000e+00 : f32
    %10 = vector.broadcast %cst_10 : f32 to vector<2x32xf32>
    %c0_11 = arith.constant 0 : index
    %c0_12 = arith.constant 0 : index
    %11 = vector.load %arg14[%c0_11, %c0_12] : memref<12x32xf32, #tpu.memory_space<vmem>>, vector<2x32xf32>
    tpu.vector_store %arg14[%c0_11, %c0_12], %10 {strides = array<i32>} : memref<12x32xf32, #tpu.memory_space<vmem>>, vector<2x32xf32>,
    %c4 = arith.constant 4 : index
    %c0_13 = arith.constant 0 : index
    %12 = vector.load %arg14[%c4, %c0_13] : memref<12x32xf32, #tpu.memory_space<vmem>>, vector<2x32xf32>
    tpu.vector_store %arg14[%c4, %c0_13], %10 {strides = array<i32>} : memref<12x32xf32, #tpu.memory_space<vmem>>, vector<2x32xf32>,
    %c6_14 = arith.constant 6 : index
    %c0_15 = arith.constant 0 : index
    %13 = vector.load %arg14[%c6_14, %c0_15] : memref<12x32xf32, #tpu.memory_space<vmem>>, vector<2x32xf32>
    tpu.vector_store %arg14[%c6_14, %c0_15], %10 {strides = array<i32>} : memref<12x32xf32, #tpu.memory_space<vmem>>, vector<2x32xf32>,
    %c10_16 = arith.constant 10 : index
    %c0_17 = arith.constant 0 : index
    %14 = vector.load %arg14[%c10_16, %c0_17] : memref<12x32xf32, #tpu.memory_space<vmem>>, vector<2x32xf32>
    tpu.vector_store %arg14[%c10_16, %c0_17], %10 {strides = array<i32>} : memref<12x32xf32, #tpu.memory_space<vmem>>, vector<2x32xf32>,
    %cst_18 = arith.constant 0.000000e+00 : f32
    %15 = vector.broadcast %cst_18 : f32 to vector<3x4xf32>
    %c0_19 = arith.constant 0 : index
    %c0_20 = arith.constant 0 : index
    %16 = vector.load %arg15[%c0_19, %c0_20] : memref<16x4xf32, #tpu.memory_space<vmem>>, vector<3x4xf32>
    tpu.vector_store %arg15[%c0_19, %c0_20], %15 {strides = array<i32>} : memref<16x4xf32, #tpu.memory_space<vmem>>, vector<3x4xf32>,
    %c5 = arith.constant 5 : index
    %c0_21 = arith.constant 0 : index
    %17 = vector.load %arg15[%c5, %c0_21] : memref<16x4xf32, #tpu.memory_space<vmem>>, vector<3x4xf32>
    tpu.vector_store %arg15[%c5, %c0_21], %15 {strides = array<i32>} : memref<16x4xf32, #tpu.memory_space<vmem>>, vector<3x4xf32>,
    %c8_22 = arith.constant 8 : index
    %c0_23 = arith.constant 0 : index
    %18 = vector.load %arg15[%c8_22, %c0_23] : memref<16x4xf32, #tpu.memory_space<vmem>>, vector<3x4xf32>
    tpu.vector_store %arg15[%c8_22, %c0_23], %15 {strides = array<i32>} : memref<16x4xf32, #tpu.memory_space<vmem>>, vector<3x4xf32>,
    %c13 = arith.constant 13 : index
    %c0_24 = arith.constant 0 : index
    %19 = vector.load %arg15[%c13, %c0_24] : memref<16x4xf32, #tpu.memory_space<vmem>>, vector<3x4xf32>
    tpu.vector_store %arg15[%c13, %c0_24], %15 {strides = array<i32>} : memref<16x4xf32, #tpu.memory_space<vmem>>, vector<3x4xf32>,
    %c0_25 = arith.constant 0 : index
    %c0_26 = arith.constant 0 : index
    %20 = vector.load %arg1[%c0_25, %c0_26] : memref<40x16xf32, #tpu.memory_space<vmem>>, vector<40x16xf32>
    %21 = arith.truncf %20 : vector<40x16xf32> to vector<40x16xbf16>
    %22 = vector.extract_strided_slice %21 {offsets = [0, 0], sizes = [36, 16], strides = [1, 1]} : vector<40x16xbf16> to vector<36x16xbf16>
    %c0_27 = arith.constant 0 : index
    %c0_28 = arith.constant 0 : index
    %c0_29 = arith.constant 0 : index
    %23 = vector.load %arg2[%c0_27, %c0_28, %c0_29] : memref<5x16x256xbf16, #tpu.memory_space<vmem>>, vector<1x16x256xbf16>
    %24 = vector.shape_cast %23 : vector<1x16x256xbf16> to vector<16x256xbf16>
    %cst_30 = arith.constant dense<0.000000e+00> : vector<36x256xf32>
    %25 = tpu.matmul %22, %24, %cst_30 {dimension_numbers = #tpu.dot_dimension_numbers<[1], [0], [0], [1], [0, 0, 1, 1], [], []>} : vector<36x16xbf16>, vector<16x256xbf16>, vector<36x256xf32> -> vector<36x256xf32>
    %26 = vector.extract_strided_slice %21 {offsets = [1, 0], sizes = [36, 16], strides = [1, 1]} : vector<40x16xbf16> to vector<36x16xbf16>
    %c1 = arith.constant 1 : index
    %c0_31 = arith.constant 0 : index
    %c0_32 = arith.constant 0 : index
    %27 = vector.load %arg2[%c1, %c0_31, %c0_32] : memref<5x16x256xbf16, #tpu.memory_space<vmem>>, vector<1x16x256xbf16>
    %28 = vector.shape_cast %27 : vector<1x16x256xbf16> to vector<16x256xbf16>
    %cst_33 = arith.constant dense<0.000000e+00> : vector<36x256xf32>
    %29 = tpu.matmul %26, %28, %cst_33 {dimension_numbers = #tpu.dot_dimension_numbers<[1], [0], [0], [1], [0, 0, 1, 1], [], []>} : vector<36x16xbf16>, vector<16x256xbf16>, vector<36x256xf32> -> vector<36x256xf32>
    %30 = arith.addf %25, %29 : vector<36x256xf32>
    %31 = vector.extract_strided_slice %21 {offsets = [2, 0], sizes = [36, 16], strides = [1, 1]} : vector<40x16xbf16> to vector<36x16xbf16>
    %c2 = arith.constant 2 : index
    %c0_34 = arith.constant 0 : index
    %c0_35 = arith.constant 0 : index
    %32 = vector.load %arg2[%c2, %c0_34, %c0_35] : memref<5x16x256xbf16, #tpu.memory_space<vmem>>, vector<1x16x256xbf16>
    %33 = vector.shape_cast %32 : vector<1x16x256xbf16> to vector<16x256xbf16>
    %cst_36 = arith.constant dense<0.000000e+00> : vector<36x256xf32>
    %34 = tpu.matmul %31, %33, %cst_36 {dimension_numbers = #tpu.dot_dimension_numbers<[1], [0], [0], [1], [0, 0, 1, 1], [], []>} : vector<36x16xbf16>, vector<16x256xbf16>, vector<36x256xf32> -> vector<36x256xf32>
    %35 = arith.addf %30, %34 : vector<36x256xf32>
    %36 = vector.extract_strided_slice %21 {offsets = [3, 0], sizes = [36, 16], strides = [1, 1]} : vector<40x16xbf16> to vector<36x16xbf16>
    %c3 = arith.constant 3 : index
    %c0_37 = arith.constant 0 : index
    %c0_38 = arith.constant 0 : index
    %37 = vector.load %arg2[%c3, %c0_37, %c0_38] : memref<5x16x256xbf16, #tpu.memory_space<vmem>>, vector<1x16x256xbf16>
    %38 = vector.shape_cast %37 : vector<1x16x256xbf16> to vector<16x256xbf16>
    %cst_39 = arith.constant dense<0.000000e+00> : vector<36x256xf32>
    %39 = tpu.matmul %36, %38, %cst_39 {dimension_numbers = #tpu.dot_dimension_numbers<[1], [0], [0], [1], [0, 0, 1, 1], [], []>} : vector<36x16xbf16>, vector<16x256xbf16>, vector<36x256xf32> -> vector<36x256xf32>
    %40 = arith.addf %35, %39 : vector<36x256xf32>
    %41 = vector.extract_strided_slice %21 {offsets = [4, 0], sizes = [36, 16], strides = [1, 1]} : vector<40x16xbf16> to vector<36x16xbf16>
    %c4_40 = arith.constant 4 : index
    %c0_41 = arith.constant 0 : index
    %c0_42 = arith.constant 0 : index
    %42 = vector.load %arg2[%c4_40, %c0_41, %c0_42] : memref<5x16x256xbf16, #tpu.memory_space<vmem>>, vector<1x16x256xbf16>
    %43 = vector.shape_cast %42 : vector<1x16x256xbf16> to vector<16x256xbf16>
    %cst_43 = arith.constant dense<0.000000e+00> : vector<36x256xf32>
    %44 = tpu.matmul %41, %43, %cst_43 {dimension_numbers = #tpu.dot_dimension_numbers<[1], [0], [0], [1], [0, 0, 1, 1], [], []>} : vector<36x16xbf16>, vector<16x256xbf16>, vector<36x256xf32> -> vector<36x256xf32>
    %45 = arith.addf %40, %44 : vector<36x256xf32>
    %c0_44 = arith.constant 0 : index
    %c0_45 = arith.constant 0 : index
    %46 = vector.load %arg10[%c0_44, %c0_45] : memref<8x256xf32, #tpu.memory_space<vmem>>, vector<1x256xf32>
    %47 = vector.broadcast %46 : vector<1x256xf32> to vector<36x256xf32>
    %48 = arith.addf %45, %47 : vector<36x256xf32>
    %cst_46 = arith.constant 0.000000e+00 : f32
    %49 = vector.broadcast %cst_46 : f32 to vector<36x256xf32>
    %50 = arith.maximumf %48, %49 : vector<36x256xf32>
    %c32 = arith.constant 32 : index
    %c0_47 = arith.constant 0 : index
    %51 = vector.load %arg9[%c32, %c0_47] : memref<480x128xbf16, #tpu.memory_space<vmem>>, vector<16x36xbf16>
    %52 = arith.truncf %50 : vector<36x256xf32> to vector<36x256xbf16>
    %cst_48 = arith.constant dense<0.000000e+00> : vector<16x256xf32>
    %53 = tpu.matmul %51, %52, %cst_48 {dimension_numbers = #tpu.dot_dimension_numbers<[1], [0], [0], [1], [0, 0, 1, 1], [], []>} : vector<16x36xbf16>, vector<36x256xbf16>, vector<16x256xf32> -> vector<16x256xf32>
    %c0_49 = arith.constant 0 : index
    %c0_50 = arith.constant 0 : index
    %54 = vector.load %arg6[%c0_49, %c0_50] : memref<256x128xbf16, #tpu.memory_space<vmem>>, vector<256x128xbf16>
    %55 = arith.truncf %53 : vector<16x256xf32> to vector<16x256xbf16>
    %cst_51 = arith.constant dense<0.000000e+00> : vector<16x128xf32>
    %56 = tpu.matmul %55, %54, %cst_51 {dimension_numbers = #tpu.dot_dimension_numbers<[1], [0], [0], [1], [0, 0, 1, 1], [], []>} : vector<16x256xbf16>, vector<256x128xbf16>, vector<16x128xf32> -> vector<16x128xf32>
    %57 = vector.extract_strided_slice %56 {offsets = [0, 0], sizes = [8, 128], strides = [1, 1]} : vector<16x128xf32> to vector<8x128xf32>
    %c2_52 = arith.constant 2 : index
    %c0_53 = arith.constant 0 : index
    %58 = vector.load %arg12[%c2_52, %c0_53] : memref<24x128xf32, #tpu.memory_space<vmem>>, vector<8x128xf32>
    tpu.vector_store %arg12[%c2_52, %c0_53], %57 {strides = array<i32>} : memref<24x128xf32, #tpu.memory_space<vmem>>, vector<8x128xf32>,
    %59 = vector.extract_strided_slice %56 {offsets = [8, 0], sizes = [8, 128], strides = [1, 1]} : vector<16x128xf32> to vector<8x128xf32>
    %c14_54 = arith.constant 14 : index
    %c0_55 = arith.constant 0 : index
    %60 = vector.load %arg12[%c14_54, %c0_55] : memref<24x128xf32, #tpu.memory_space<vmem>>, vector<8x128xf32>
    tpu.vector_store %arg12[%c14_54, %c0_55], %59 {strides = array<i32>} : memref<24x128xf32, #tpu.memory_space<vmem>>, vector<8x128xf32>,
    %c0_56 = arith.constant 0 : index
    %c0_57 = arith.constant 0 : index
    %61 = vector.load %arg12[%c0_56, %c0_57] : memref<24x128xf32, #tpu.memory_space<vmem>>, vector<24x128xf32>
    %62 = arith.truncf %61 : vector<24x128xf32> to vector<24x128xbf16>
    %63 = vector.extract_strided_slice %62 {offsets = [0, 0], sizes = [20, 128], strides = [1, 1]} : vector<24x128xbf16> to vector<20x128xbf16>
    %c0_58 = arith.constant 0 : index
    %c0_59 = arith.constant 0 : index
    %c0_60 = arith.constant 0 : index
    %64 = vector.load %arg3[%c0_58, %c0_59, %c0_60] : memref<5x128x128xbf16, #tpu.memory_space<vmem>>, vector<1x128x128xbf16>
    %65 = vector.shape_cast %64 : vector<1x128x128xbf16> to vector<128x128xbf16>
    %cst_61 = arith.constant dense<0.000000e+00> : vector<20x128xf32>
    %66 = tpu.matmul %63, %65, %cst_61 {dimension_numbers = #tpu.dot_dimension_numbers<[1], [0], [0], [1], [0, 0, 1, 1], [], []>} : vector<20x128xbf16>, vector<128x128xbf16>, vector<20x128xf32> -> vector<20x128xf32>
    %67 = vector.extract_strided_slice %62 {offsets = [1, 0], sizes = [20, 128], strides = [1, 1]} : vector<24x128xbf16> to vector<20x128xbf16>
    %c1_62 = arith.constant 1 : index
    %c0_63 = arith.constant 0 : index
    %c0_64 = arith.constant 0 : index
    %68 = vector.load %arg3[%c1_62, %c0_63, %c0_64] : memref<5x128x128xbf16, #tpu.memory_space<vmem>>, vector<1x128x128xbf16>
    %69 = vector.shape_cast %68 : vector<1x128x128xbf16> to vector<128x128xbf16>
    %cst_65 = arith.constant dense<0.000000e+00> : vector<20x128xf32>
    %70 = tpu.matmul %67, %69, %cst_65 {dimension_numbers = #tpu.dot_dimension_numbers<[1], [0], [0], [1], [0, 0, 1, 1], [], []>} : vector<20x128xbf16>, vector<128x128xbf16>, vector<20x128xf32> -> vector<20x128xf32>
    %71 = arith.addf %66, %70 : vector<20x128xf32>
    %72 = vector.extract_strided_slice %62 {offsets = [2, 0], sizes = [20, 128], strides = [1, 1]} : vector<24x128xbf16> to vector<20x128xbf16>
    %c2_66 = arith.constant 2 : index
    %c0_67 = arith.constant 0 : index
    %c0_68 = arith.constant 0 : index
    %73 = vector.load %arg3[%c2_66, %c0_67, %c0_68] : memref<5x128x128xbf16, #tpu.memory_space<vmem>>, vector<1x128x128xbf16>
    %74 = vector.shape_cast %73 : vector<1x128x128xbf16> to vector<128x128xbf16>
    %cst_69 = arith.constant dense<0.000000e+00> : vector<20x128xf32>
    %75 = tpu.matmul %72, %74, %cst_69 {dimension_numbers = #tpu.dot_dimension_numbers<[1], [0], [0], [1], [0, 0, 1, 1], [], []>} : vector<20x128xbf16>, vector<128x128xbf16>, vector<20x128xf32> -> vector<20x128xf32>
    %76 = arith.addf %71, %75 : vector<20x128xf32>
    %77 = vector.extract_strided_slice %62 {offsets = [3, 0], sizes = [20, 128], strides = [1, 1]} : vector<24x128xbf16> to vector<20x128xbf16>
    %c3_70 = arith.constant 3 : index
    %c0_71 = arith.constant 0 : index
    %c0_72 = arith.constant 0 : index
    %78 = vector.load %arg3[%c3_70, %c0_71, %c0_72] : memref<5x128x128xbf16, #tpu.memory_space<vmem>>, vector<1x128x128xbf16>
    %79 = vector.shape_cast %78 : vector<1x128x128xbf16> to vector<128x128xbf16>
    %cst_73 = arith.constant dense<0.000000e+00> : vector<20x128xf32>
    %80 = tpu.matmul %77, %79, %cst_73 {dimension_numbers = #tpu.dot_dimension_numbers<[1], [0], [0], [1], [0, 0, 1, 1], [], []>} : vector<20x128xbf16>, vector<128x128xbf16>, vector<20x128xf32> -> vector<20x128xf32>
    %81 = arith.addf %76, %80 : vector<20x128xf32>
    %82 = vector.extract_strided_slice %62 {offsets = [4, 0], sizes = [20, 128], strides = [1, 1]} : vector<24x128xbf16> to vector<20x128xbf16>
    %c4_74 = arith.constant 4 : index
    %c0_75 = arith.constant 0 : index
    %c0_76 = arith.constant 0 : index
    %83 = vector.load %arg3[%c4_74, %c0_75, %c0_76] : memref<5x128x128xbf16, #tpu.memory_space<vmem>>, vector<1x128x128xbf16>
    %84 = vector.shape_cast %83 : vector<1x128x128xbf16> to vector<128x128xbf16>
    %cst_77 = arith.constant dense<0.000000e+00> : vector<20x128xf32>
    %85 = tpu.matmul %82, %84, %cst_77 {dimension_numbers = #tpu.dot_dimension_numbers<[1], [0], [0], [1], [0, 0, 1, 1], [], []>} : vector<20x128xbf16>, vector<128x128xbf16>, vector<20x128xf32> -> vector<20x128xf32>
    %86 = arith.addf %81, %85 : vector<20x128xf32>
    %c1_78 = arith.constant 1 : index
    %c0_79 = arith.constant 0 : index
    %87 = vector.load %arg10[%c1_78, %c0_79] : memref<8x256xf32, #tpu.memory_space<vmem>>, vector<1x128xf32>
    %88 = vector.broadcast %87 : vector<1x128xf32> to vector<20x128xf32>
    %89 = arith.addf %86, %88 : vector<20x128xf32>
    %cst_80 = arith.constant 0.000000e+00 : f32
    %90 = vector.broadcast %cst_80 : f32 to vector<20x128xf32>
    %91 = arith.maximumf %89, %90 : vector<20x128xf32>
    %c48 = arith.constant 48 : index
    %c0_81 = arith.constant 0 : index
    %92 = vector.load %arg9[%c48, %c0_81] : memref<480x128xbf16, #tpu.memory_space<vmem>>, vector<8x20xbf16>
    %93 = arith.truncf %91 : vector<20x128xf32> to vector<20x128xbf16>
    %cst_82 = arith.constant dense<0.000000e+00> : vector<8x128xf32>
    %94 = tpu.matmul %92, %93, %cst_82 {dimension_numbers = #tpu.dot_dimension_numbers<[1], [0], [0], [1], [0, 0, 1, 1], [], []>} : vector<8x20xbf16>, vector<20x128xbf16>, vector<8x128xf32> -> vector<8x128xf32>
    %c0_83 = arith.constant 0 : index
    %c0_84 = arith.constant 0 : index
    %95 = vector.load %arg7[%c0_83, %c0_84] : memref<128x64xbf16, #tpu.memory_space<vmem>>, vector<128x64xbf16>
    %96 = arith.truncf %94 : vector<8x128xf32> to vector<8x128xbf16>
    %cst_85 = arith.constant dense<0.000000e+00> : vector<8x64xf32>
    %97 = tpu.matmul %96, %95, %cst_85 {dimension_numbers = #tpu.dot_dimension_numbers<[1], [0], [0], [1], [0, 0, 1, 1], [], []>} : vector<8x128xbf16>, vector<128x64xbf16>, vector<8x64xf32> -> vector<8x64xf32>
    %98 = vector.extract_strided_slice %97 {offsets = [0, 0], sizes = [4, 64], strides = [1, 1]} : vector<8x64xf32> to vector<4x64xf32>
    %c2_86 = arith.constant 2 : index
    %c0_87 = arith.constant 0 : index
    %99 = vector.load %arg13[%c2_86, %c0_87] : memref<16x64xf32, #tpu.memory_space<vmem>>, vector<4x64xf32>
    tpu.vector_store %arg13[%c2_86, %c0_87], %98 {strides = array<i32>} : memref<16x64xf32, #tpu.memory_space<vmem>>, vector<4x64xf32>,
    %100 = vector.extract_strided_slice %97 {offsets = [4, 0], sizes = [4, 64], strides = [1, 1]} : vector<8x64xf32> to vector<4x64xf32>
    %c10_88 = arith.constant 10 : index
    %c0_89 = arith.constant 0 : index
    %101 = vector.load %arg13[%c10_88, %c0_89] : memref<16x64xf32, #tpu.memory_space<vmem>>, vector<4x64xf32>
    tpu.vector_store %arg13[%c10_88, %c0_89], %100 {strides = array<i32>} : memref<16x64xf32, #tpu.memory_space<vmem>>, vector<4x64xf32>,
    %c0_90 = arith.constant 0 : index
    %c0_91 = arith.constant 0 : index
    %102 = vector.load %arg13[%c0_90, %c0_91] : memref<16x64xf32, #tpu.memory_space<vmem>>, vector<16x64xf32>
    %103 = arith.truncf %102 : vector<16x64xf32> to vector<16x64xbf16>
    %104 = vector.extract_strided_slice %103 {offsets = [0, 0], sizes = [12, 64], strides = [1, 1]} : vector<16x64xbf16> to vector<12x64xbf16>
    %c0_92 = arith.constant 0 : index
    %c0_93 = arith.constant 0 : index
    %c0_94 = arith.constant 0 : index
    %105 = vector.load %arg4[%c0_92, %c0_93, %c0_94] : memref<5x64x64xbf16, #tpu.memory_space<vmem>>, vector<1x64x64xbf16>
    %106 = vector.shape_cast %105 : vector<1x64x64xbf16> to vector<64x64xbf16>
    %cst_95 = arith.constant dense<0.000000e+00> : vector<12x64xf32>
    %107 = tpu.matmul %104, %106, %cst_95 {dimension_numbers = #tpu.dot_dimension_numbers<[1], [0], [0], [1], [0, 0, 1, 1], [], []>} : vector<12x64xbf16>, vector<64x64xbf16>, vector<12x64xf32> -> vector<12x64xf32>
    %108 = vector.extract_strided_slice %103 {offsets = [1, 0], sizes = [12, 64], strides = [1, 1]} : vector<16x64xbf16> to vector<12x64xbf16>
    %c1_96 = arith.constant 1 : index
    %c0_97 = arith.constant 0 : index
    %c0_98 = arith.constant 0 : index
    %109 = vector.load %arg4[%c1_96, %c0_97, %c0_98] : memref<5x64x64xbf16, #tpu.memory_space<vmem>>, vector<1x64x64xbf16>
    %110 = vector.shape_cast %109 : vector<1x64x64xbf16> to vector<64x64xbf16>
    %cst_99 = arith.constant dense<0.000000e+00> : vector<12x64xf32>
    %111 = tpu.matmul %108, %110, %cst_99 {dimension_numbers = #tpu.dot_dimension_numbers<[1], [0], [0], [1], [0, 0, 1, 1], [], []>} : vector<12x64xbf16>, vector<64x64xbf16>, vector<12x64xf32> -> vector<12x64xf32>
    %112 = arith.addf %107, %111 : vector<12x64xf32>
    %113 = vector.extract_strided_slice %103 {offsets = [2, 0], sizes = [12, 64], strides = [1, 1]} : vector<16x64xbf16> to vector<12x64xbf16>
    %c2_100 = arith.constant 2 : index
    %c0_101 = arith.constant 0 : index
    %c0_102 = arith.constant 0 : index
    %114 = vector.load %arg4[%c2_100, %c0_101, %c0_102] : memref<5x64x64xbf16, #tpu.memory_space<vmem>>, vector<1x64x64xbf16>
    %115 = vector.shape_cast %114 : vector<1x64x64xbf16> to vector<64x64xbf16>
    %cst_103 = arith.constant dense<0.000000e+00> : vector<12x64xf32>
    %116 = tpu.matmul %113, %115, %cst_103 {dimension_numbers = #tpu.dot_dimension_numbers<[1], [0], [0], [1], [0, 0, 1, 1], [], []>} : vector<12x64xbf16>, vector<64x64xbf16>, vector<12x64xf32> -> vector<12x64xf32>
    %117 = arith.addf %112, %116 : vector<12x64xf32>
    %118 = vector.extract_strided_slice %103 {offsets = [3, 0], sizes = [12, 64], strides = [1, 1]} : vector<16x64xbf16> to vector<12x64xbf16>
    %c3_104 = arith.constant 3 : index
    %c0_105 = arith.constant 0 : index
    %c0_106 = arith.constant 0 : index
    %119 = vector.load %arg4[%c3_104, %c0_105, %c0_106] : memref<5x64x64xbf16, #tpu.memory_space<vmem>>, vector<1x64x64xbf16>
    %120 = vector.shape_cast %119 : vector<1x64x64xbf16> to vector<64x64xbf16>
    %cst_107 = arith.constant dense<0.000000e+00> : vector<12x64xf32>
    %121 = tpu.matmul %118, %120, %cst_107 {dimension_numbers = #tpu.dot_dimension_numbers<[1], [0], [0], [1], [0, 0, 1, 1], [], []>} : vector<12x64xbf16>, vector<64x64xbf16>, vector<12x64xf32> -> vector<12x64xf32>
    %122 = arith.addf %117, %121 : vector<12x64xf32>
    %123 = vector.extract_strided_slice %103 {offsets = [4, 0], sizes = [12, 64], strides = [1, 1]} : vector<16x64xbf16> to vector<12x64xbf16>
    %c4_108 = arith.constant 4 : index
    %c0_109 = arith.constant 0 : index
    %c0_110 = arith.constant 0 : index
    %124 = vector.load %arg4[%c4_108, %c0_109, %c0_110] : memref<5x64x64xbf16, #tpu.memory_space<vmem>>, vector<1x64x64xbf16>
    %125 = vector.shape_cast %124 : vector<1x64x64xbf16> to vector<64x64xbf16>
    %cst_111 = arith.constant dense<0.000000e+00> : vector<12x64xf32>
    %126 = tpu.matmul %123, %125, %cst_111 {dimension_numbers = #tpu.dot_dimension_numbers<[1], [0], [0], [1], [0, 0, 1, 1], [], []>} : vector<12x64xbf16>, vector<64x64xbf16>, vector<12x64xf32> -> vector<12x64xf32>
    %127 = arith.addf %122, %126 : vector<12x64xf32>
    %c2_112 = arith.constant 2 : index
    %c0_113 = arith.constant 0 : index
    %128 = vector.load %arg10[%c2_112, %c0_113] : memref<8x256xf32, #tpu.memory_space<vmem>>, vector<1x64xf32>
    %129 = vector.broadcast %128 : vector<1x64xf32> to vector<12x64xf32>
    %130 = arith.addf %127, %129 : vector<12x64xf32>
    %cst_114 = arith.constant 0.000000e+00 : f32
    %131 = vector.broadcast %cst_114 : f32 to vector<12x64xf32>
    %132 = arith.maximumf %130, %131 : vector<12x64xf32>
    %c64 = arith.constant 64 : index
    %c0_115 = arith.constant 0 : index
    %133 = vector.load %arg9[%c64, %c0_115] : memref<480x128xbf16, #tpu.memory_space<vmem>>, vector<4x12xbf16>
    %134 = arith.truncf %132 : vector<12x64xf32> to vector<12x64xbf16>
    %cst_116 = arith.constant dense<0.000000e+00> : vector<4x64xf32>
    %135 = tpu.matmul %133, %134, %cst_116 {dimension_numbers = #tpu.dot_dimension_numbers<[1], [0], [0], [1], [0, 0, 1, 1], [], []>} : vector<4x12xbf16>, vector<12x64xbf16>, vector<4x64xf32> -> vector<4x64xf32>
    %c80 = arith.constant 80 : index
    %c0_117 = arith.constant 0 : index
    %136 = vector.load %arg9[%c80, %c0_117] : memref<480x128xbf16, #tpu.memory_space<vmem>>, vector<64x32xbf16>
    %137 = arith.truncf %135 : vector<4x64xf32> to vector<4x64xbf16>
    %cst_118 = arith.constant dense<0.000000e+00> : vector<4x32xf32>
    %138 = tpu.matmul %137, %136, %cst_118 {dimension_numbers = #tpu.dot_dimension_numbers<[1], [0], [0], [1], [0, 0, 1, 1], [], []>} : vector<4x64xbf16>, vector<64x32xbf16>, vector<4x32xf32> -> vector<4x32xf32>
    %139 = vector.extract_strided_slice %138 {offsets = [0, 0], sizes = [2, 32], strides = [1, 1]} : vector<4x32xf32> to vector<2x32xf32>
    %c2_119 = arith.constant 2 : index
    %c0_120 = arith.constant 0 : index
    %140 = vector.load %arg14[%c2_119, %c0_120] : memref<12x32xf32, #tpu.memory_space<vmem>>, vector<2x32xf32>
    tpu.vector_store %arg14[%c2_119, %c0_120], %139 {strides = array<i32>} : memref<12x32xf32, #tpu.memory_space<vmem>>, vector<2x32xf32>,
    %141 = vector.extract_strided_slice %138 {offsets = [2, 0], sizes = [2, 32], strides = [1, 1]} : vector<4x32xf32> to vector<2x32xf32>
    %c8_121 = arith.constant 8 : index
    %c0_122 = arith.constant 0 : index
    %142 = vector.load %arg14[%c8_121, %c0_122] : memref<12x32xf32, #tpu.memory_space<vmem>>, vector<2x32xf32>
    tpu.vector_store %arg14[%c8_121, %c0_122], %141 {strides = array<i32>} : memref<12x32xf32, #tpu.memory_space<vmem>>, vector<2x32xf32>,
    %c0_123 = arith.constant 0 : index
    %c0_124 = arith.constant 0 : index
    %143 = vector.load %arg14[%c0_123, %c0_124] : memref<12x32xf32, #tpu.memory_space<vmem>>, vector<12x32xf32>
    %144 = arith.truncf %143 : vector<12x32xf32> to vector<12x32xbf16>
    %145 = vector.extract_strided_slice %144 {offsets = [0, 0], sizes = [8, 32], strides = [1, 1]} : vector<12x32xbf16> to vector<8x32xbf16>
    %c0_125 = arith.constant 0 : index
    %c0_126 = arith.constant 0 : index
    %c0_127 = arith.constant 0 : index
    %146 = vector.load %arg5[%c0_125, %c0_126, %c0_127] : memref<5x32x32xbf16, #tpu.memory_space<vmem>>, vector<1x32x32xbf16>
    %147 = vector.shape_cast %146 : vector<1x32x32xbf16> to vector<32x32xbf16>
    %cst_128 = arith.constant dense<0.000000e+00> : vector<8x32xf32>
    %148 = tpu.matmul %145, %147, %cst_128 {dimension_numbers = #tpu.dot_dimension_numbers<[1], [0], [0], [1], [0, 0, 1, 1], [], []>} : vector<8x32xbf16>, vector<32x32xbf16>, vector<8x32xf32> -> vector<8x32xf32>
    %149 = vector.extract_strided_slice %144 {offsets = [1, 0], sizes = [8, 32], strides = [1, 1]} : vector<12x32xbf16> to vector<8x32xbf16>
    %c1_129 = arith.constant 1 : index
    %c0_130 = arith.constant 0 : index
    %c0_131 = arith.constant 0 : index
    %150 = vector.load %arg5[%c1_129, %c0_130, %c0_131] : memref<5x32x32xbf16, #tpu.memory_space<vmem>>, vector<1x32x32xbf16>
    %151 = vector.shape_cast %150 : vector<1x32x32xbf16> to vector<32x32xbf16>
    %cst_132 = arith.constant dense<0.000000e+00> : vector<8x32xf32>
    %152 = tpu.matmul %149, %151, %cst_132 {dimension_numbers = #tpu.dot_dimension_numbers<[1], [0], [0], [1], [0, 0, 1, 1], [], []>} : vector<8x32xbf16>, vector<32x32xbf16>, vector<8x32xf32> -> vector<8x32xf32>
    %153 = arith.addf %148, %152 : vector<8x32xf32>
    %154 = vector.extract_strided_slice %144 {offsets = [2, 0], sizes = [8, 32], strides = [1, 1]} : vector<12x32xbf16> to vector<8x32xbf16>
    %c2_133 = arith.constant 2 : index
    %c0_134 = arith.constant 0 : index
    %c0_135 = arith.constant 0 : index
    %155 = vector.load %arg5[%c2_133, %c0_134, %c0_135] : memref<5x32x32xbf16, #tpu.memory_space<vmem>>, vector<1x32x32xbf16>
    %156 = vector.shape_cast %155 : vector<1x32x32xbf16> to vector<32x32xbf16>
    %cst_136 = arith.constant dense<0.000000e+00> : vector<8x32xf32>
    %157 = tpu.matmul %154, %156, %cst_136 {dimension_numbers = #tpu.dot_dimension_numbers<[1], [0], [0], [1], [0, 0, 1, 1], [], []>} : vector<8x32xbf16>, vector<32x32xbf16>, vector<8x32xf32> -> vector<8x32xf32>
    %158 = arith.addf %153, %157 : vector<8x32xf32>
    %159 = vector.extract_strided_slice %144 {offsets = [3, 0], sizes = [8, 32], strides = [1, 1]} : vector<12x32xbf16> to vector<8x32xbf16>
    %c3_137 = arith.constant 3 : index
    %c0_138 = arith.constant 0 : index
    %c0_139 = arith.constant 0 : index
    %160 = vector.load %arg5[%c3_137, %c0_138, %c0_139] : memref<5x32x32xbf16, #tpu.memory_space<vmem>>, vector<1x32x32xbf16>
    %161 = vector.shape_cast %160 : vector<1x32x32xbf16> to vector<32x32xbf16>
    %cst_140 = arith.constant dense<0.000000e+00> : vector<8x32xf32>
    %162 = tpu.matmul %159, %161, %cst_140 {dimension_numbers = #tpu.dot_dimension_numbers<[1], [0], [0], [1], [0, 0, 1, 1], [], []>} : vector<8x32xbf16>, vector<32x32xbf16>, vector<8x32xf32> -> vector<8x32xf32>
    %163 = arith.addf %158, %162 : vector<8x32xf32>
    %164 = vector.extract_strided_slice %144 {offsets = [4, 0], sizes = [8, 32], strides = [1, 1]} : vector<12x32xbf16> to vector<8x32xbf16>
    %c4_141 = arith.constant 4 : index
    %c0_142 = arith.constant 0 : index
    %c0_143 = arith.constant 0 : index
    %165 = vector.load %arg5[%c4_141, %c0_142, %c0_143] : memref<5x32x32xbf16, #tpu.memory_space<vmem>>, vector<1x32x32xbf16>
    %166 = vector.shape_cast %165 : vector<1x32x32xbf16> to vector<32x32xbf16>
    %cst_144 = arith.constant dense<0.000000e+00> : vector<8x32xf32>
    %167 = tpu.matmul %164, %166, %cst_144 {dimension_numbers = #tpu.dot_dimension_numbers<[1], [0], [0], [1], [0, 0, 1, 1], [], []>} : vector<8x32xbf16>, vector<32x32xbf16>, vector<8x32xf32> -> vector<8x32xf32>
    %168 = arith.addf %163, %167 : vector<8x32xf32>
    %c3_145 = arith.constant 3 : index
    %c0_146 = arith.constant 0 : index
    %169 = vector.load %arg10[%c3_145, %c0_146] : memref<8x256xf32, #tpu.memory_space<vmem>>, vector<1x32xf32>
    %170 = vector.broadcast %169 : vector<1x32xf32> to vector<8x32xf32>
    %171 = arith.addf %168, %170 : vector<8x32xf32>
    %cst_147 = arith.constant 0.000000e+00 : f32
    %172 = vector.broadcast %cst_147 : f32 to vector<8x32xf32>
    %173 = arith.maximumf %171, %172 : vector<8x32xf32>
    %c144 = arith.constant 144 : index
    %c0_148 = arith.constant 0 : index
    %174 = vector.load %arg9[%c144, %c0_148] : memref<480x128xbf16, #tpu.memory_space<vmem>>, vector<4x8xbf16>
    %175 = arith.truncf %173 : vector<8x32xf32> to vector<8x32xbf16>
    %cst_149 = arith.constant dense<0.000000e+00> : vector<4x32xf32>
    %176 = tpu.matmul %174, %175, %cst_149 {dimension_numbers = #tpu.dot_dimension_numbers<[1], [0], [0], [1], [0, 0, 1, 1], [], []>} : vector<4x8xbf16>, vector<8x32xbf16>, vector<4x32xf32> -> vector<4x32xf32>
    %c176 = arith.constant 176 : index
    %c0_150 = arith.constant 0 : index
    %177 = vector.load %arg9[%c176, %c0_150] : memref<480x128xbf16, #tpu.memory_space<vmem>>, vector<2x4xbf16>
    %178 = arith.truncf %176 : vector<4x32xf32> to vector<4x32xbf16>
    %cst_151 = arith.constant dense<0.000000e+00> : vector<2x32xf32>
    %179 = tpu.matmul %177, %178, %cst_151 {dimension_numbers = #tpu.dot_dimension_numbers<[1], [0], [0], [1], [0, 0, 1, 1], [], []>} : vector<2x4xbf16>, vector<4x32xbf16>, vector<2x32xf32> -> vector<2x32xf32>
    %c208 = arith.constant 208 : index
    %c0_152 = arith.constant 0 : index
    %180 = vector.load %arg9[%c208, %c0_152] : memref<480x128xbf16, #tpu.memory_space<vmem>>, vector<32x16xbf16>
    %181 = arith.truncf %179 : vector<2x32xf32> to vector<2x32xbf16>
    %cst_153 = arith.constant dense<0.000000e+00> : vector<2x16xf32>
    %182 = tpu.matmul %181, %180, %cst_153 {dimension_numbers = #tpu.dot_dimension_numbers<[1], [0], [0], [1], [0, 0, 1, 1], [], []>} : vector<2x32xbf16>, vector<32x16xbf16>, vector<2x16xf32> -> vector<2x16xf32>
    %183 = vector.extract_strided_slice %176 {offsets = [0, 0], sizes = [4, 16], strides = [1, 1]} : vector<4x32xf32> to vector<4x16xf32>
    %184 = vector.extract_strided_slice %176 {offsets = [0, 16], sizes = [4, 16], strides = [1, 1]} : vector<4x32xf32> to vector<4x16xf32>
    %185 = arith.maximumf %183, %184 : vector<4x16xf32>
    %186 = vector.extract_strided_slice %185 {offsets = [0, 0], sizes = [3, 16], strides = [1, 1]} : vector<4x16xf32> to vector<3x16xf32>
    %187 = vector.extract_strided_slice %185 {offsets = [1, 0], sizes = [3, 16], strides = [1, 1]} : vector<4x16xf32> to vector<3x16xf32>
    %188 = arith.maximumf %186, %187 : vector<3x16xf32>
    %c192 = arith.constant 192 : index
    %c0_154 = arith.constant 0 : index
    %189 = vector.load %arg9[%c192, %c0_154] : memref<480x128xbf16, #tpu.memory_space<vmem>>, vector<2x3xbf16>
    %190 = arith.truncf %188 : vector<3x16xf32> to vector<3x16xbf16>
    %cst_155 = arith.constant dense<0.000000e+00> : vector<2x16xf32>
    %191 = tpu.matmul %189, %190, %cst_155 {dimension_numbers = #tpu.dot_dimension_numbers<[1], [0], [0], [1], [0, 0, 1, 1], [], []>} : vector<2x3xbf16>, vector<3x16xbf16>, vector<2x16xf32> -> vector<2x16xf32>
    %c240 = arith.constant 240 : index
    %c0_156 = arith.constant 0 : index
    %192 = vector.load %arg9[%c240, %c0_156] : memref<480x128xbf16, #tpu.memory_space<vmem>>, vector<16x2xbf16>
    %193 = arith.truncf %182 : vector<2x16xf32> to vector<2x16xbf16>
    %cst_157 = arith.constant dense<0.000000e+00> : vector<2x2xf32>
    %194 = tpu.matmul %193, %192, %cst_157 {dimension_numbers = #tpu.dot_dimension_numbers<[1], [0], [0], [1], [0, 0, 1, 1], [], []>} : vector<2x16xbf16>, vector<16x2xbf16>, vector<2x2xf32> -> vector<2x2xf32>
    %cst_158 = arith.constant 0.000000e+00 : f32
    %195 = vector.broadcast %cst_158 : f32 to vector<2x2xf32>
    %196 = arith.maximumf %194, %195 : vector<2x2xf32>
    %c256 = arith.constant 256 : index
    %c0_159 = arith.constant 0 : index
    %197 = vector.load %arg9[%c256, %c0_159] : memref<480x128xbf16, #tpu.memory_space<vmem>>, vector<2x16xbf16>
    %198 = arith.truncf %196 : vector<2x2xf32> to vector<2x2xbf16>
    %cst_160 = arith.constant dense<0.000000e+00> : vector<2x16xf32>
    %199 = tpu.matmul %198, %197, %cst_160 {dimension_numbers = #tpu.dot_dimension_numbers<[1], [0], [0], [1], [0, 0, 1, 1], [], []>} : vector<2x2xbf16>, vector<2x16xbf16>, vector<2x16xf32> -> vector<2x16xf32>
    %c240_161 = arith.constant 240 : index
    %c0_162 = arith.constant 0 : index
    %200 = vector.load %arg9[%c240_161, %c0_162] : memref<480x128xbf16, #tpu.memory_space<vmem>>, vector<16x2xbf16>
    %201 = arith.truncf %191 : vector<2x16xf32> to vector<2x16xbf16>
    %cst_163 = arith.constant dense<0.000000e+00> : vector<2x2xf32>
    %202 = tpu.matmul %201, %200, %cst_163 {dimension_numbers = #tpu.dot_dimension_numbers<[1], [0], [0], [1], [0, 0, 1, 1], [], []>} : vector<2x16xbf16>, vector<16x2xbf16>, vector<2x2xf32> -> vector<2x2xf32>
    %cst_164 = arith.constant 0.000000e+00 : f32
    %203 = vector.broadcast %cst_164 : f32 to vector<2x2xf32>
    %204 = arith.maximumf %202, %203 : vector<2x2xf32>
    %c256_165 = arith.constant 256 : index
    %c0_166 = arith.constant 0 : index
    %205 = vector.load %arg9[%c256_165, %c0_166] : memref<480x128xbf16, #tpu.memory_space<vmem>>, vector<2x16xbf16>
    %206 = arith.truncf %204 : vector<2x2xf32> to vector<2x2xbf16>
    %cst_167 = arith.constant dense<0.000000e+00> : vector<2x16xf32>
    %207 = tpu.matmul %206, %205, %cst_167 {dimension_numbers = #tpu.dot_dimension_numbers<[1], [0], [0], [1], [0, 0, 1, 1], [], []>} : vector<2x2xbf16>, vector<2x16xbf16>, vector<2x16xf32> -> vector<2x16xf32>
    %208 = arith.addf %199, %207 : vector<2x16xf32>
    %cst_168 = arith.constant 0.000000e+00 : f32
    %209 = vector.broadcast %cst_168 : f32 to vector<2x16xf32>
    %210 = arith.subf %209, %208 : vector<2x16xf32>
    %211 = math.exp %210 : vector<2x16xf32>
    %cst_169 = arith.constant 1.000000e+00 : f32
    %212 = vector.broadcast %cst_169 : f32 to vector<2x16xf32>
    %213 = arith.addf %212, %211 : vector<2x16xf32>
    %214 = tpu.reciprocal %213 {approx = true} : vector<2x16xf32> -> vector<2x16xf32>
    %c288 = arith.constant 288 : index
    %c0_170 = arith.constant 0 : index
    %215 = vector.load %arg9[%c288, %c0_170] : memref<480x128xbf16, #tpu.memory_space<vmem>>, vector<4x2xbf16>
    %c272 = arith.constant 272 : index
    %c0_171 = arith.constant 0 : index
    %216 = vector.load %arg9[%c272, %c0_171] : memref<480x128xbf16, #tpu.memory_space<vmem>>, vector<16x32xbf16>
    %217 = arith.truncf %214 : vector<2x16xf32> to vector<2x16xbf16>
    %cst_172 = arith.constant dense<0.000000e+00> : vector<2x32xf32>
    %218 = tpu.matmul %217, %216, %cst_172 {dimension_numbers = #tpu.dot_dimension_numbers<[1], [0], [0], [1], [0, 0, 1, 1], [], []>} : vector<2x16xbf16>, vector<16x32xbf16>, vector<2x32xf32> -> vector<2x32xf32>
    %219 = arith.truncf %218 : vector<2x32xf32> to vector<2x32xbf16>
    %cst_173 = arith.constant dense<0.000000e+00> : vector<4x32xf32>
    %220 = tpu.matmul %215, %219, %cst_173 {dimension_numbers = #tpu.dot_dimension_numbers<[1], [0], [0], [1], [0, 0, 1, 1], [], []>} : vector<4x2xbf16>, vector<2x32xbf16>, vector<4x32xf32> -> vector<4x32xf32>
    %221 = arith.mulf %176, %220 : vector<4x32xf32>
    %c304 = arith.constant 304 : index
    %c0_174 = arith.constant 0 : index
    %222 = vector.load %arg9[%c304, %c0_174] : memref<480x128xbf16, #tpu.memory_space<vmem>>, vector<32x2xbf16>
    %223 = arith.truncf %221 : vector<4x32xf32> to vector<4x32xbf16>
    %cst_175 = arith.constant dense<0.000000e+00> : vector<4x2xf32>
    %224 = tpu.matmul %223, %222, %cst_175 {dimension_numbers = #tpu.dot_dimension_numbers<[1], [0], [0], [1], [0, 0, 1, 1], [], []>} : vector<4x32xbf16>, vector<32x2xbf16>, vector<4x2xf32> -> vector<4x2xf32>
    %225 = vector.extract_strided_slice %221 {offsets = [0, 0], sizes = [4, 16], strides = [1, 1]} : vector<4x32xf32> to vector<4x16xf32>
    %cst_176 = arith.constant dense<0xFF800000> : vector<4xf32>
    %226 = vector.multi_reduction <maximumf>, %225, %cst_176 [1] : vector<4x16xf32> to vector<4xf32>
    %227 = vector.shape_cast %226 : vector<4xf32> to vector<4x1xf32>
    %228 = vector.extract_strided_slice %221 {offsets = [0, 16], sizes = [4, 16], strides = [1, 1]} : vector<4x32xf32> to vector<4x16xf32>
    %cst_177 = arith.constant dense<0xFF800000> : vector<4xf32>
    %229 = vector.multi_reduction <maximumf>, %228, %cst_177 [1] : vector<4x16xf32> to vector<4xf32>
    %230 = vector.shape_cast %229 : vector<4xf32> to vector<4x1xf32>
    %231 = tpu.concatenate %224, %227, %230 in 1 : vector<4x2xf32>, vector<4x1xf32>, vector<4x1xf32> -> vector<4x4xf32>
    %232 = vector.extract_strided_slice %231 {offsets = [0, 0], sizes = [2, 4], strides = [1, 1]} : vector<4x4xf32> to vector<2x4xf32>
    %c3_178 = arith.constant 3 : index
    %c0_179 = arith.constant 0 : index
    %233 = vector.load %arg15[%c3_178, %c0_179] : memref<16x4xf32, #tpu.memory_space<vmem>>, vector<2x4xf32>
    tpu.vector_store %arg15[%c3_178, %c0_179], %232 {strides = array<i32>} : memref<16x4xf32, #tpu.memory_space<vmem>>, vector<2x4xf32>,
    %234 = vector.extract_strided_slice %231 {offsets = [2, 0], sizes = [2, 4], strides = [1, 1]} : vector<4x4xf32> to vector<2x4xf32>
    %c11 = arith.constant 11 : index
    %c0_180 = arith.constant 0 : index
    %235 = vector.load %arg15[%c11, %c0_180] : memref<16x4xf32, #tpu.memory_space<vmem>>, vector<2x4xf32>
    tpu.vector_store %arg15[%c11, %c0_180], %234 {strides = array<i32>} : memref<16x4xf32, #tpu.memory_space<vmem>>, vector<2x4xf32>,
    %c0_181 = arith.constant 0 : index
    %c0_182 = arith.constant 0 : index
    %236 = vector.load %arg15[%c0_181, %c0_182] : memref<16x4xf32, #tpu.memory_space<vmem>>, vector<16x4xf32>
    %237 = arith.truncf %236 : vector<16x4xf32> to vector<16x4xbf16>
    %238 = vector.extract_strided_slice %237 {offsets = [0, 0], sizes = [10, 4], strides = [1, 1]} : vector<16x4xbf16> to vector<10x4xbf16>
    %c0_183 = arith.constant 0 : index
    %c0_184 = arith.constant 0 : index
    %239 = vector.load %arg9[%c0_183, %c0_184] : memref<480x128xbf16, #tpu.memory_space<vmem>>, vector<4x32xbf16>
    %cst_185 = arith.constant dense<0.000000e+00> : vector<10x32xf32>
    %240 = tpu.matmul %238, %239, %cst_185 {dimension_numbers = #tpu.dot_dimension_numbers<[1], [0], [0], [1], [0, 0, 1, 1], [], []>} : vector<10x4xbf16>, vector<4x32xbf16>, vector<10x32xf32> -> vector<10x32xf32>
    %241 = vector.extract_strided_slice %237 {offsets = [1, 0], sizes = [10, 4], strides = [1, 1]} : vector<16x4xbf16> to vector<10x4xbf16>
    %c4_186 = arith.constant 4 : index
    %c0_187 = arith.constant 0 : index
    %242 = vector.load %arg9[%c4_186, %c0_187] : memref<480x128xbf16, #tpu.memory_space<vmem>>, vector<4x32xbf16>
    %cst_188 = arith.constant dense<0.000000e+00> : vector<10x32xf32>
    %243 = tpu.matmul %241, %242, %cst_188 {dimension_numbers = #tpu.dot_dimension_numbers<[1], [0], [0], [1], [0, 0, 1, 1], [], []>} : vector<10x4xbf16>, vector<4x32xbf16>, vector<10x32xf32> -> vector<10x32xf32>
    %244 = arith.addf %240, %243 : vector<10x32xf32>
    %245 = vector.extract_strided_slice %237 {offsets = [2, 0], sizes = [10, 4], strides = [1, 1]} : vector<16x4xbf16> to vector<10x4xbf16>
    %c8_189 = arith.constant 8 : index
    %c0_190 = arith.constant 0 : index
    %246 = vector.load %arg9[%c8_189, %c0_190] : memref<480x128xbf16, #tpu.memory_space<vmem>>, vector<4x32xbf16>
    %cst_191 = arith.constant dense<0.000000e+00> : vector<10x32xf32>
    %247 = tpu.matmul %245, %246, %cst_191 {dimension_numbers = #tpu.dot_dimension_numbers<[1], [0], [0], [1], [0, 0, 1, 1], [], []>} : vector<10x4xbf16>, vector<4x32xbf16>, vector<10x32xf32> -> vector<10x32xf32>
    %248 = arith.addf %244, %247 : vector<10x32xf32>
    %249 = vector.extract_strided_slice %237 {offsets = [3, 0], sizes = [10, 4], strides = [1, 1]} : vector<16x4xbf16> to vector<10x4xbf16>
    %c12_192 = arith.constant 12 : index
    %c0_193 = arith.constant 0 : index
    %250 = vector.load %arg9[%c12_192, %c0_193] : memref<480x128xbf16, #tpu.memory_space<vmem>>, vector<4x32xbf16>
    %cst_194 = arith.constant dense<0.000000e+00> : vector<10x32xf32>
    %251 = tpu.matmul %249, %250, %cst_194 {dimension_numbers = #tpu.dot_dimension_numbers<[1], [0], [0], [1], [0, 0, 1, 1], [], []>} : vector<10x4xbf16>, vector<4x32xbf16>, vector<10x32xf32> -> vector<10x32xf32>
    %252 = arith.addf %248, %251 : vector<10x32xf32>
    %253 = vector.extract_strided_slice %237 {offsets = [4, 0], sizes = [10, 4], strides = [1, 1]} : vector<16x4xbf16> to vector<10x4xbf16>
    %c16 = arith.constant 16 : index
    %c0_195 = arith.constant 0 : index
    %254 = vector.load %arg9[%c16, %c0_195] : memref<480x128xbf16, #tpu.memory_space<vmem>>, vector<4x32xbf16>
    %cst_196 = arith.constant dense<0.000000e+00> : vector<10x32xf32>
    %255 = tpu.matmul %253, %254, %cst_196 {dimension_numbers = #tpu.dot_dimension_numbers<[1], [0], [0], [1], [0, 0, 1, 1], [], []>} : vector<10x4xbf16>, vector<4x32xbf16>, vector<10x32xf32> -> vector<10x32xf32>
    %256 = arith.addf %252, %255 : vector<10x32xf32>
    %257 = vector.extract_strided_slice %237 {offsets = [5, 0], sizes = [10, 4], strides = [1, 1]} : vector<16x4xbf16> to vector<10x4xbf16>
    %c20 = arith.constant 20 : index
    %c0_197 = arith.constant 0 : index
    %258 = vector.load %arg9[%c20, %c0_197] : memref<480x128xbf16, #tpu.memory_space<vmem>>, vector<4x32xbf16>
    %cst_198 = arith.constant dense<0.000000e+00> : vector<10x32xf32>
    %259 = tpu.matmul %257, %258, %cst_198 {dimension_numbers = #tpu.dot_dimension_numbers<[1], [0], [0], [1], [0, 0, 1, 1], [], []>} : vector<10x4xbf16>, vector<4x32xbf16>, vector<10x32xf32> -> vector<10x32xf32>
    %260 = arith.addf %256, %259 : vector<10x32xf32>
    %261 = vector.extract_strided_slice %237 {offsets = [6, 0], sizes = [10, 4], strides = [1, 1]} : vector<16x4xbf16> to vector<10x4xbf16>
    %c24 = arith.constant 24 : index
    %c0_199 = arith.constant 0 : index
    %262 = vector.load %arg9[%c24, %c0_199] : memref<480x128xbf16, #tpu.memory_space<vmem>>, vector<4x32xbf16>
    %cst_200 = arith.constant dense<0.000000e+00> : vector<10x32xf32>
    %263 = tpu.matmul %261, %262, %cst_200 {dimension_numbers = #tpu.dot_dimension_numbers<[1], [0], [0], [1], [0, 0, 1, 1], [], []>} : vector<10x4xbf16>, vector<4x32xbf16>, vector<10x32xf32> -> vector<10x32xf32>
    %264 = arith.addf %260, %263 : vector<10x32xf32>
    %c160 = arith.constant 160 : index
    %c0_201 = arith.constant 0 : index
    %265 = vector.load %arg9[%c160, %c0_201] : memref<480x128xbf16, #tpu.memory_space<vmem>>, vector<4x10xbf16>
    %266 = arith.truncf %264 : vector<10x32xf32> to vector<10x32xbf16>
    %cst_202 = arith.constant dense<0.000000e+00> : vector<4x32xf32>
    %267 = tpu.matmul %265, %266, %cst_202 {dimension_numbers = #tpu.dot_dimension_numbers<[1], [0], [0], [1], [0, 0, 1, 1], [], []>} : vector<4x10xbf16>, vector<10x32xbf16>, vector<4x32xf32> -> vector<4x32xf32>
    %cst_203 = arith.constant 0.000000e+00 : f32
    %268 = vector.broadcast %cst_203 : f32 to vector<4x32xf32>
    %269 = arith.subf %268, %267 : vector<4x32xf32>
    %270 = math.exp %269 : vector<4x32xf32>
    %cst_204 = arith.constant 1.000000e+00 : f32
    %271 = vector.broadcast %cst_204 : f32 to vector<4x32xf32>
    %272 = arith.addf %271, %270 : vector<4x32xf32>
    %273 = tpu.reciprocal %272 {approx = true} : vector<4x32xf32> -> vector<4x32xf32>
    %274 = arith.mulf %273, %221 : vector<4x32xf32>
    %c0_205 = arith.constant 0 : index
    %c0_206 = arith.constant 0 : index
    %275 = vector.load %arg8[%c0_205, %c0_206] : memref<32x256xbf16, #tpu.memory_space<vmem>>, vector<32x256xbf16>
    %276 = arith.truncf %274 : vector<4x32xf32> to vector<4x32xbf16>
    %cst_207 = arith.constant dense<0.000000e+00> : vector<4x256xf32>
    %277 = tpu.matmul %276, %275, %cst_207 {dimension_numbers = #tpu.dot_dimension_numbers<[1], [0], [0], [1], [0, 0, 1, 1], [], []>} : vector<4x32xbf16>, vector<32x256xbf16>, vector<4x256xf32> -> vector<4x256xf32>
    %c336 = arith.constant 336 : index
    %c0_208 = arith.constant 0 : index
    %278 = vector.load %arg9[%c336, %c0_208] : memref<480x128xbf16, #tpu.memory_space<vmem>>, vector<4x4xbf16>
    %279 = vector.extract_strided_slice %278 {offsets = [0, 0], sizes = [2, 4], strides = [1, 1]} : vector<4x4xbf16> to vector<2x4xbf16>
    %280 = vector.extract_strided_slice %277 {offsets = [0, 0], sizes = [4, 128], strides = [1, 1]} : vector<4x256xf32> to vector<4x128xf32>
    %281 = arith.truncf %280 : vector<4x128xf32> to vector<4x128xbf16>
    %cst_209 = arith.constant dense<0.000000e+00> : vector<2x128xf32>
    %282 = tpu.matmul %279, %281, %cst_209 {dimension_numbers = #tpu.dot_dimension_numbers<[1], [0], [0], [1], [0, 0, 1, 1], [], []>} : vector<2x4xbf16>, vector<4x128xbf16>, vector<2x128xf32> -> vector<2x128xf32>
    %283 = vector.extract_strided_slice %278 {offsets = [2, 0], sizes = [2, 4], strides = [1, 1]} : vector<4x4xbf16> to vector<2x4xbf16>
    %284 = vector.extract_strided_slice %277 {offsets = [0, 128], sizes = [4, 128], strides = [1, 1]} : vector<4x256xf32> to vector<4x128xf32>
    %285 = arith.truncf %284 : vector<4x128xf32> to vector<4x128xbf16>
    %cst_210 = arith.constant dense<0.000000e+00> : vector<2x128xf32>
    %286 = tpu.matmul %283, %285, %cst_210 {dimension_numbers = #tpu.dot_dimension_numbers<[1], [0], [0], [1], [0, 0, 1, 1], [], []>} : vector<2x4xbf16>, vector<4x128xbf16>, vector<2x128xf32> -> vector<2x128xf32>
    %287 = arith.addf %282, %286 : vector<2x128xf32>
    %c4_211 = arith.constant 4 : index
    %c0_212 = arith.constant 0 : index
    %288 = vector.load %arg10[%c4_211, %c0_212] : memref<8x256xf32, #tpu.memory_space<vmem>>, vector<1x128xf32>
    %289 = vector.broadcast %288 : vector<1x128xf32> to vector<2x128xf32>
    %290 = arith.addf %287, %289 : vector<2x128xf32>
    %291 = math.tanh %290 : vector<2x128xf32>
    %c352 = arith.constant 352 : index
    %c0_213 = arith.constant 0 : index
    %292 = vector.load %arg9[%c352, %c0_213] : memref<480x128xbf16, #tpu.memory_space<vmem>>, vector<128x1xbf16>
    %293 = arith.truncf %291 : vector<2x128xf32> to vector<2x128xbf16>
    %cst_214 = arith.constant dense<0.000000e+00> : vector<2x1xf32>
    %294 = tpu.matmul %293, %292, %cst_214 {dimension_numbers = #tpu.dot_dimension_numbers<[1], [0], [0], [1], [0, 0, 1, 1], [], []>} : vector<2x128xbf16>, vector<128x1xbf16>, vector<2x1xf32> -> vector<2x1xf32>
    %c5_215 = arith.constant 5 : index
    %c0_216 = arith.constant 0 : index
    %295 = vector.load %arg10[%c5_215, %c0_216] : memref<8x256xf32, #tpu.memory_space<vmem>>, vector<1x1xf32>
    %296 = vector.broadcast %295 : vector<1x1xf32> to vector<2x1xf32>
    %297 = arith.addf %294, %296 : vector<2x1xf32>
    %cst_217 = arith.constant 0.000000e+00 : f32
    %298 = vector.broadcast %cst_217 : f32 to vector<2x1xf32>
    %299 = arith.subf %298, %297 : vector<2x1xf32>
    %300 = math.exp %299 : vector<2x1xf32>
    %cst_218 = arith.constant 1.000000e+00 : f32
    %301 = vector.broadcast %cst_218 : f32 to vector<2x1xf32>
    %302 = arith.addf %301, %300 : vector<2x1xf32>
    %cst_219 = arith.constant 1.000000e+00 : f32
    %303 = vector.broadcast %cst_219 : f32 to vector<2x1xf32>
    %304 = arith.divf %303, %302 : vector<2x1xf32>
    %c0_220 = arith.constant 0 : index
    %c0_221 = arith.constant 0 : index
    %305 = vector.load %arg11[%c0_220, %c0_221] : memref<2x1xf32, #tpu.memory_space<vmem>>, vector<2x1xf32>
    tpu.vector_store %arg11[%c0_220, %c0_221], %304 {strides = array<i32>} : memref<2x1xf32, #tpu.memory_space<vmem>>, vector<2x1xf32>,
    return
  }
  func.func @transform_0(%arg0: i32) -> (i32, i32) {
    %c0_i32 = arith.constant 0 : i32
    %c0_i32_0 = arith.constant 0 : i32
    return %arg0, %c0_i32 : i32, i32
  }
  func.func @transform_1(%arg0: i32) -> (i32, i32, i32) {
    %c0_i32 = arith.constant 0 : i32
    %c0_i32_0 = arith.constant 0 : i32
    %c0_i32_1 = arith.constant 0 : i32
    %c0_i32_2 = arith.constant 0 : i32
    return %c0_i32, %c0_i32_0, %c0_i32_1 : i32, i32, i32
  }
  func.func @transform_2(%arg0: i32) -> (i32, i32, i32) {
    %c0_i32 = arith.constant 0 : i32
    %c0_i32_0 = arith.constant 0 : i32
    %c0_i32_1 = arith.constant 0 : i32
    %c0_i32_2 = arith.constant 0 : i32
    return %c0_i32, %c0_i32_0, %c0_i32_1 : i32, i32, i32
  }
  func.func @transform_3(%arg0: i32) -> (i32, i32, i32) {
    %c0_i32 = arith.constant 0 : i32
    %c0_i32_0 = arith.constant 0 : i32
    %c0_i32_1 = arith.constant 0 : i32
    %c0_i32_2 = arith.constant 0 : i32
    return %c0_i32, %c0_i32_0, %c0_i32_1 : i32, i32, i32
  }
  func.func @transform_4(%arg0: i32) -> (i32, i32, i32) {
    %c0_i32 = arith.constant 0 : i32
    %c0_i32_0 = arith.constant 0 : i32
    %c0_i32_1 = arith.constant 0 : i32
    %c0_i32_2 = arith.constant 0 : i32
    return %c0_i32, %c0_i32_0, %c0_i32_1 : i32, i32, i32
  }
  func.func @transform_5(%arg0: i32) -> (i32, i32) {
    %c0_i32 = arith.constant 0 : i32
    %c0_i32_0 = arith.constant 0 : i32
    %c0_i32_1 = arith.constant 0 : i32
    return %c0_i32, %c0_i32_0 : i32, i32
  }
  func.func @transform_6(%arg0: i32) -> (i32, i32) {
    %c0_i32 = arith.constant 0 : i32
    %c0_i32_0 = arith.constant 0 : i32
    %c0_i32_1 = arith.constant 0 : i32
    return %c0_i32, %c0_i32_0 : i32, i32
  }
  func.func @transform_7(%arg0: i32) -> (i32, i32) {
    %c0_i32 = arith.constant 0 : i32
    %c0_i32_0 = arith.constant 0 : i32
    %c0_i32_1 = arith.constant 0 : i32
    return %c0_i32, %c0_i32_0 : i32, i32
  }
  func.func @transform_8(%arg0: i32) -> (i32, i32) {
    %c0_i32 = arith.constant 0 : i32
    %c0_i32_0 = arith.constant 0 : i32
    %c0_i32_1 = arith.constant 0 : i32
    return %c0_i32, %c0_i32_0 : i32, i32
  }
  func.func @transform_9(%arg0: i32) -> (i32, i32) {
    %c0_i32 = arith.constant 0 : i32
    %c0_i32_0 = arith.constant 0 : i32
    %c0_i32_1 = arith.constant 0 : i32
    return %c0_i32, %c0_i32_0 : i32, i32
  }
  func.func @transform_10(%arg0: i32) -> (i32, i32) {
    %c0_i32 = arith.constant 0 : i32
    %c0_i32_0 = arith.constant 0 : i32
    return %arg0, %c0_i32 : i32, i32
  }
}

</mosaic_0001>

<llo_original>
// kernel: forward.1
$region0: #{forward.1}
  #allocation0 [shape = 'u32[]', space=smem, size = 0x4, offset = 0x4, fixed_abs, tag = 'smem constant byte address 0x4 - core index']
  #allocation1 [shape = 'u32[144,128]{1,0:T(1,128)}', space=vmem, size = 0x12000, scoped, tag = 'internal scratch']
  #allocation2 [shape = 'f32[24,128]{1,0:T(8,128)}', space=vmem, size = 0x3000, scoped, tag = 'scratch operand']
  #allocation3 [shape = 'f32[16,64]{1,0:T(8,128)}', space=vmem, size = 0x2000, scoped, tag = 'scratch operand']
  #allocation4 [shape = 'f32[12,32]{1,0:T(8,128)}', space=vmem, size = 0x2000, scoped, tag = 'scratch operand']
  #allocation5 [shape = 'f32[16,4]{1,0:T(8,128)}', space=vmem, size = 0x2000, scoped, tag = 'scratch operand']
  %s0 = inlined_call_operand.vmem [shape: f32[40,16], index: 0, kind: input, shape index: {}]
  %s1 = inlined_call_operand.hbm [shape: bf16[5,16,256], index: 1, kind: input, shape index: {}]
  %s2 = inlined_call_operand.hbm [shape: bf16[5,128,128], index: 2, kind: input, shape index: {}]
  %s3 = inlined_call_operand.vmem [shape: bf16[5,64,64], index: 3, kind: input, shape index: {}]
  %s4 = inlined_call_operand.hbm [shape: bf16[5,32,32], index: 4, kind: input, shape index: {}]
  %s5 = inlined_call_operand.hbm [shape: bf16[256,128], index: 5, kind: input, shape index: {}]
  %s6 = inlined_call_operand.hbm [shape: bf16[128,64], index: 6, kind: input, shape index: {}]
  %s7 = inlined_call_operand.hbm [shape: bf16[32,256], index: 7, kind: input, shape index: {}]
  %s8 = inlined_call_operand.hbm [shape: bf16[480,128], index: 8, kind: input, shape index: {}]
  %s9 = inlined_call_operand.vmem [shape: f32[8,256], index: 9, kind: input, shape index: {}]
  %s10 = inlined_call_operand.vmem [shape: f32[2,1], index: 10, kind: output, shape index: {}]
  %s11 = sld [smem:[#allocation0]]
  $region78: #{forward.1} parent=0
    _
  %s13 = ssub.s32 1, %s11
  %s14 = scalar_select 0, %s13, %s11
  $region1: #{forward.1} parent=0
    #allocation6 [shape = 'u8[40960]{0}', space=vmem, size = 0xa000, scoped, tag = 'input window, operand 1, single buffered']
    #allocation7 [shape = 's32[1]{0}', space=sflag, size = 0x4, scoped, tag = 'scoped memory for forward.1']
    #allocation8 [shape = 'u8[163840]{0}', space=vmem, size = 0x28000, scoped, tag = 'input window, operand 2, single buffered']
    #allocation9 [shape = 's32[1]{0}', space=sflag, size = 0x4, scoped, tag = 'scoped memory for forward.1']
    #allocation10 [shape = 'u8[40960]{0}', space=vmem, size = 0xa000, scoped, tag = 'input window, operand 4, single buffered']
    #allocation11 [shape = 'u8[65536]{0}', space=vmem, size = 0x10000, scoped, tag = 'input window, operand 5, single buffered']
    #allocation12 [shape = 's32[1]{0}', space=sflag, size = 0x4, scoped, tag = 'scoped memory for forward.1']
    #allocation13 [shape = 'u8[32768]{0}', space=vmem, size = 0x8000, scoped, tag = 'input window, operand 6, single buffered']
    #allocation14 [shape = 'u8[16384]{0}', space=vmem, size = 0x4000, scoped, tag = 'input window, operand 7, single buffered']
    #allocation15 [shape = 's32[1]{0}', space=sflag, size = 0x4, scoped, tag = 'scoped memory for forward.1']
    #allocation16 [shape = 'u8[122880]{0}', space=vmem, size = 0x1e000, scoped, tag = 'input window, operand 8, single buffered']
    %15 = vsyncpa [#allocation7], 0
    %16 = vsyncpa [#allocation9], 0
    %17 = vsyncpa [#allocation12], 0
    %18 = vsyncpa [#allocation15], 0
    // Predicated region
    $region2: #{forward.1} parent=1 // pred_check
      _
    $region3: #{forward.1} parent=1 // pred_check_branch
      %20 = sbr.rel (0) target = $region5
    $region4: #{forward.1} parent=1 // pred_region
      _
    $region5: #{forward.1} parent=1 // pred_fallthru
      _
    // Predicated region
    $region6: #{forward.1} parent=1 // pred_check
      _
    $region7: #{forward.1} parent=1 // pred_check_branch
      %22 = sbr.rel (0) target = $region9
    $region8: #{forward.1} parent=1 // pred_region
      %s24 = ssub.s32 1280, 1280
      %25 = vsyncadd [#allocation7], %s24
      %s26 = sshll.u32 [#allocation6], 4
      %s27 = int_to_ptr.vmem [resolvable:$true] %s26
      %32 = dma.hbm_to_vmem [thread:$0]  %s1, 1280, %s27, [#allocation7], 128, 128, 8
    $region9: #{forward.1} parent=1 // pred_fallthru
      _
    // Predicated region
    $region10: #{forward.1} parent=1 // pred_check
      _
    $region11: #{forward.1} parent=1 // pred_check_branch
      %34 = sbr.rel (0) target = $region13
    $region12: #{forward.1} parent=1 // pred_region
      %s36 = ssub.s32 5120, 5120
      %37 = vsyncadd [#allocation9], %s36
      %s38 = sshll.u32 [#allocation8], 4
      %s39 = int_to_ptr.vmem [resolvable:$true] %s38
      %44 = dma.hbm_to_vmem [thread:$0]  %s2, 5120, %s39, [#allocation9], 64, 64, 4
    $region13: #{forward.1} parent=1 // pred_fallthru
      _
    // Predicated region
    $region14: #{forward.1} parent=1 // pred_check
      _
    $region15: #{forward.1} parent=1 // pred_check_branch
      %46 = sbr.rel (0) target = $region17
    $region16: #{forward.1} parent=1 // pred_region
      _
    $region17: #{forward.1} parent=1 // pred_fallthru
      _
    // Predicated region
    $region18: #{forward.1} parent=1 // pred_check
      _
    $region19: #{forward.1} parent=1 // pred_check_branch
      %48 = sbr.rel (0) target = $region21
    $region20: #{forward.1} parent=1 // pred_region
      %s50 = ssub.s32 1280, 1280
      %51 = vsyncadd [#allocation9], %s50
      %s52 = sshll.u32 [#allocation10], 4
      %s53 = int_to_ptr.vmem [resolvable:$true] %s52
      %58 = dma.hbm_to_vmem [thread:$0]  %s4, 1280, %s53, [#allocation9], 64, 64, 4
    $region21: #{forward.1} parent=1 // pred_fallthru
      _
    // Predicated region
    $region22: #{forward.1} parent=1 // pred_check
      _
    $region23: #{forward.1} parent=1 // pred_check_branch
      %60 = sbr.rel (0) target = $region25
    $region24: #{forward.1} parent=1 // pred_region
      %s62 = ssub.s32 2048, 2048
      %63 = vsyncadd [#allocation12], %s62
      %s64 = sshll.u32 [#allocation11], 4
      %s65 = int_to_ptr.vmem [resolvable:$true] %s64
      %70 = dma.hbm_to_vmem [thread:$0]  %s5, 2048, %s65, [#allocation12], 64, 64, 4
    $region25: #{forward.1} parent=1 // pred_fallthru
      _
    // Predicated region
    $region26: #{forward.1} parent=1 // pred_check
      _
    $region27: #{forward.1} parent=1 // pred_check_branch
      %72 = sbr.rel (0) target = $region29
    $region28: #{forward.1} parent=1 // pred_region
      %s74 = ssub.s32 1024, 1024
      %75 = vsyncadd [#allocation12], %s74
      %s76 = sshll.u32 [#allocation13], 4
      %s77 = int_to_ptr.vmem [resolvable:$true] %s76
      %82 = dma.hbm_to_vmem [thread:$0]  %s6, 1024, %s77, [#allocation12], 64, 64, 4
    $region29: #{forward.1} parent=1 // pred_fallthru
      _
    // Predicated region
    $region30: #{forward.1} parent=1 // pred_check
      _
    $region31: #{forward.1} parent=1 // pred_check_branch
      %84 = sbr.rel (0) target = $region33
    $region32: #{forward.1} parent=1 // pred_region
      %s86 = ssub.s32 512, 512
      %87 = vsyncadd [#allocation15], %s86
      %s88 = sshll.u32 [#allocation14], 4
      %s89 = int_to_ptr.vmem [resolvable:$true] %s88
      %94 = dma.hbm_to_vmem [thread:$0]  %s7, 512, %s89, [#allocation15], 128, 128, 8
    $region33: #{forward.1} parent=1 // pred_fallthru
      _
    // Predicated region
    $region34: #{forward.1} parent=1 // pred_check
      _
    $region35: #{forward.1} parent=1 // pred_check_branch
      %96 = sbr.rel (0) target = $region37
    $region36: #{forward.1} parent=1 // pred_region
      %s98 = ssub.s32 3840, 3840
      %99 = vsyncadd [#allocation15], %s98
      %s100 = sshll.u32 [#allocation16], 4
      %s101 = int_to_ptr.vmem [resolvable:$true] %s100
      %106 = dma.hbm_to_vmem [thread:$0]  %s8, 3840, %s101, [#allocation15], 64, 64, 4
    $region37: #{forward.1} parent=1 // pred_fallthru
      _
    // Predicated region
    $region38: #{forward.1} parent=1 // pred_check
      _
    $region39: #{forward.1} parent=1 // pred_check_branch
      %108 = sbr.rel (0) target = $region41
    $region40: #{forward.1} parent=1 // pred_region
      _
    $region41: #{forward.1} parent=1 // pred_fallthru
      _
    // Predicated region
    $region42: #{forward.1} parent=1 // pred_check
      _
    $region43: #{forward.1} parent=1 // pred_check_branch
      %110 = sbr.rel (0) target = $region45
    $region44: #{forward.1} parent=1 // pred_region
      %111 = dma.done [#allocation7], 1280
    $region45: #{forward.1} parent=1 // pred_fallthru
      _
    // Predicated region
    $region46: #{forward.1} parent=1 // pred_check
      _
    $region47: #{forward.1} parent=1 // pred_check_branch
      %113 = sbr.rel (0) target = $region49
    $region48: #{forward.1} parent=1 // pred_region
      %114 = dma.done [#allocation9], 5120
    $region49: #{forward.1} parent=1 // pred_fallthru
      _
    // Predicated region
    $region50: #{forward.1} parent=1 // pred_check
      _
    $region51: #{forward.1} parent=1 // pred_check_branch
      %116 = sbr.rel (0) target = $region53
    $region52: #{forward.1} parent=1 // pred_region
      %117 = dma.done [#allocation9], 1280
    $region53: #{forward.1} parent=1 // pred_fallthru
      _
    // Predicated region
    $region54: #{forward.1} parent=1 // pred_check
      _
    $region55: #{forward.1} parent=1 // pred_check_branch
      %119 = sbr.rel (0) target = $region57
    $region56: #{forward.1} parent=1 // pred_region
      %120 = dma.done [#allocation12], 2048
    $region57: #{forward.1} parent=1 // pred_fallthru
      _
    // Predicated region
    $region58: #{forward.1} parent=1 // pred_check
      _
    $region59: #{forward.1} parent=1 // pred_check_branch
      %122 = sbr.rel (0) target = $region61
    $region60: #{forward.1} parent=1 // pred_region
      %123 = dma.done [#allocation12], 1024
    $region61: #{forward.1} parent=1 // pred_fallthru
      _
    // Predicated region
    $region62: #{forward.1} parent=1 // pred_check
      _
    $region63: #{forward.1} parent=1 // pred_check_branch
      %125 = sbr.rel (0) target = $region65
    $region64: #{forward.1} parent=1 // pred_region
      %126 = dma.done [#allocation15], 512
    $region65: #{forward.1} parent=1 // pred_fallthru
      _
    // Predicated region
    $region66: #{forward.1} parent=1 // pred_check
      _
    $region67: #{forward.1} parent=1 // pred_check_branch
      %128 = sbr.rel (0) target = $region69
    $region68: #{forward.1} parent=1 // pred_region
      %129 = dma.done [#allocation15], 3840
    $region69: #{forward.1} parent=1 // pred_fallthru
      _
    %131 = vst [vmem:[#allocation2] sm:$0x3] 0.0
    %132 = vst [vmem:[#allocation2 + $0xa] sm:$0x3] 0.0
    %133 = vst [vmem:[#allocation2 + $0xc] sm:$0x3] 0.0
    %134 = vst [vmem:[#allocation2 + $0x16] sm:$0x3] 0.0
    %vm135 = vcmask 517120
    %136 = vst.msk [vmem:[#allocation3] sm:$0x3] %vm135, 0.0
    %137 = vst.msk [vmem:[#allocation3 + $0x6] sm:$0x3] %vm135, 0.0
    %138 = vst.msk [vmem:[#allocation3 + $0x8] sm:$0x3] %vm135, 0.0
    %139 = vst.msk [vmem:[#allocation3 + $0xe] sm:$0x3] %vm135, 0.0
    %vm140 = vcmask 254976
    %141 = vst.msk [vmem:[#allocation4] sm:$0x3] %vm140, 0.0
    %142 = vst.msk [vmem:[#allocation4 + $0x4] sm:$0x3] %vm140, 0.0
    %143 = vst.msk [vmem:[#allocation4 + $0x6] sm:$0x3] %vm140, 0.0
    %144 = vst.msk [vmem:[#allocation4 + $0xa] sm:$0x3] %vm140, 0.0
    %vm145 = vcmask 26624
    %146 = vst.msk [vmem:[#allocation5] sm:$0x7] %vm145, 0.0
    %147 = vst.msk [vmem:[#allocation5 + $0x5] sm:$0x7] %vm145, 0.0
    %148 = vst.msk [vmem:[#allocation5 + $0x8] sm:$0x7] %vm145, 0.0
    %149 = vst.msk [vmem:[#allocation5 + $0xd] sm:$0x7] %vm145, 0.0
    %v150 = vld [vmem:[%s0] sm:$0xff]
    %v151 = vld [vmem:[%s0 + $0x8] sm:$0xff]
    %v152 = vld [vmem:[%s0 + $0x10] sm:$0xff]
    %v153 = vld [vmem:[%s0 + $0x18] sm:$0xff]
    %v154 = vld [vmem:[%s0 + $0x20] sm:$0xff]
    %v155 = vpack.c.bf16 %v151, %v150
    %v156 = vpack.c.bf16 %v153, %v152
    %v157 = vpack.c.bf16 %v154, %v154
    %v158 = vld [vmem:[#allocation6] sm:$0xff]
    %v159 = vld [vmem:[#allocation6 + $0x8] sm:$0xff]
    %s160 = scalar_lea.vmem [#allocation6], 16
    %v161 = vld [vmem:[%s160] sm:$0xff]
    %v162 = vld [vmem:[%s160 + $0x8] sm:$0xff]
    %vm163 = vsmask.f32 7424
    %v165 = vshrl.u32 %v155, 16
    %v167 = vshll.u32 %v155, 16
    %v169 = vrot.slane %v167, 1
    %v170 = vor.u32 %v165, %v169
    %v172 = vshll.u32 %v156, 16
    %v174 = vrot.slane %v172, 1
    %v175 = vsel %vm163, %v170, %v174
    %v176 = vshrl.u32 %v156, 16
    %v178 = vor.u32 %v176, %v174
    %v180 = vshll.u32 %v157, 16
    %v182 = vrot.slane %v180, 1
    %v183 = vsel %vm163, %v178, %v182
    %v184 = vshrl.u32 %v157, 16
    %v186 = vor.u32 %v184, %v182
    %v189 = vunpack.c.l.b16 %v161
    %v190 = vunpack.c.h.b16 %v161
    %v191 = vunpack.c.l.b16 %v162
    %v192 = vunpack.c.h.b16 %v162
    %v193 = vpack.c.b16 %v191, %v189
    %v194 = vpack.c.b16 %v192, %v190
    %vm197 = vcmask 130048
    %v199 = vsel %vm197, %v175, 0
    %v202 = vsel %vm197, %v183, 0
    %v205 = vsel %vm197, %v186, 0
    %207 = vmatprep.subr.bf16.mxu0 0
    %208 = vmatpush1.bf16.msra.mxu0 0
    %209 = vmatprep.subr.bf16.mxu0 0
    %210 = vmatpush1.bf16.msra.mxu0 0
    %211 = vmatprep.subr.bf16.mxu0 0
    %212 = vmatpush1.bf16.msra.mxu0 0
    %213 = vmatprep.subr.bf16.mxu0 0
    %214 = vmatpush1.bf16.msra.mxu0 0
    %215 = vmatprep.subr.bf16.mxu0 0
    %216 = vmatpush1.bf16.msra.mxu0 0
    %217 = vmatprep.subr.bf16.mxu0 0
    %218 = vmatpush1.bf16.msra.mxu0 0
    %219 = vmatprep.subr.bf16.mxu0 0
    %220 = vmatpush1.bf16.msra.mxu0 0
    %221 = vmatprep.subr.bf16.mxu0 %v194
    %222 = vmatpush1.bf16.msra.mxu0 %v193
    %223 = vmatprep.subr.bf16.mxu0 0
    %224 = vmatpush2.bf16.msra.mxu0 0
    %225 = vmatprep.subr.bf16.mxu0 0
    %226 = vmatpush2.bf16.msra.mxu0 0
    %227 = vmatprep.subr.bf16.mxu0 0
    %228 = vmatpush2.bf16.msra.mxu0 0
    %229 = vmatprep.subr.bf16.mxu0 0
    %230 = vmatpush2.bf16.msra.mxu0 0
    %231 = vmatprep.subr.bf16.mxu0 0
    %232 = vmatpush2.bf16.msra.mxu0 0
    %233 = vmatprep.subr.bf16.mxu0 0
    %234 = vmatpush2.bf16.msra.mxu0 0
    %235 = vmatprep.subr.bf16.mxu0 0
    %236 = vmatpush2.bf16.msra.mxu0 0
    %237 = vmatprep.subr.bf16.mxu0 0
    %238 = vmatpush2.bf16.msra.mxu0 0
    %239 = vmatprep.mubr.bf16.mxu0 0
    %240 = vmatmul.mubr.bf16.gmra.mxu0 %v199
    %v241 = vpop.f32.mrf.mxu0
    %v242 = vadd.f32 0.0, %v241
    %v243 = vpop.f32.mrf.mxu0
    %v244 = vadd.f32 0.0, %v243
    %v245 = vpop.f32.mrf.mxu0
    %v246 = vadd.f32 0.0, %v245
    %v247 = vpop.f32.mrf.mxu0
    %v248 = vadd.f32 0.0, %v247
    %249 = vmatprep.mubr.bf16.mxu0 0
    %250 = vmatmul.mubr.bf16.gmra.mxu0 %v202
    %v251 = vpop.f32.mrf.mxu0
    %v252 = vadd.f32 0.0, %v251
    %v253 = vpop.f32.mrf.mxu0
    %v254 = vadd.f32 0.0, %v253
    %v255 = vpop.f32.mrf.mxu0
    %v256 = vadd.f32 0.0, %v255
    %v257 = vpop.f32.mrf.mxu0
    %v258 = vadd.f32 0.0, %v257
    %259 = vmatprep.mubr.bf16.mxu0 0
    %260 = vmatmul.mubr.bf16.gmra.mxu0 %v205
    %v261 = vpop.f32.mrf.mxu0
    %v262 = vadd.f32 0.0, %v261
    %v263 = vpop.f32.mrf.mxu0
    %v264 = vadd.f32 0.0, %v263
    %v265 = vpop.f32.mrf.mxu0
    %v266 = vpop.f32.mrf.mxu0
    %267 = vdwg.mxu0
    %v270 = vunpack.c.l.b16 %v158
    %v271 = vunpack.c.h.b16 %v158
    %v272 = vunpack.c.l.b16 %v159
    %v273 = vunpack.c.h.b16 %v159
    %v274 = vpack.c.b16 %v272, %v270
    %v275 = vpack.c.b16 %v273, %v271
    %v278 = vsel %vm197, %v155, 0
    %v280 = vsel %vm197, %v156, 0
    %v282 = vsel %vm197, %v157, 0
    %284 = vmatprep.subr.bf16.mxu0 0
    %285 = vmatpush1.bf16.msra.mxu0 0
    %286 = vmatprep.subr.bf16.mxu0 0
    %287 = vmatpush1.bf16.msra.mxu0 0
    %288 = vmatprep.subr.bf16.mxu0 0
    %289 = vmatpush1.bf16.msra.mxu0 0
    %290 = vmatprep.subr.bf16.mxu0 0
    %291 = vmatpush1.bf16.msra.mxu0 0
    %292 = vmatprep.subr.bf16.mxu0 0
    %293 = vmatpush1.bf16.msra.mxu0 0
    %294 = vmatprep.subr.bf16.mxu0 0
    %295 = vmatpush1.bf16.msra.mxu0 0
    %296 = vmatprep.subr.bf16.mxu0 0
    %297 = vmatpush1.bf16.msra.mxu0 0
    %298 = vmatprep.subr.bf16.mxu0 %v275
    %299 = vmatpush1.bf16.msra.mxu0 %v274
    %300 = vmatprep.subr.bf16.mxu0 0
    %301 = vmatpush2.bf16.msra.mxu0 0
    %302 = vmatprep.subr.bf16.mxu0 0
    %303 = vmatpush2.bf16.msra.mxu0 0
    %304 = vmatprep.subr.bf16.mxu0 0
    %305 = vmatpush2.bf16.msra.mxu0 0
    %306 = vmatprep.subr.bf16.mxu0 0
    %307 = vmatpush2.bf16.msra.mxu0 0
    %308 = vmatprep.subr.bf16.mxu0 0
    %309 = vmatpush2.bf16.msra.mxu0 0
    %310 = vmatprep.subr.bf16.mxu0 0
    %311 = vmatpush2.bf16.msra.mxu0 0
    %312 = vmatprep.subr.bf16.mxu0 0
    %313 = vmatpush2.bf16.msra.mxu0 0
    %314 = vmatprep.subr.bf16.mxu0 0
    %315 = vmatpush2.bf16.msra.mxu0 0
    %316 = vmatprep.mubr.bf16.mxu0 0
    %317 = vmatmul.mubr.bf16.gmra.mxu0 %v278
    %v318 = vpop.f32.mrf.mxu0
    %v319 = vadd.f32 %v242, %v318
    %v320 = vpop.f32.mrf.mxu0
    %v321 = vadd.f32 %v244, %v320
    %v322 = vpop.f32.mrf.mxu0
    %v323 = vadd.f32 %v246, %v322
    %v324 = vpop.f32.mrf.mxu0
    %v325 = vadd.f32 %v248, %v324
    %326 = vmatprep.mubr.bf16.mxu0 0
    %327 = vmatmul.mubr.bf16.gmra.mxu0 %v280
    %v328 = vpop.f32.mrf.mxu0
    %v329 = vadd.f32 %v252, %v328
    %v330 = vpop.f32.mrf.mxu0
    %v331 = vadd.f32 %v254, %v330
    %v332 = vpop.f32.mrf.mxu0
    %v333 = vadd.f32 %v256, %v332
    %v334 = vpop.f32.mrf.mxu0
    %v335 = vadd.f32 %v258, %v334
    %336 = vmatprep.mubr.bf16.mxu0 0
    %337 = vmatmul.mubr.bf16.gmra.mxu0 %v282
    %v338 = vpop.f32.mrf.mxu0
    %v339 = vadd.f32 %v262, %v338
    %v340 = vpop.f32.mrf.mxu0
    %v341 = vadd.f32 %v264, %v340
    %v342 = vpop.f32.mrf.mxu0
    %v343 = vpop.f32.mrf.mxu0
    %344 = vdwg.mxu0
    %s345 = scalar_lea.vmem [#allocation6], 32
    %v346 = vld [vmem:[%s345] sm:$0xff]
    %v347 = vld [vmem:[%s345 + $0x8] sm:$0xff]
    %vm351 = vcmask 1046528
    %v352 = vrot.slane %v155, 1
    %v353 = vrot.slane %v156, 1
    %v354 = vsel %vm351, %v352, %v353
    %v355 = vrot.slane %v157, 1
    %v356 = vsel %vm351, %v353, %v355
    %v359 = vunpack.c.l.b16 %v346
    %v360 = vunpack.c.h.b16 %v346
    %v361 = vunpack.c.l.b16 %v347
    %v362 = vunpack.c.h.b16 %v347
    %v363 = vpack.c.b16 %v361, %v359
    %v364 = vpack.c.b16 %v362, %v360
    %v368 = vsel %vm197, %v354, 0
    %v371 = vsel %vm197, %v356, 0
    %v374 = vsel %vm197, %v355, 0
    %376 = vmatprep.subr.bf16.mxu0 0
    %377 = vmatpush1.bf16.msra.mxu0 0
    %378 = vmatprep.subr.bf16.mxu0 0
    %379 = vmatpush1.bf16.msra.mxu0 0
    %380 = vmatprep.subr.bf16.mxu0 0
    %381 = vmatpush1.bf16.msra.mxu0 0
    %382 = vmatprep.subr.bf16.mxu0 0
    %383 = vmatpush1.bf16.msra.mxu0 0
    %384 = vmatprep.subr.bf16.mxu0 0
    %385 = vmatpush1.bf16.msra.mxu0 0
    %386 = vmatprep.subr.bf16.mxu0 0
    %387 = vmatpush1.bf16.msra.mxu0 0
    %388 = vmatprep.subr.bf16.mxu0 0
    %389 = vmatpush1.bf16.msra.mxu0 0
    %390 = vmatprep.subr.bf16.mxu0 %v364
    %391 = vmatpush1.bf16.msra.mxu0 %v363
    %392 = vmatprep.subr.bf16.mxu0 0
    %393 = vmatpush2.bf16.msra.mxu0 0
    %394 = vmatprep.subr.bf16.mxu0 0
    %395 = vmatpush2.bf16.msra.mxu0 0
    %396 = vmatprep.subr.bf16.mxu0 0
    %397 = vmatpush2.bf16.msra.mxu0 0
    %398 = vmatprep.subr.bf16.mxu0 0
    %399 = vmatpush2.bf16.msra.mxu0 0
    %400 = vmatprep.subr.bf16.mxu0 0
    %401 = vmatpush2.bf16.msra.mxu0 0
    %402 = vmatprep.subr.bf16.mxu0 0
    %403 = vmatpush2.bf16.msra.mxu0 0
    %404 = vmatprep.subr.bf16.mxu0 0
    %405 = vmatpush2.bf16.msra.mxu0 0
    %406 = vmatprep.subr.bf16.mxu0 0
    %407 = vmatpush2.bf16.msra.mxu0 0
    %408 = vmatprep.mubr.bf16.mxu0 0
    %409 = vmatmul.mubr.bf16.gmra.mxu0 %v368
    %v410 = vpop.f32.mrf.mxu0
    %v411 = vadd.f32 0.0, %v410
    %v412 = vpop.f32.mrf.mxu0
    %v413 = vadd.f32 0.0, %v412
    %v414 = vpop.f32.mrf.mxu0
    %v415 = vadd.f32 0.0, %v414
    %v416 = vpop.f32.mrf.mxu0
    %v417 = vadd.f32 0.0, %v416
    %418 = vmatprep.mubr.bf16.mxu0 0
    %419 = vmatmul.mubr.bf16.gmra.mxu0 %v371
    %v420 = vpop.f32.mrf.mxu0
    %v421 = vadd.f32 0.0, %v420
    %v422 = vpop.f32.mrf.mxu0
    %v423 = vadd.f32 0.0, %v422
    %v424 = vpop.f32.mrf.mxu0
    %v425 = vadd.f32 0.0, %v424
    %v426 = vpop.f32.mrf.mxu0
    %v427 = vadd.f32 0.0, %v426
    %428 = vmatprep.mubr.bf16.mxu0 0
    %429 = vmatmul.mubr.bf16.gmra.mxu0 %v374
    %v430 = vpop.f32.mrf.mxu0
    %v431 = vadd.f32 0.0, %v430
    %v432 = vpop.f32.mrf.mxu0
    %v433 = vadd.f32 0.0, %v432
    %v434 = vpop.f32.mrf.mxu0
    %v435 = vpop.f32.mrf.mxu0
    %436 = vdwg.mxu0
    %v437 = vadd.f32 %v319, %v411
    %v438 = vadd.f32 %v321, %v413
    %v439 = vadd.f32 %v323, %v415
    %v440 = vadd.f32 %v325, %v417
    %v441 = vadd.f32 %v329, %v421
    %v442 = vadd.f32 %v331, %v423
    %v443 = vadd.f32 %v333, %v425
    %v444 = vadd.f32 %v335, %v427
    %v445 = vadd.f32 %v339, %v431
    %v446 = vadd.f32 %v341, %v433
    %s447 = scalar_lea.vmem [#allocation6], 48
    %v448 = vld [vmem:[%s447] sm:$0xff]
    %v449 = vld [vmem:[%s447 + $0x8] sm:$0xff]
    %vm450 = vsmask.f32 6400
    %v451 = vrot.slane %v165, 1
    %v452 = vrot.slane %v167, 2
    %v453 = vor.u32 %v451, %v452
    %v454 = vrot.slane %v176, 1
    %v455 = vrot.slane %v172, 2
    %v456 = vor.u32 %v454, %v455
    %v457 = vsel %vm450, %v453, %v456
    %v458 = vrot.slane %v184, 1
    %v459 = vrot.slane %v180, 2
    %v460 = vor.u32 %v458, %v459
    %v461 = vsel %vm450, %v456, %v460
    %v464 = vunpack.c.l.b16 %v448
    %v465 = vunpack.c.h.b16 %v448
    %v466 = vunpack.c.l.b16 %v449
    %v467 = vunpack.c.h.b16 %v449
    %v468 = vpack.c.b16 %v466, %v464
    %v469 = vpack.c.b16 %v467, %v465
    %v473 = vsel %vm197, %v457, 0
    %v476 = vsel %vm197, %v461, 0
    %v479 = vsel %vm197, %v460, 0
    %481 = vmatprep.subr.bf16.mxu0 0
    %482 = vmatpush1.bf16.msra.mxu0 0
    %483 = vmatprep.subr.bf16.mxu0 0
    %484 = vmatpush1.bf16.msra.mxu0 0
    %485 = vmatprep.subr.bf16.mxu0 0
    %486 = vmatpush1.bf16.msra.mxu0 0
    %487 = vmatprep.subr.bf16.mxu0 0
    %488 = vmatpush1.bf16.msra.mxu0 0
    %489 = vmatprep.subr.bf16.mxu0 0
    %490 = vmatpush1.bf16.msra.mxu0 0
    %491 = vmatprep.subr.bf16.mxu0 0
    %492 = vmatpush1.bf16.msra.mxu0 0
    %493 = vmatprep.subr.bf16.mxu0 0
    %494 = vmatpush1.bf16.msra.mxu0 0
    %495 = vmatprep.subr.bf16.mxu0 %v469
    %496 = vmatpush1.bf16.msra.mxu0 %v468
    %497 = vmatprep.subr.bf16.mxu0 0
    %498 = vmatpush2.bf16.msra.mxu0 0
    %499 = vmatprep.subr.bf16.mxu0 0
    %500 = vmatpush2.bf16.msra.mxu0 0
    %501 = vmatprep.subr.bf16.mxu0 0
    %502 = vmatpush2.bf16.msra.mxu0 0
    %503 = vmatprep.subr.bf16.mxu0 0
    %504 = vmatpush2.bf16.msra.mxu0 0
    %505 = vmatprep.subr.bf16.mxu0 0
    %506 = vmatpush2.bf16.msra.mxu0 0
    %507 = vmatprep.subr.bf16.mxu0 0
    %508 = vmatpush2.bf16.msra.mxu0 0
    %509 = vmatprep.subr.bf16.mxu0 0
    %510 = vmatpush2.bf16.msra.mxu0 0
    %511 = vmatprep.subr.bf16.mxu0 0
    %512 = vmatpush2.bf16.msra.mxu0 0
    %513 = vmatprep.mubr.bf16.mxu0 0
    %514 = vmatmul.mubr.bf16.gmra.mxu0 %v473
    %v515 = vpop.f32.mrf.mxu0
    %v516 = vadd.f32 0.0, %v515
    %v517 = vpop.f32.mrf.mxu0
    %v518 = vadd.f32 0.0, %v517
    %v519 = vpop.f32.mrf.mxu0
    %v520 = vadd.f32 0.0, %v519
    %v521 = vpop.f32.mrf.mxu0
    %v522 = vadd.f32 0.0, %v521
    %523 = vmatprep.mubr.bf16.mxu0 0
    %524 = vmatmul.mubr.bf16.gmra.mxu0 %v476
    %v525 = vpop.f32.mrf.mxu0
    %v526 = vadd.f32 0.0, %v525
    %v527 = vpop.f32.mrf.mxu0
    %v528 = vadd.f32 0.0, %v527
    %v529 = vpop.f32.mrf.mxu0
    %v530 = vadd.f32 0.0, %v529
    %v531 = vpop.f32.mrf.mxu0
    %v532 = vadd.f32 0.0, %v531
    %533 = vmatprep.mubr.bf16.mxu0 0
    %534 = vmatmul.mubr.bf16.gmra.mxu0 %v479
    %v535 = vpop.f32.mrf.mxu0
    %v536 = vadd.f32 0.0, %v535
    %v537 = vpop.f32.mrf.mxu0
    %v538 = vadd.f32 0.0, %v537
    %v539 = vpop.f32.mrf.mxu0
    %v540 = vpop.f32.mrf.mxu0
    %541 = vdwg.mxu0
    %v542 = vadd.f32 %v437, %v516
    %v543 = vadd.f32 %v438, %v518
    %v544 = vadd.f32 %v439, %v520
    %v545 = vadd.f32 %v440, %v522
    %v546 = vadd.f32 %v441, %v526
    %v547 = vadd.f32 %v442, %v528
    %v548 = vadd.f32 %v443, %v530
    %v549 = vadd.f32 %v444, %v532
    %v550 = vadd.f32 %v445, %v536
    %v551 = vadd.f32 %v446, %v538
    %s552 = scalar_lea.vmem [#allocation6], 64
    %v553 = vld [vmem:[%s552] sm:$0xff]
    %v554 = vld [vmem:[%s552 + $0x8] sm:$0xff]
    %vm555 = vcmask 1045504
    %v556 = vrot.slane %v155, 2
    %v557 = vrot.slane %v156, 2
    %v558 = vsel %vm555, %v556, %v557
    %v559 = vrot.slane %v157, 2
    %v560 = vsel %vm555, %v557, %v559
    %v563 = vunpack.c.l.b16 %v553
    %v564 = vunpack.c.h.b16 %v553
    %v565 = vunpack.c.l.b16 %v554
    %v566 = vunpack.c.h.b16 %v554
    %v567 = vpack.c.b16 %v565, %v563
    %v568 = vpack.c.b16 %v566, %v564
    %v572 = vsel %vm197, %v558, 0
    %v575 = vsel %vm197, %v560, 0
    %v578 = vsel %vm197, %v559, 0
    %580 = vmatprep.subr.bf16.mxu0 0
    %581 = vmatpush1.bf16.msra.mxu0 0
    %582 = vmatprep.subr.bf16.mxu0 0
    %583 = vmatpush1.bf16.msra.mxu0 0
    %584 = vmatprep.subr.bf16.mxu0 0
    %585 = vmatpush1.bf16.msra.mxu0 0
    %586 = vmatprep.subr.bf16.mxu0 0
    %587 = vmatpush1.bf16.msra.mxu0 0
    %588 = vmatprep.subr.bf16.mxu0 0
    %589 = vmatpush1.bf16.msra.mxu0 0
    %590 = vmatprep.subr.bf16.mxu0 0
    %591 = vmatpush1.bf16.msra.mxu0 0
    %592 = vmatprep.subr.bf16.mxu0 0
    %593 = vmatpush1.bf16.msra.mxu0 0
    %594 = vmatprep.subr.bf16.mxu0 %v568
    %595 = vmatpush1.bf16.msra.mxu0 %v567
    %596 = vmatprep.subr.bf16.mxu0 0
    %597 = vmatpush2.bf16.msra.mxu0 0
    %598 = vmatprep.subr.bf16.mxu0 0
    %599 = vmatpush2.bf16.msra.mxu0 0
    %600 = vmatprep.subr.bf16.mxu0 0
    %601 = vmatpush2.bf16.msra.mxu0 0
    %602 = vmatprep.subr.bf16.mxu0 0
    %603 = vmatpush2.bf16.msra.mxu0 0
    %604 = vmatprep.subr.bf16.mxu0 0
    %605 = vmatpush2.bf16.msra.mxu0 0
    %606 = vmatprep.subr.bf16.mxu0 0
    %607 = vmatpush2.bf16.msra.mxu0 0
    %608 = vmatprep.subr.bf16.mxu0 0
    %609 = vmatpush2.bf16.msra.mxu0 0
    %610 = vmatprep.subr.bf16.mxu0 0
    %611 = vmatpush2.bf16.msra.mxu0 0
    %612 = vmatprep.mubr.bf16.mxu0 0
    %613 = vmatmul.mubr.bf16.gmra.mxu0 %v572
    %v614 = vpop.f32.mrf.mxu0
    %v615 = vadd.f32 0.0, %v614
    %v616 = vpop.f32.mrf.mxu0
    %v617 = vadd.f32 0.0, %v616
    %v618 = vpop.f32.mrf.mxu0
    %v619 = vadd.f32 0.0, %v618
    %v620 = vpop.f32.mrf.mxu0
    %v621 = vadd.f32 0.0, %v620
    %622 = vmatprep.mubr.bf16.mxu0 0
    %623 = vmatmul.mubr.bf16.gmra.mxu0 %v575
    %v624 = vpop.f32.mrf.mxu0
    %v625 = vadd.f32 0.0, %v624
    %v626 = vpop.f32.mrf.mxu0
    %v627 = vadd.f32 0.0, %v626
    %v628 = vpop.f32.mrf.mxu0
    %v629 = vadd.f32 0.0, %v628
    %v630 = vpop.f32.mrf.mxu0
    %v631 = vadd.f32 0.0, %v630
    %632 = vmatprep.mubr.bf16.mxu0 0
    %633 = vmatmul.mubr.bf16.gmra.mxu0 %v578
    %v634 = vpop.f32.mrf.mxu0
    %v635 = vadd.f32 0.0, %v634
    %v636 = vpop.f32.mrf.mxu0
    %v637 = vadd.f32 0.0, %v636
    %v638 = vpop.f32.mrf.mxu0
    %v639 = vpop.f32.mrf.mxu0
    %640 = vdwg.mxu0
    %v641 = vadd.f32 %v542, %v615
    %v642 = vadd.f32 %v543, %v617
    %v643 = vadd.f32 %v544, %v619
    %v644 = vadd.f32 %v545, %v621
    %v645 = vadd.f32 %v546, %v625
    %v646 = vadd.f32 %v547, %v627
    %v647 = vadd.f32 %v548, %v629
    %v648 = vadd.f32 %v549, %v631
    %v649 = vadd.f32 %v550, %v635
    %v650 = vadd.f32 %v551, %v637
    %v651 = vld [vmem:[%s9] ss:$8 sm:$0x3]
    %v653 = vlaneseq
    %v654 = vshrl.u32 %v653, 7
    %v655 = vsub.s32 0, %v654
    %v656 = vrot.slane %v651, %v655
    %v657 = vlaneseq
    %v658 = vshrl.u32 %v657, 7
    %v659 = vsub.s32 1, %v658
    %v660 = vrot.slane %v651, %v659
    %v663 = vadd.f32 %v641, %v656
    %v664 = vadd.f32 %v642, %v660
    %v665 = vadd.f32 %v643, %v656
    %v666 = vadd.f32 %v644, %v660
    %v667 = vadd.f32 %v645, %v656
    %v668 = vadd.f32 %v646, %v660
    %v669 = vadd.f32 %v647, %v656
    %v670 = vadd.f32 %v648, %v660
    %v671 = vadd.f32 %v649, %v656
    %v672 = vadd.f32 %v650, %v660
    %v673 = vmax.f32 %v663, 0.0
    %v674 = vmax.f32 %v664, 0.0
    %v675 = vmax.f32 %v665, 0.0
    %v676 = vmax.f32 %v666, 0.0
    %v677 = vmax.f32 %v667, 0.0
    %v678 = vmax.f32 %v668, 0.0
    %v679 = vmax.f32 %v669, 0.0
    %v680 = vmax.f32 %v670, 0.0
    %v681 = vmax.f32 %v671, 0.0
    %v682 = vmax.f32 %v672, 0.0
    %v683 = vld [vmem:[#allocation16 + $0x10] sm:$0xf]
    %v684 = vld [vmem:[#allocation16 + $0x14] sm:$0xf]
    %v685 = vpack.c.bf16 %v675, %v673
    %v686 = vpack.c.bf16 %v676, %v674
    %v687 = vpack.c.bf16 %v679, %v677
    %v688 = vpack.c.bf16 %v680, %v678
    %v689 = vpack.c.bf16 %v681, %v681
    %v690 = vpack.c.bf16 %v682, %v682
    %v693 = vunpack.c.l.b16 %v683
    %v694 = vunpack.c.l.b16 %v684
    %v695 = vpack.c.b16 %v694, %v693
    %vm696 = vcmask 293888
    %v698 = vsel %vm696, %v695, 0
    %vm700 = vcmask 1041408
    %v702 = vsel %vm700, %v689, 0
    %v705 = vsel %vm700, %v690, 0
    %707 = vmatprep.subr.bf16.mxu0 0
    %708 = vmatpush1.bf16.msra.mxu0 0
    %709 = vmatprep.subr.bf16.mxu0 0
    %710 = vmatpush1.bf16.msra.mxu0 0
    %711 = vmatprep.subr.bf16.mxu0 0
    %712 = vmatpush1.bf16.msra.mxu0 0
    %713 = vmatprep.subr.bf16.mxu0 0
    %714 = vmatpush1.bf16.msra.mxu0 0
    %715 = vmatprep.subr.bf16.mxu0 0
    %716 = vmatpush1.bf16.msra.mxu0 0
    %717 = vmatprep.subr.bf16.mxu0 %v705
    %718 = vmatpush1.bf16.msra.mxu0 %v702
    %719 = vmatprep.subr.bf16.mxu0 %v688
    %720 = vmatpush1.bf16.msra.mxu0 %v687
    %721 = vmatprep.subr.bf16.mxu0 %v686
    %722 = vmatpush1.bf16.msra.mxu0 %v685
    %723 = vmatprep.subr.bf16.mxu0 0
    %724 = vmatpush2.bf16.msra.mxu0 0
    %725 = vmatprep.subr.bf16.mxu0 0
    %726 = vmatpush2.bf16.msra.mxu0 0
    %727 = vmatprep.subr.bf16.mxu0 0
    %728 = vmatpush2.bf16.msra.mxu0 0
    %729 = vmatprep.subr.bf16.mxu0 0
    %730 = vmatpush2.bf16.msra.mxu0 0
    %731 = vmatprep.subr.bf16.mxu0 0
    %732 = vmatpush2.bf16.msra.mxu0 0
    %733 = vmatprep.subr.bf16.mxu0 0
    %734 = vmatpush2.bf16.msra.mxu0 0
    %735 = vmatprep.subr.bf16.mxu0 0
    %736 = vmatpush2.bf16.msra.mxu0 0
    %737 = vmatprep.subr.bf16.mxu0 0
    %738 = vmatpush2.bf16.msra.mxu0 0
    %739 = vmatprep.mubr.bf16.mxu0 0
    %740 = vmatmul.mubr.bf16.gmra.mxu0 %v698
    %v741 = vpop.f32.mrf.mxu0
    %v742 = vadd.f32 0.0, %v741
    %v743 = vpop.f32.mrf.mxu0
    %v744 = vadd.f32 0.0, %v743
    %v745 = vpop.f32.mrf.mxu0
    %v746 = vadd.f32 0.0, %v745
    %v747 = vpop.f32.mrf.mxu0
    %v748 = vadd.f32 0.0, %v747
    %749 = vdwg.mxu0
    %v750 = vld [vmem:[#allocation11] sm:$0xf]
    %v751 = vld [vmem:[#allocation11 + $0x4] sm:$0xf]
    %v752 = vld [vmem:[#allocation11 + $0x8] sm:$0xf]
    %v753 = vld [vmem:[#allocation11 + $0xc] sm:$0xf]
    %v754 = vld [vmem:[#allocation11 + $0x10] sm:$0xf]
    %v755 = vld [vmem:[#allocation11 + $0x14] sm:$0xf]
    %v756 = vld [vmem:[#allocation11 + $0x18] sm:$0xf]
    %v757 = vld [vmem:[#allocation11 + $0x1c] sm:$0xf]
    %v758 = vld [vmem:[#allocation11 + $0x20] sm:$0xf]
    %v759 = vld [vmem:[#allocation11 + $0x24] sm:$0xf]
    %v760 = vld [vmem:[#allocation11 + $0x28] sm:$0xf]
    %v761 = vld [vmem:[#allocation11 + $0x2c] sm:$0xf]
    %v762 = vld [vmem:[#allocation11 + $0x30] sm:$0xf]
    %v763 = vld [vmem:[#allocation11 + $0x34] sm:$0xf]
    %v764 = vld [vmem:[#allocation11 + $0x38] sm:$0xf]
    %v765 = vld [vmem:[#allocation11 + $0x3c] sm:$0xf]
    %v766 = vld [vmem:[#allocation11 + $0x40] sm:$0xf]
    %v767 = vld [vmem:[#allocation11 + $0x44] sm:$0xf]
    %v768 = vld [vmem:[#allocation11 + $0x48] sm:$0xf]
    %v769 = vld [vmem:[#allocation11 + $0x4c] sm:$0xf]
    %v770 = vld [vmem:[#allocation11 + $0x50] sm:$0xf]
    %v771 = vld [vmem:[#allocation11 + $0x54] sm:$0xf]
    %v772 = vld [vmem:[#allocation11 + $0x58] sm:$0xf]
    %v773 = vld [vmem:[#allocation11 + $0x5c] sm:$0xf]
    %v774 = vld [vmem:[#allocation11 + $0x60] sm:$0xf]
    %v775 = vld [vmem:[#allocation11 + $0x64] sm:$0xf]
    %v776 = vld [vmem:[#allocation11 + $0x68] sm:$0xf]
    %v777 = vld [vmem:[#allocation11 + $0x6c] sm:$0xf]
    %v778 = vld [vmem:[#allocation11 + $0x70] sm:$0xf]
    %v779 = vld [vmem:[#allocation11 + $0x74] sm:$0xf]
    %v780 = vld [vmem:[#allocation11 + $0x78] sm:$0xf]
    %v781 = vld [vmem:[#allocation11 + $0x7c] sm:$0xf]
    %v782 = vpack.c.bf16 %v746, %v742
    %v783 = vpack.c.bf16 %v748, %v744
    %v816 = vunpack.c.l.b16 %v750
    %v817 = vunpack.c.l.b16 %v751
    %v818 = vunpack.c.l.b16 %v752
    %v819 = vunpack.c.l.b16 %v753
    %v820 = vunpack.c.l.b16 %v754
    %v821 = vunpack.c.l.b16 %v755
    %v822 = vunpack.c.l.b16 %v756
    %v823 = vunpack.c.l.b16 %v757
    %v824 = vunpack.c.l.b16 %v758
    %v825 = vunpack.c.l.b16 %v759
    %v826 = vunpack.c.l.b16 %v760
    %v827 = vunpack.c.l.b16 %v761
    %v828 = vunpack.c.l.b16 %v762
    %v829 = vunpack.c.l.b16 %v763
    %v830 = vunpack.c.l.b16 %v764
    %v831 = vunpack.c.l.b16 %v765
    %v832 = vunpack.c.l.b16 %v766
    %v833 = vunpack.c.l.b16 %v767
    %v834 = vunpack.c.l.b16 %v768
    %v835 = vunpack.c.l.b16 %v769
    %v836 = vunpack.c.l.b16 %v770
    %v837 = vunpack.c.l.b16 %v771
    %v838 = vunpack.c.l.b16 %v772
    %v839 = vunpack.c.l.b16 %v773
    %v840 = vunpack.c.l.b16 %v774
    %v841 = vunpack.c.l.b16 %v775
    %v842 = vunpack.c.l.b16 %v776
    %v843 = vunpack.c.l.b16 %v777
    %v844 = vunpack.c.l.b16 %v778
    %v845 = vunpack.c.l.b16 %v779
    %v846 = vunpack.c.l.b16 %v780
    %v847 = vunpack.c.l.b16 %v781
    %v848 = vpack.c.b16 %v817, %v816
    %v849 = vpack.c.b16 %v819, %v818
    %v850 = vpack.c.b16 %v821, %v820
    %v851 = vpack.c.b16 %v823, %v822
    %v852 = vpack.c.b16 %v825, %v824
    %v853 = vpack.c.b16 %v827, %v826
    %v854 = vpack.c.b16 %v829, %v828
    %v855 = vpack.c.b16 %v831, %v830
    %v856 = vpack.c.b16 %v833, %v832
    %v857 = vpack.c.b16 %v835, %v834
    %v858 = vpack.c.b16 %v837, %v836
    %v859 = vpack.c.b16 %v839, %v838
    %v860 = vpack.c.b16 %v841, %v840
    %v861 = vpack.c.b16 %v843, %v842
    %v862 = vpack.c.b16 %v845, %v844
    %v863 = vpack.c.b16 %v847, %v846
    %880 = vmatprep.subr.bf16.mxu0 0
    %881 = vmatpush1.bf16.msra.mxu0 %v855
    %882 = vmatprep.subr.bf16.mxu0 0
    %883 = vmatpush1.bf16.msra.mxu0 %v854
    %884 = vmatprep.subr.bf16.mxu0 0
    %885 = vmatpush1.bf16.msra.mxu0 %v853
    %886 = vmatprep.subr.bf16.mxu0 0
    %887 = vmatpush1.bf16.msra.mxu0 %v852
    %888 = vmatprep.subr.bf16.mxu0 0
    %889 = vmatpush1.bf16.msra.mxu0 %v851
    %890 = vmatprep.subr.bf16.mxu0 0
    %891 = vmatpush1.bf16.msra.mxu0 %v850
    %892 = vmatprep.subr.bf16.mxu0 0
    %893 = vmatpush1.bf16.msra.mxu0 %v849
    %894 = vmatprep.subr.bf16.mxu0 0
    %895 = vmatpush1.bf16.msra.mxu0 %v848
    %896 = vmatprep.subr.bf16.mxu0 0
    %897 = vmatpush2.bf16.msra.mxu0 %v863
    %898 = vmatprep.subr.bf16.mxu0 0
    %899 = vmatpush2.bf16.msra.mxu0 %v862
    %900 = vmatprep.subr.bf16.mxu0 0
    %901 = vmatpush2.bf16.msra.mxu0 %v861
    %902 = vmatprep.subr.bf16.mxu0 0
    %903 = vmatpush2.bf16.msra.mxu0 %v860
    %904 = vmatprep.subr.bf16.mxu0 0
    %905 = vmatpush2.bf16.msra.mxu0 %v859
    %906 = vmatprep.subr.bf16.mxu0 0
    %907 = vmatpush2.bf16.msra.mxu0 %v858
    %908 = vmatprep.subr.bf16.mxu0 0
    %909 = vmatpush2.bf16.msra.mxu0 %v857
    %910 = vmatprep.subr.bf16.mxu0 0
    %911 = vmatpush2.bf16.msra.mxu0 %v856
    %912 = vmatprep.mubr.bf16.mxu0 %v783
    %913 = vmatmul.mubr.bf16.gmra.mxu0 %v782
    %v914 = vpop.f32.mrf.mxu0
    %v915 = vadd.f32 0.0, %v914
    %v916 = vpop.f32.mrf.mxu0
    %v917 = vpop.f32.mrf.mxu0
    %v918 = vadd.f32 0.0, %v917
    %v919 = vpop.f32.mrf.mxu0
    %920 = vdwg.mxu0
    %921 = vst [vmem:[#allocation2 + $0x2] sm:$0xff] %v915
    %922 = vst [vmem:[#allocation2 + $0xe] sm:$0xff] %v918
    %v923 = vld [vmem:[#allocation2] sm:$0xff]
    %v924 = vld [vmem:[#allocation2 + $0x8] sm:$0xff]
    %v925 = vld [vmem:[#allocation2 + $0x10] sm:$0xff]
    %v926 = vpack.c.bf16 %v924, %v923
    %v927 = vpack.c.bf16 %v925, %v925
    %v928 = vld [vmem:[#allocation8] sm:$0xf]
    %v929 = vld [vmem:[#allocation8 + $0x4] sm:$0xf]
    %v930 = vld [vmem:[#allocation8 + $0x8] sm:$0xf]
    %v931 = vld [vmem:[#allocation8 + $0xc] sm:$0xf]
    %v932 = vld [vmem:[#allocation8 + $0x10] sm:$0xf]
    %v933 = vld [vmem:[#allocation8 + $0x14] sm:$0xf]
    %v934 = vld [vmem:[#allocation8 + $0x18] sm:$0xf]
    %v935 = vld [vmem:[#allocation8 + $0x1c] sm:$0xf]
    %v936 = vld [vmem:[#allocation8 + $0x20] sm:$0xf]
    %v937 = vld [vmem:[#allocation8 + $0x24] sm:$0xf]
    %v938 = vld [vmem:[#allocation8 + $0x28] sm:$0xf]
    %v939 = vld [vmem:[#allocation8 + $0x2c] sm:$0xf]
    %v940 = vld [vmem:[#allocation8 + $0x30] sm:$0xf]
    %v941 = vld [vmem:[#allocation8 + $0x34] sm:$0xf]
    %v942 = vld [vmem:[#allocation8 + $0x38] sm:$0xf]
    %v943 = vld [vmem:[#allocation8 + $0x3c] sm:$0xf]
    %s944 = scalar_lea.vmem [#allocation8], 64
    %v945 = vld [vmem:[%s944] sm:$0xf]
    %v946 = vld [vmem:[%s944 + $0x4] sm:$0xf]
    %v947 = vld [vmem:[%s944 + $0x8] sm:$0xf]
    %v948 = vld [vmem:[%s944 + $0xc] sm:$0xf]
    %v949 = vld [vmem:[%s944 + $0x10] sm:$0xf]
    %v950 = vld [vmem:[%s944 + $0x14] sm:$0xf]
    %v951 = vld [vmem:[%s944 + $0x18] sm:$0xf]
    %v952 = vld [vmem:[%s944 + $0x1c] sm:$0xf]
    %v953 = vld [vmem:[%s944 + $0x20] sm:$0xf]
    %v954 = vld [vmem:[%s944 + $0x24] sm:$0xf]
    %v955 = vld [vmem:[%s944 + $0x28] sm:$0xf]
    %v956 = vld [vmem:[%s944 + $0x2c] sm:$0xf]
    %v957 = vld [vmem:[%s944 + $0x30] sm:$0xf]
    %v958 = vld [vmem:[%s944 + $0x34] sm:$0xf]
    %v959 = vld [vmem:[%s944 + $0x38] sm:$0xf]
    %v960 = vld [vmem:[%s944 + $0x3c] sm:$0xf]
    %v962 = vshrl.u32 %v926, 16
    %v964 = vshll.u32 %v926, 16
    %v966 = vrot.slane %v964, 1
    %v967 = vor.u32 %v962, %v966
    %v969 = vshll.u32 %v927, 16
    %v971 = vrot.slane %v969, 1
    %v972 = vsel %vm163, %v967, %v971
    %v973 = vshrl.u32 %v927, 16
    %v975 = vor.u32 %v973, %v971
    %v994 = vunpack.c.l.b16 %v945
    %v995 = vunpack.c.l.b16 %v946
    %v996 = vunpack.c.l.b16 %v947
    %v997 = vunpack.c.l.b16 %v948
    %v998 = vunpack.c.l.b16 %v949
    %v999 = vunpack.c.l.b16 %v950
    %v1000 = vunpack.c.l.b16 %v951
    %v1001 = vunpack.c.l.b16 %v952
    %v1002 = vunpack.c.l.b16 %v953
    %v1003 = vunpack.c.l.b16 %v954
    %v1004 = vunpack.c.l.b16 %v955
    %v1005 = vunpack.c.l.b16 %v956
    %v1006 = vunpack.c.l.b16 %v957
    %v1007 = vunpack.c.l.b16 %v958
    %v1008 = vunpack.c.l.b16 %v959
    %v1009 = vunpack.c.l.b16 %v960
    %v1010 = vpack.c.b16 %v995, %v994
    %v1011 = vpack.c.b16 %v997, %v996
    %v1012 = vpack.c.b16 %v999, %v998
    %v1013 = vpack.c.b16 %v1001, %v1000
    %v1014 = vpack.c.b16 %v1003, %v1002
    %v1015 = vpack.c.b16 %v1005, %v1004
    %v1016 = vpack.c.b16 %v1007, %v1006
    %v1017 = vpack.c.b16 %v1009, %v1008
    %1026 = vmatprep.subr.bf16.mxu0 0
    %1027 = vmatpush1.bf16.msra.mxu0 %v1017
    %1028 = vmatprep.subr.bf16.mxu0 0
    %1029 = vmatpush1.bf16.msra.mxu0 %v1016
    %1030 = vmatprep.subr.bf16.mxu0 0
    %1031 = vmatpush1.bf16.msra.mxu0 %v1015
    %1032 = vmatprep.subr.bf16.mxu0 0
    %1033 = vmatpush1.bf16.msra.mxu0 %v1014
    %1034 = vmatprep.subr.bf16.mxu0 0
    %1035 = vmatpush1.bf16.msra.mxu0 %v1013
    %1036 = vmatprep.subr.bf16.mxu0 0
    %1037 = vmatpush1.bf16.msra.mxu0 %v1012
    %1038 = vmatprep.subr.bf16.mxu0 0
    %1039 = vmatpush1.bf16.msra.mxu0 %v1011
    %1040 = vmatprep.subr.bf16.mxu0 0
    %1041 = vmatpush1.bf16.msra.mxu0 %v1010
    %1042 = vmatprep.subr.bf16.mxu0 0
    %1043 = vmatpush2.bf16.msra.mxu0 0
    %1044 = vmatprep.subr.bf16.mxu0 0
    %1045 = vmatpush2.bf16.msra.mxu0 0
    %1046 = vmatprep.subr.bf16.mxu0 0
    %1047 = vmatpush2.bf16.msra.mxu0 0
    %1048 = vmatprep.subr.bf16.mxu0 0
    %1049 = vmatpush2.bf16.msra.mxu0 0
    %1050 = vmatprep.subr.bf16.mxu0 0
    %1051 = vmatpush2.bf16.msra.mxu0 0
    %1052 = vmatprep.subr.bf16.mxu0 0
    %1053 = vmatpush2.bf16.msra.mxu0 0
    %1054 = vmatprep.subr.bf16.mxu0 0
    %1055 = vmatpush2.bf16.msra.mxu0 0
    %1056 = vmatprep.subr.bf16.mxu0 0
    %1057 = vmatpush2.bf16.msra.mxu0 0
    %1058 = vmatprep.mubr.bf16.mxu0 0
    %1059 = vmatmul.mubr.bf16.gmra.mxu0 %v972
    %v1060 = vpop.f32.mrf.mxu0
    %v1061 = vadd.f32 0.0, %v1060
    %v1062 = vpop.f32.mrf.mxu0
    %v1063 = vpop.f32.mrf.mxu0
    %v1064 = vadd.f32 0.0, %v1063
    %v1065 = vpop.f32.mrf.mxu0
    %1066 = vmatprep.mubr.bf16.mxu0 0
    %1067 = vmatmul.mubr.bf16.gmra.mxu0 %v975
    %v1068 = vpop.f32.mrf.mxu0
    %v1069 = vadd.f32 0.0, %v1068
    %v1070 = vpop.f32.mrf.mxu0
    %v1071 = vpop.f32.mrf.mxu0
    %v1072 = vpop.f32.mrf.mxu0
    %1073 = vdwg.mxu0
    %v1090 = vunpack.c.l.b16 %v928
    %v1091 = vunpack.c.l.b16 %v929
    %v1092 = vunpack.c.l.b16 %v930
    %v1093 = vunpack.c.l.b16 %v931
    %v1094 = vunpack.c.l.b16 %v932
    %v1095 = vunpack.c.l.b16 %v933
    %v1096 = vunpack.c.l.b16 %v934
    %v1097 = vunpack.c.l.b16 %v935
    %v1098 = vunpack.c.l.b16 %v936
    %v1099 = vunpack.c.l.b16 %v937
    %v1100 = vunpack.c.l.b16 %v938
    %v1101 = vunpack.c.l.b16 %v939
    %v1102 = vunpack.c.l.b16 %v940
    %v1103 = vunpack.c.l.b16 %v941
    %v1104 = vunpack.c.l.b16 %v942
    %v1105 = vunpack.c.l.b16 %v943
    %v1106 = vpack.c.b16 %v1091, %v1090
    %v1107 = vpack.c.b16 %v1093, %v1092
    %v1108 = vpack.c.b16 %v1095, %v1094
    %v1109 = vpack.c.b16 %v1097, %v1096
    %v1110 = vpack.c.b16 %v1099, %v1098
    %v1111 = vpack.c.b16 %v1101, %v1100
    %v1112 = vpack.c.b16 %v1103, %v1102
    %v1113 = vpack.c.b16 %v1105, %v1104
    %1122 = vmatprep.subr.bf16.mxu0 0
    %1123 = vmatpush1.bf16.msra.mxu0 %v1113
    %1124 = vmatprep.subr.bf16.mxu0 0
    %1125 = vmatpush1.bf16.msra.mxu0 %v1112
    %1126 = vmatprep.subr.bf16.mxu0 0
    %1127 = vmatpush1.bf16.msra.mxu0 %v1111
    %1128 = vmatprep.subr.bf16.mxu0 0
    %1129 = vmatpush1.bf16.msra.mxu0 %v1110
    %1130 = vmatprep.subr.bf16.mxu0 0
    %1131 = vmatpush1.bf16.msra.mxu0 %v1109
    %1132 = vmatprep.subr.bf16.mxu0 0
    %1133 = vmatpush1.bf16.msra.mxu0 %v1108
    %1134 = vmatprep.subr.bf16.mxu0 0
    %1135 = vmatpush1.bf16.msra.mxu0 %v1107
    %1136 = vmatprep.subr.bf16.mxu0 0
    %1137 = vmatpush1.bf16.msra.mxu0 %v1106
    %1138 = vmatprep.subr.bf16.mxu0 0
    %1139 = vmatpush2.bf16.msra.mxu0 0
    %1140 = vmatprep.subr.bf16.mxu0 0
    %1141 = vmatpush2.bf16.msra.mxu0 0
    %1142 = vmatprep.subr.bf16.mxu0 0
    %1143 = vmatpush2.bf16.msra.mxu0 0
    %1144 = vmatprep.subr.bf16.mxu0 0
    %1145 = vmatpush2.bf16.msra.mxu0 0
    %1146 = vmatprep.subr.bf16.mxu0 0
    %1147 = vmatpush2.bf16.msra.mxu0 0
    %1148 = vmatprep.subr.bf16.mxu0 0
    %1149 = vmatpush2.bf16.msra.mxu0 0
    %1150 = vmatprep.subr.bf16.mxu0 0
    %1151 = vmatpush2.bf16.msra.mxu0 0
    %1152 = vmatprep.subr.bf16.mxu0 0
    %1153 = vmatpush2.bf16.msra.mxu0 0
    %1154 = vmatprep.mubr.bf16.mxu0 0
    %1155 = vmatmul.mubr.bf16.gmra.mxu0 %v926
    %v1156 = vpop.f32.mrf.mxu0
    %v1157 = vadd.f32 %v1061, %v1156
    %v1158 = vpop.f32.mrf.mxu0
    %v1159 = vpop.f32.mrf.mxu0
    %v1160 = vadd.f32 %v1064, %v1159
    %v1161 = vpop.f32.mrf.mxu0
    %1162 = vmatprep.mubr.bf16.mxu0 0
    %1163 = vmatmul.mubr.bf16.gmra.mxu0 %v927
    %v1164 = vpop.f32.mrf.mxu0
    %v1165 = vadd.f32 %v1069, %v1164
    %v1166 = vpop.f32.mrf.mxu0
    %v1167 = vpop.f32.mrf.mxu0
    %v1168 = vpop.f32.mrf.mxu0
    %1169 = vdwg.mxu0
    %s1170 = scalar_lea.vmem [#allocation8], 128
    %v1171 = vld [vmem:[%s1170] sm:$0xf]
    %v1172 = vld [vmem:[%s1170 + $0x4] sm:$0xf]
    %v1173 = vld [vmem:[%s1170 + $0x8] sm:$0xf]
    %v1174 = vld [vmem:[%s1170 + $0xc] sm:$0xf]
    %v1175 = vld [vmem:[%s1170 + $0x10] sm:$0xf]
    %v1176 = vld [vmem:[%s1170 + $0x14] sm:$0xf]
    %v1177 = vld [vmem:[%s1170 + $0x18] sm:$0xf]
    %v1178 = vld [vmem:[%s1170 + $0x1c] sm:$0xf]
    %v1179 = vld [vmem:[%s1170 + $0x20] sm:$0xf]
    %v1180 = vld [vmem:[%s1170 + $0x24] sm:$0xf]
    %v1181 = vld [vmem:[%s1170 + $0x28] sm:$0xf]
    %v1182 = vld [vmem:[%s1170 + $0x2c] sm:$0xf]
    %v1183 = vld [vmem:[%s1170 + $0x30] sm:$0xf]
    %v1184 = vld [vmem:[%s1170 + $0x34] sm:$0xf]
    %v1185 = vld [vmem:[%s1170 + $0x38] sm:$0xf]
    %v1186 = vld [vmem:[%s1170 + $0x3c] sm:$0xf]
    %v1189 = vrot.slane %v926, 1
    %v1190 = vrot.slane %v927, 1
    %v1191 = vsel %vm351, %v1189, %v1190
    %v1210 = vunpack.c.l.b16 %v1171
    %v1211 = vunpack.c.l.b16 %v1172
    %v1212 = vunpack.c.l.b16 %v1173
    %v1213 = vunpack.c.l.b16 %v1174
    %v1214 = vunpack.c.l.b16 %v1175
    %v1215 = vunpack.c.l.b16 %v1176
    %v1216 = vunpack.c.l.b16 %v1177
    %v1217 = vunpack.c.l.b16 %v1178
    %v1218 = vunpack.c.l.b16 %v1179
    %v1219 = vunpack.c.l.b16 %v1180
    %v1220 = vunpack.c.l.b16 %v1181
    %v1221 = vunpack.c.l.b16 %v1182
    %v1222 = vunpack.c.l.b16 %v1183
    %v1223 = vunpack.c.l.b16 %v1184
    %v1224 = vunpack.c.l.b16 %v1185
    %v1225 = vunpack.c.l.b16 %v1186
    %v1226 = vpack.c.b16 %v1211, %v1210
    %v1227 = vpack.c.b16 %v1213, %v1212
    %v1228 = vpack.c.b16 %v1215, %v1214
    %v1229 = vpack.c.b16 %v1217, %v1216
    %v1230 = vpack.c.b16 %v1219, %v1218
    %v1231 = vpack.c.b16 %v1221, %v1220
    %v1232 = vpack.c.b16 %v1223, %v1222
    %v1233 = vpack.c.b16 %v1225, %v1224
    %1242 = vmatprep.subr.bf16.mxu0 0
    %1243 = vmatpush1.bf16.msra.mxu0 %v1233
    %1244 = vmatprep.subr.bf16.mxu0 0
    %1245 = vmatpush1.bf16.msra.mxu0 %v1232
    %1246 = vmatprep.subr.bf16.mxu0 0
    %1247 = vmatpush1.bf16.msra.mxu0 %v1231
    %1248 = vmatprep.subr.bf16.mxu0 0
    %1249 = vmatpush1.bf16.msra.mxu0 %v1230
    %1250 = vmatprep.subr.bf16.mxu0 0
    %1251 = vmatpush1.bf16.msra.mxu0 %v1229
    %1252 = vmatprep.subr.bf16.mxu0 0
    %1253 = vmatpush1.bf16.msra.mxu0 %v1228
    %1254 = vmatprep.subr.bf16.mxu0 0
    %1255 = vmatpush1.bf16.msra.mxu0 %v1227
    %1256 = vmatprep.subr.bf16.mxu0 0
    %1257 = vmatpush1.bf16.msra.mxu0 %v1226
    %1258 = vmatprep.subr.bf16.mxu0 0
    %1259 = vmatpush2.bf16.msra.mxu0 0
    %1260 = vmatprep.subr.bf16.mxu0 0
    %1261 = vmatpush2.bf16.msra.mxu0 0
    %1262 = vmatprep.subr.bf16.mxu0 0
    %1263 = vmatpush2.bf16.msra.mxu0 0
    %1264 = vmatprep.subr.bf16.mxu0 0
    %1265 = vmatpush2.bf16.msra.mxu0 0
    %1266 = vmatprep.subr.bf16.mxu0 0
    %1267 = vmatpush2.bf16.msra.mxu0 0
    %1268 = vmatprep.subr.bf16.mxu0 0
    %1269 = vmatpush2.bf16.msra.mxu0 0
    %1270 = vmatprep.subr.bf16.mxu0 0
    %1271 = vmatpush2.bf16.msra.mxu0 0
    %1272 = vmatprep.subr.bf16.mxu0 0
    %1273 = vmatpush2.bf16.msra.mxu0 0
    %1274 = vmatprep.mubr.bf16.mxu0 0
    %1275 = vmatmul.mubr.bf16.gmra.mxu0 %v1191
    %v1276 = vpop.f32.mrf.mxu0
    %v1277 = vadd.f32 0.0, %v1276
    %v1278 = vpop.f32.mrf.mxu0
    %v1279 = vpop.f32.mrf.mxu0
    %v1280 = vadd.f32 0.0, %v1279
    %v1281 = vpop.f32.mrf.mxu0
    %1282 = vmatprep.mubr.bf16.mxu0 0
    %1283 = vmatmul.mubr.bf16.gmra.mxu0 %v1190
    %v1284 = vpop.f32.mrf.mxu0
    %v1285 = vadd.f32 0.0, %v1284
    %v1286 = vpop.f32.mrf.mxu0
    %v1287 = vpop.f32.mrf.mxu0
    %v1288 = vpop.f32.mrf.mxu0
    %1289 = vdwg.mxu0
    %v1290 = vadd.f32 %v1157, %v1277
    %v1291 = vadd.f32 %v1160, %v1280
    %v1292 = vadd.f32 %v1165, %v1285
    %s1293 = scalar_lea.vmem [#allocation8], 192
    %v1294 = vld [vmem:[%s1293] sm:$0xf]
    %v1295 = vld [vmem:[%s1293 + $0x4] sm:$0xf]
    %v1296 = vld [vmem:[%s1293 + $0x8] sm:$0xf]
    %v1297 = vld [vmem:[%s1293 + $0xc] sm:$0xf]
    %v1298 = vld [vmem:[%s1293 + $0x10] sm:$0xf]
    %v1299 = vld [vmem:[%s1293 + $0x14] sm:$0xf]
    %v1300 = vld [vmem:[%s1293 + $0x18] sm:$0xf]
    %v1301 = vld [vmem:[%s1293 + $0x1c] sm:$0xf]
    %v1302 = vld [vmem:[%s1293 + $0x20] sm:$0xf]
    %v1303 = vld [vmem:[%s1293 + $0x24] sm:$0xf]
    %v1304 = vld [vmem:[%s1293 + $0x28] sm:$0xf]
    %v1305 = vld [vmem:[%s1293 + $0x2c] sm:$0xf]
    %v1306 = vld [vmem:[%s1293 + $0x30] sm:$0xf]
    %v1307 = vld [vmem:[%s1293 + $0x34] sm:$0xf]
    %v1308 = vld [vmem:[%s1293 + $0x38] sm:$0xf]
    %v1309 = vld [vmem:[%s1293 + $0x3c] sm:$0xf]
    %v1310 = vrot.slane %v962, 1
    %v1311 = vrot.slane %v964, 2
    %v1312 = vor.u32 %v1310, %v1311
    %v1313 = vrot.slane %v973, 1
    %v1314 = vrot.slane %v969, 2
    %v1315 = vor.u32 %v1313, %v1314
    %v1316 = vsel %vm450, %v1312, %v1315
    %v1335 = vunpack.c.l.b16 %v1294
    %v1336 = vunpack.c.l.b16 %v1295
    %v1337 = vunpack.c.l.b16 %v1296
    %v1338 = vunpack.c.l.b16 %v1297
    %v1339 = vunpack.c.l.b16 %v1298
    %v1340 = vunpack.c.l.b16 %v1299
    %v1341 = vunpack.c.l.b16 %v1300
    %v1342 = vunpack.c.l.b16 %v1301
    %v1343 = vunpack.c.l.b16 %v1302
    %v1344 = vunpack.c.l.b16 %v1303
    %v1345 = vunpack.c.l.b16 %v1304
    %v1346 = vunpack.c.l.b16 %v1305
    %v1347 = vunpack.c.l.b16 %v1306
    %v1348 = vunpack.c.l.b16 %v1307
    %v1349 = vunpack.c.l.b16 %v1308
    %v1350 = vunpack.c.l.b16 %v1309
    %v1351 = vpack.c.b16 %v1336, %v1335
    %v1352 = vpack.c.b16 %v1338, %v1337
    %v1353 = vpack.c.b16 %v1340, %v1339
    %v1354 = vpack.c.b16 %v1342, %v1341
    %v1355 = vpack.c.b16 %v1344, %v1343
    %v1356 = vpack.c.b16 %v1346, %v1345
    %v1357 = vpack.c.b16 %v1348, %v1347
    %v1358 = vpack.c.b16 %v1350, %v1349
    %1367 = vmatprep.subr.bf16.mxu0 0
    %1368 = vmatpush1.bf16.msra.mxu0 %v1358
    %1369 = vmatprep.subr.bf16.mxu0 0
    %1370 = vmatpush1.bf16.msra.mxu0 %v1357
    %1371 = vmatprep.subr.bf16.mxu0 0
    %1372 = vmatpush1.bf16.msra.mxu0 %v1356
    %1373 = vmatprep.subr.bf16.mxu0 0
    %1374 = vmatpush1.bf16.msra.mxu0 %v1355
    %1375 = vmatprep.subr.bf16.mxu0 0
    %1376 = vmatpush1.bf16.msra.mxu0 %v1354
    %1377 = vmatprep.subr.bf16.mxu0 0
    %1378 = vmatpush1.bf16.msra.mxu0 %v1353
    %1379 = vmatprep.subr.bf16.mxu0 0
    %1380 = vmatpush1.bf16.msra.mxu0 %v1352
    %1381 = vmatprep.subr.bf16.mxu0 0
    %1382 = vmatpush1.bf16.msra.mxu0 %v1351
    %1383 = vmatprep.subr.bf16.mxu0 0
    %1384 = vmatpush2.bf16.msra.mxu0 0
    %1385 = vmatprep.subr.bf16.mxu0 0
    %1386 = vmatpush2.bf16.msra.mxu0 0
    %1387 = vmatprep.subr.bf16.mxu0 0
    %1388 = vmatpush2.bf16.msra.mxu0 0
    %1389 = vmatprep.subr.bf16.mxu0 0
    %1390 = vmatpush2.bf16.msra.mxu0 0
    %1391 = vmatprep.subr.bf16.mxu0 0
    %1392 = vmatpush2.bf16.msra.mxu0 0
    %1393 = vmatprep.subr.bf16.mxu0 0
    %1394 = vmatpush2.bf16.msra.mxu0 0
    %1395 = vmatprep.subr.bf16.mxu0 0
    %1396 = vmatpush2.bf16.msra.mxu0 0
    %1397 = vmatprep.subr.bf16.mxu0 0
    %1398 = vmatpush2.bf16.msra.mxu0 0
    %1399 = vmatprep.mubr.bf16.mxu0 0
    %1400 = vmatmul.mubr.bf16.gmra.mxu0 %v1316
    %v1401 = vpop.f32.mrf.mxu0
    %v1402 = vadd.f32 0.0, %v1401
    %v1403 = vpop.f32.mrf.mxu0
    %v1404 = vpop.f32.mrf.mxu0
    %v1405 = vadd.f32 0.0, %v1404
    %v1406 = vpop.f32.mrf.mxu0
    %1407 = vmatprep.mubr.bf16.mxu0 0
    %1408 = vmatmul.mubr.bf16.gmra.mxu0 %v1315
    %v1409 = vpop.f32.mrf.mxu0
    %v1410 = vadd.f32 0.0, %v1409
    %v1411 = vpop.f32.mrf.mxu0
    %v1412 = vpop.f32.mrf.mxu0
    %v1413 = vpop.f32.mrf.mxu0
    %1414 = vdwg.mxu0
    %v1415 = vadd.f32 %v1290, %v1402
    %v1416 = vadd.f32 %v1291, %v1405
    %v1417 = vadd.f32 %v1292, %v1410
    %s1418 = scalar_lea.vmem [#allocation8], 256
    %v1419 = vld [vmem:[%s1418] sm:$0xf]
    %v1420 = vld [vmem:[%s1418 + $0x4] sm:$0xf]
    %v1421 = vld [vmem:[%s1418 + $0x8] sm:$0xf]
    %v1422 = vld [vmem:[%s1418 + $0xc] sm:$0xf]
    %v1423 = vld [vmem:[%s1418 + $0x10] sm:$0xf]
    %v1424 = vld [vmem:[%s1418 + $0x14] sm:$0xf]
    %v1425 = vld [vmem:[%s1418 + $0x18] sm:$0xf]
    %v1426 = vld [vmem:[%s1418 + $0x1c] sm:$0xf]
    %v1427 = vld [vmem:[%s1418 + $0x20] sm:$0xf]
    %v1428 = vld [vmem:[%s1418 + $0x24] sm:$0xf]
    %v1429 = vld [vmem:[%s1418 + $0x28] sm:$0xf]
    %v1430 = vld [vmem:[%s1418 + $0x2c] sm:$0xf]
    %v1431 = vld [vmem:[%s1418 + $0x30] sm:$0xf]
    %v1432 = vld [vmem:[%s1418 + $0x34] sm:$0xf]
    %v1433 = vld [vmem:[%s1418 + $0x38] sm:$0xf]
    %v1434 = vld [vmem:[%s1418 + $0x3c] sm:$0xf]
    %v1435 = vrot.slane %v926, 2
    %v1436 = vrot.slane %v927, 2
    %v1437 = vsel %vm555, %v1435, %v1436
    %v1456 = vunpack.c.l.b16 %v1419
    %v1457 = vunpack.c.l.b16 %v1420
    %v1458 = vunpack.c.l.b16 %v1421
    %v1459 = vunpack.c.l.b16 %v1422
    %v1460 = vunpack.c.l.b16 %v1423
    %v1461 = vunpack.c.l.b16 %v1424
    %v1462 = vunpack.c.l.b16 %v1425
    %v1463 = vunpack.c.l.b16 %v1426
    %v1464 = vunpack.c.l.b16 %v1427
    %v1465 = vunpack.c.l.b16 %v1428
    %v1466 = vunpack.c.l.b16 %v1429
    %v1467 = vunpack.c.l.b16 %v1430
    %v1468 = vunpack.c.l.b16 %v1431
    %v1469 = vunpack.c.l.b16 %v1432
    %v1470 = vunpack.c.l.b16 %v1433
    %v1471 = vunpack.c.l.b16 %v1434
    %v1472 = vpack.c.b16 %v1457, %v1456
    %v1473 = vpack.c.b16 %v1459, %v1458
    %v1474 = vpack.c.b16 %v1461, %v1460
    %v1475 = vpack.c.b16 %v1463, %v1462
    %v1476 = vpack.c.b16 %v1465, %v1464
    %v1477 = vpack.c.b16 %v1467, %v1466
    %v1478 = vpack.c.b16 %v1469, %v1468
    %v1479 = vpack.c.b16 %v1471, %v1470
    %1488 = vmatprep.subr.bf16.mxu0 0
    %1489 = vmatpush1.bf16.msra.mxu0 %v1479
    %1490 = vmatprep.subr.bf16.mxu0 0
    %1491 = vmatpush1.bf16.msra.mxu0 %v1478
    %1492 = vmatprep.subr.bf16.mxu0 0
    %1493 = vmatpush1.bf16.msra.mxu0 %v1477
    %1494 = vmatprep.subr.bf16.mxu0 0
    %1495 = vmatpush1.bf16.msra.mxu0 %v1476
    %1496 = vmatprep.subr.bf16.mxu0 0
    %1497 = vmatpush1.bf16.msra.mxu0 %v1475
    %1498 = vmatprep.subr.bf16.mxu0 0
    %1499 = vmatpush1.bf16.msra.mxu0 %v1474
    %1500 = vmatprep.subr.bf16.mxu0 0
    %1501 = vmatpush1.bf16.msra.mxu0 %v1473
    %1502 = vmatprep.subr.bf16.mxu0 0
    %1503 = vmatpush1.bf16.msra.mxu0 %v1472
    %1504 = vmatprep.subr.bf16.mxu0 0
    %1505 = vmatpush2.bf16.msra.mxu0 0
    %1506 = vmatprep.subr.bf16.mxu0 0
    %1507 = vmatpush2.bf16.msra.mxu0 0
    %1508 = vmatprep.subr.bf16.mxu0 0
    %1509 = vmatpush2.bf16.msra.mxu0 0
    %1510 = vmatprep.subr.bf16.mxu0 0
    %1511 = vmatpush2.bf16.msra.mxu0 0
    %1512 = vmatprep.subr.bf16.mxu0 0
    %1513 = vmatpush2.bf16.msra.mxu0 0
    %1514 = vmatprep.subr.bf16.mxu0 0
    %1515 = vmatpush2.bf16.msra.mxu0 0
    %1516 = vmatprep.subr.bf16.mxu0 0
    %1517 = vmatpush2.bf16.msra.mxu0 0
    %1518 = vmatprep.subr.bf16.mxu0 0
    %1519 = vmatpush2.bf16.msra.mxu0 0
    %1520 = vmatprep.mubr.bf16.mxu0 0
    %1521 = vmatmul.mubr.bf16.gmra.mxu0 %v1437
    %v1522 = vpop.f32.mrf.mxu0
    %v1523 = vadd.f32 0.0, %v1522
    %v1524 = vpop.f32.mrf.mxu0
    %v1525 = vpop.f32.mrf.mxu0
    %v1526 = vadd.f32 0.0, %v1525
    %v1527 = vpop.f32.mrf.mxu0
    %1528 = vmatprep.mubr.bf16.mxu0 0
    %1529 = vmatmul.mubr.bf16.gmra.mxu0 %v1436
    %v1530 = vpop.f32.mrf.mxu0
    %v1531 = vadd.f32 0.0, %v1530
    %v1532 = vpop.f32.mrf.mxu0
    %v1533 = vpop.f32.mrf.mxu0
    %v1534 = vpop.f32.mrf.mxu0
    %1535 = vdwg.mxu0
    %v1536 = vadd.f32 %v1415, %v1523
    %v1537 = vadd.f32 %v1416, %v1526
    %v1538 = vadd.f32 %v1417, %v1531
    %v1539 = vld [vmem:[%s9 + $0x1] ss:$0 sm:$0xff]
    %v1540 = vadd.f32 %v1536, %v1539
    %v1541 = vadd.f32 %v1537, %v1539
    %v1542 = vadd.f32 %v1538, %v1539
    %v1543 = vmax.f32 %v1540, 0.0
    %v1544 = vmax.f32 %v1541, 0.0
    %v1545 = vmax.f32 %v1542, 0.0
    %v1546 = vld [vmem:[#allocation16 + $0x18] sm:$0xf]
    %v1547 = vpack.c.bf16 %v1544, %v1543
    %v1548 = vpack.c.bf16 %v1545, %v1545
    %vm1549 = vcmask 162816
    %v1551 = vsel %vm1549, %v1546, 0
    %v1554 = vsel %vm700, %v1548, 0
    %1556 = vmatprep.subr.bf16.mxu0 0
    %1557 = vmatpush1.bf16.msra.mxu0 0
    %1558 = vmatprep.subr.bf16.mxu0 0
    %1559 = vmatpush1.bf16.msra.mxu0 0
    %1560 = vmatprep.subr.bf16.mxu0 0
    %1561 = vmatpush1.bf16.msra.mxu0 0
    %1562 = vmatprep.subr.bf16.mxu0 0
    %1563 = vmatpush1.bf16.msra.mxu0 0
    %1564 = vmatprep.subr.bf16.mxu0 0
    %1565 = vmatpush1.bf16.msra.mxu0 0
    %1566 = vmatprep.subr.bf16.mxu0 0
    %1567 = vmatpush1.bf16.msra.mxu0 0
    %1568 = vmatprep.subr.bf16.mxu0 0
    %1569 = vmatpush1.bf16.msra.mxu0 %v1554
    %1570 = vmatprep.subr.bf16.mxu0 0
    %1571 = vmatpush1.bf16.msra.mxu0 %v1547
    %1572 = vmatprep.subr.bf16.mxu0 0
    %1573 = vmatpush2.bf16.msra.mxu0 0
    %1574 = vmatprep.subr.bf16.mxu0 0
    %1575 = vmatpush2.bf16.msra.mxu0 0
    %1576 = vmatprep.subr.bf16.mxu0 0
    %1577 = vmatpush2.bf16.msra.mxu0 0
    %1578 = vmatprep.subr.bf16.mxu0 0
    %1579 = vmatpush2.bf16.msra.mxu0 0
    %1580 = vmatprep.subr.bf16.mxu0 0
    %1581 = vmatpush2.bf16.msra.mxu0 0
    %1582 = vmatprep.subr.bf16.mxu0 0
    %1583 = vmatpush2.bf16.msra.mxu0 0
    %1584 = vmatprep.subr.bf16.mxu0 0
    %1585 = vmatpush2.bf16.msra.mxu0 0
    %1586 = vmatprep.subr.bf16.mxu0 0
    %1587 = vmatpush2.bf16.msra.mxu0 0
    %1588 = vmatprep.mubr.bf16.mxu0 0
    %1589 = vmatmul.mubr.bf16.gmra.mxu0 %v1551
    %v1590 = vpop.f32.mrf.mxu0
    %v1591 = vadd.f32 0.0, %v1590
    %v1592 = vpop.f32.mrf.mxu0
    %v1593 = vpop.f32.mrf.mxu0
    %v1594 = vpop.f32.mrf.mxu0
    %1595 = vdwg.mxu0
    %v1596 = vld [vmem:[#allocation13] sm:$0xf]
    %v1597 = vld [vmem:[#allocation13 + $0x4] sm:$0xf]
    %v1598 = vld [vmem:[#allocation13 + $0x8] sm:$0xf]
    %v1599 = vld [vmem:[#allocation13 + $0xc] sm:$0xf]
    %v1600 = vld [vmem:[#allocation13 + $0x10] sm:$0xf]
    %v1601 = vld [vmem:[#allocation13 + $0x14] sm:$0xf]
    %v1602 = vld [vmem:[#allocation13 + $0x18] sm:$0xf]
    %v1603 = vld [vmem:[#allocation13 + $0x1c] sm:$0xf]
    %v1604 = vld [vmem:[#allocation13 + $0x20] sm:$0xf]
    %v1605 = vld [vmem:[#allocation13 + $0x24] sm:$0xf]
    %v1606 = vld [vmem:[#allocation13 + $0x28] sm:$0xf]
    %v1607 = vld [vmem:[#allocation13 + $0x2c] sm:$0xf]
    %v1608 = vld [vmem:[#allocation13 + $0x30] sm:$0xf]
    %v1609 = vld [vmem:[#allocation13 + $0x34] sm:$0xf]
    %v1610 = vld [vmem:[#allocation13 + $0x38] sm:$0xf]
    %v1611 = vld [vmem:[#allocation13 + $0x3c] sm:$0xf]
    %v1612 = vpack.c.bf16 %v1591, %v1591
    %v1629 = vunpack.c.l.b16 %v1596
    %v1630 = vunpack.c.l.b16 %v1597
    %v1631 = vunpack.c.l.b16 %v1598
    %v1632 = vunpack.c.l.b16 %v1599
    %v1633 = vunpack.c.l.b16 %v1600
    %v1634 = vunpack.c.l.b16 %v1601
    %v1635 = vunpack.c.l.b16 %v1602
    %v1636 = vunpack.c.l.b16 %v1603
    %v1637 = vunpack.c.l.b16 %v1604
    %v1638 = vunpack.c.l.b16 %v1605
    %v1639 = vunpack.c.l.b16 %v1606
    %v1640 = vunpack.c.l.b16 %v1607
    %v1641 = vunpack.c.l.b16 %v1608
    %v1642 = vunpack.c.l.b16 %v1609
    %v1643 = vunpack.c.l.b16 %v1610
    %v1644 = vunpack.c.l.b16 %v1611
    %v1645 = vpack.c.b16 %v1630, %v1629
    %v1646 = vpack.c.b16 %v1632, %v1631
    %v1647 = vpack.c.b16 %v1634, %v1633
    %v1648 = vpack.c.b16 %v1636, %v1635
    %v1649 = vpack.c.b16 %v1638, %v1637
    %v1650 = vpack.c.b16 %v1640, %v1639
    %v1651 = vpack.c.b16 %v1642, %v1641
    %v1652 = vpack.c.b16 %v1644, %v1643
    %1661 = vmatprep.subr.bf16.mxu0 0
    %1662 = vmatpush1.bf16.msra.mxu0 %v1652
    %1663 = vmatprep.subr.bf16.mxu0 0
    %1664 = vmatpush1.bf16.msra.mxu0 %v1651
    %1665 = vmatprep.subr.bf16.mxu0 0
    %1666 = vmatpush1.bf16.msra.mxu0 %v1650
    %1667 = vmatprep.subr.bf16.mxu0 0
    %1668 = vmatpush1.bf16.msra.mxu0 %v1649
    %1669 = vmatprep.subr.bf16.mxu0 0
    %1670 = vmatpush1.bf16.msra.mxu0 %v1648
    %1671 = vmatprep.subr.bf16.mxu0 0
    %1672 = vmatpush1.bf16.msra.mxu0 %v1647
    %1673 = vmatprep.subr.bf16.mxu0 0
    %1674 = vmatpush1.bf16.msra.mxu0 %v1646
    %1675 = vmatprep.subr.bf16.mxu0 0
    %1676 = vmatpush1.bf16.msra.mxu0 %v1645
    %1677 = vmatprep.subr.bf16.mxu0 0
    %1678 = vmatpush2.bf16.msra.mxu0 0
    %1679 = vmatprep.subr.bf16.mxu0 0
    %1680 = vmatpush2.bf16.msra.mxu0 0
    %1681 = vmatprep.subr.bf16.mxu0 0
    %1682 = vmatpush2.bf16.msra.mxu0 0
    %1683 = vmatprep.subr.bf16.mxu0 0
    %1684 = vmatpush2.bf16.msra.mxu0 0
    %1685 = vmatprep.subr.bf16.mxu0 0
    %1686 = vmatpush2.bf16.msra.mxu0 0
    %1687 = vmatprep.subr.bf16.mxu0 0
    %1688 = vmatpush2.bf16.msra.mxu0 0
    %1689 = vmatprep.subr.bf16.mxu0 0
    %1690 = vmatpush2.bf16.msra.mxu0 0
    %1691 = vmatprep.subr.bf16.mxu0 0
    %1692 = vmatpush2.bf16.msra.mxu0 0
    %1693 = vmatprep.mubr.bf16.mxu0 0
    %1694 = vmatmul.mubr.bf16.gmra.mxu0 %v1612
    %v1695 = vpop.f32.mrf.mxu0
    %v1696 = vadd.f32 0.0, %v1695
    %v1697 = vpop.f32.mrf.mxu0
    %v1698 = vpop.f32.mrf.mxu0
    %v1699 = vpop.f32.mrf.mxu0
    %1700 = vdwg.mxu0
    %vm1701 = vcmask 519168
    %1702 = vst.msk [vmem:[#allocation3 + $0x2] sm:$0xf] %vm1701, %v1696
    %vm1703 = vcmask 523268
    %1704 = vst.msk [vmem:[#allocation3 + $0x6] sm:$0xf0] %vm1703, %v1696
    %v1705 = vld [vmem:[#allocation3] sm:$0xff]
    %v1706 = vld [vmem:[#allocation3 + $0x8] sm:$0xff]
    %v1707 = vpack.c.bf16 %v1706, %v1705
    %v1708 = vld [vmem:[%s3] sm:$0xf]
    %v1709 = vld [vmem:[%s3 + $0x4] sm:$0xf]
    %v1710 = vld [vmem:[%s3 + $0x8] sm:$0xf]
    %v1711 = vld [vmem:[%s3 + $0xc] sm:$0xf]
    %v1712 = vld [vmem:[%s3 + $0x10] sm:$0xf]
    %v1713 = vld [vmem:[%s3 + $0x14] sm:$0xf]
    %v1714 = vld [vmem:[%s3 + $0x18] sm:$0xf]
    %v1715 = vld [vmem:[%s3 + $0x1c] sm:$0xf]
    %s1716 = scalar_lea.vmem %s3, 32
    %v1717 = vld [vmem:[%s1716] sm:$0xf]
    %v1718 = vld [vmem:[%s1716 + $0x4] sm:$0xf]
    %v1719 = vld [vmem:[%s1716 + $0x8] sm:$0xf]
    %v1720 = vld [vmem:[%s1716 + $0xc] sm:$0xf]
    %v1721 = vld [vmem:[%s1716 + $0x10] sm:$0xf]
    %v1722 = vld [vmem:[%s1716 + $0x14] sm:$0xf]
    %v1723 = vld [vmem:[%s1716 + $0x18] sm:$0xf]
    %v1724 = vld [vmem:[%s1716 + $0x1c] sm:$0xf]
    %v1726 = vshrl.u32 %v1707, 16
    %v1728 = vshll.u32 %v1707, 16
    %v1730 = vrot.slane %v1728, 1
    %v1731 = vor.u32 %v1726, %v1730
    %v1740 = vunpack.c.l.b16 %v1717
    %v1741 = vunpack.c.l.b16 %v1718
    %v1742 = vunpack.c.l.b16 %v1719
    %v1743 = vunpack.c.l.b16 %v1720
    %v1744 = vunpack.c.l.b16 %v1721
    %v1745 = vunpack.c.l.b16 %v1722
    %v1746 = vunpack.c.l.b16 %v1723
    %v1747 = vunpack.c.l.b16 %v1724
    %v1748 = vpack.c.b16 %v1741, %v1740
    %v1749 = vpack.c.b16 %v1743, %v1742
    %v1750 = vpack.c.b16 %v1745, %v1744
    %v1751 = vpack.c.b16 %v1747, %v1746
    %vm1756 = vcmask 523264
    %v1758 = vsel %vm1756, %v1731, 0
    %1760 = vmatprep.subr.bf16.mxu0 0
    %1761 = vmatpush1.bf16.msra.mxu0 0
    %1762 = vmatprep.subr.bf16.mxu0 0
    %1763 = vmatpush1.bf16.msra.mxu0 0
    %1764 = vmatprep.subr.bf16.mxu0 0
    %1765 = vmatpush1.bf16.msra.mxu0 0
    %1766 = vmatprep.subr.bf16.mxu0 0
    %1767 = vmatpush1.bf16.msra.mxu0 0
    %1768 = vmatprep.subr.bf16.mxu0 0
    %1769 = vmatpush1.bf16.msra.mxu0 %v1751
    %1770 = vmatprep.subr.bf16.mxu0 0
    %1771 = vmatpush1.bf16.msra.mxu0 %v1750
    %1772 = vmatprep.subr.bf16.mxu0 0
    %1773 = vmatpush1.bf16.msra.mxu0 %v1749
    %1774 = vmatprep.subr.bf16.mxu0 0
    %1775 = vmatpush1.bf16.msra.mxu0 %v1748
    %1776 = vmatprep.subr.bf16.mxu0 0
    %1777 = vmatpush2.bf16.msra.mxu0 0
    %1778 = vmatprep.subr.bf16.mxu0 0
    %1779 = vmatpush2.bf16.msra.mxu0 0
    %1780 = vmatprep.subr.bf16.mxu0 0
    %1781 = vmatpush2.bf16.msra.mxu0 0
    %1782 = vmatprep.subr.bf16.mxu0 0
    %1783 = vmatpush2.bf16.msra.mxu0 0
    %1784 = vmatprep.subr.bf16.mxu0 0
    %1785 = vmatpush2.bf16.msra.mxu0 0
    %1786 = vmatprep.subr.bf16.mxu0 0
    %1787 = vmatpush2.bf16.msra.mxu0 0
    %1788 = vmatprep.subr.bf16.mxu0 0
    %1789 = vmatpush2.bf16.msra.mxu0 0
    %1790 = vmatprep.subr.bf16.mxu0 0
    %1791 = vmatpush2.bf16.msra.mxu0 0
    %1792 = vmatprep.mubr.bf16.mxu0 0
    %1793 = vmatmul.mubr.bf16.gmra.mxu0 %v1758
    %v1794 = vpop.f32.mrf.mxu0
    %v1795 = vadd.f32 0.0, %v1794
    %v1796 = vpop.f32.mrf.mxu0
    %v1797 = vpop.f32.mrf.mxu0
    %v1798 = vadd.f32 0.0, %v1797
    %v1799 = vpop.f32.mrf.mxu0
    %1800 = vdwg.mxu0
    %v1809 = vunpack.c.l.b16 %v1708
    %v1810 = vunpack.c.l.b16 %v1709
    %v1811 = vunpack.c.l.b16 %v1710
    %v1812 = vunpack.c.l.b16 %v1711
    %v1813 = vunpack.c.l.b16 %v1712
    %v1814 = vunpack.c.l.b16 %v1713
    %v1815 = vunpack.c.l.b16 %v1714
    %v1816 = vunpack.c.l.b16 %v1715
    %v1817 = vpack.c.b16 %v1810, %v1809
    %v1818 = vpack.c.b16 %v1812, %v1811
    %v1819 = vpack.c.b16 %v1814, %v1813
    %v1820 = vpack.c.b16 %v1816, %v1815
    %v1825 = vsel %vm1756, %v1707, 0
    %1827 = vmatprep.subr.bf16.mxu0 0
    %1828 = vmatpush1.bf16.msra.mxu0 0
    %1829 = vmatprep.subr.bf16.mxu0 0
    %1830 = vmatpush1.bf16.msra.mxu0 0
    %1831 = vmatprep.subr.bf16.mxu0 0
    %1832 = vmatpush1.bf16.msra.mxu0 0
    %1833 = vmatprep.subr.bf16.mxu0 0
    %1834 = vmatpush1.bf16.msra.mxu0 0
    %1835 = vmatprep.subr.bf16.mxu0 0
    %1836 = vmatpush1.bf16.msra.mxu0 %v1820
    %1837 = vmatprep.subr.bf16.mxu0 0
    %1838 = vmatpush1.bf16.msra.mxu0 %v1819
    %1839 = vmatprep.subr.bf16.mxu0 0
    %1840 = vmatpush1.bf16.msra.mxu0 %v1818
    %1841 = vmatprep.subr.bf16.mxu0 0
    %1842 = vmatpush1.bf16.msra.mxu0 %v1817
    %1843 = vmatprep.subr.bf16.mxu0 0
    %1844 = vmatpush2.bf16.msra.mxu0 0
    %1845 = vmatprep.subr.bf16.mxu0 0
    %1846 = vmatpush2.bf16.msra.mxu0 0
    %1847 = vmatprep.subr.bf16.mxu0 0
    %1848 = vmatpush2.bf16.msra.mxu0 0
    %1849 = vmatprep.subr.bf16.mxu0 0
    %1850 = vmatpush2.bf16.msra.mxu0 0
    %1851 = vmatprep.subr.bf16.mxu0 0
    %1852 = vmatpush2.bf16.msra.mxu0 0
    %1853 = vmatprep.subr.bf16.mxu0 0
    %1854 = vmatpush2.bf16.msra.mxu0 0
    %1855 = vmatprep.subr.bf16.mxu0 0
    %1856 = vmatpush2.bf16.msra.mxu0 0
    %1857 = vmatprep.subr.bf16.mxu0 0
    %1858 = vmatpush2.bf16.msra.mxu0 0
    %1859 = vmatprep.mubr.bf16.mxu0 0
    %1860 = vmatmul.mubr.bf16.gmra.mxu0 %v1825
    %v1861 = vpop.f32.mrf.mxu0
    %v1862 = vadd.f32 %v1795, %v1861
    %v1863 = vpop.f32.mrf.mxu0
    %v1864 = vpop.f32.mrf.mxu0
    %v1865 = vadd.f32 %v1798, %v1864
    %v1866 = vpop.f32.mrf.mxu0
    %1867 = vdwg.mxu0
    %s1868 = scalar_lea.vmem %s3, 64
    %v1869 = vld [vmem:[%s1868] sm:$0xf]
    %v1870 = vld [vmem:[%s1868 + $0x4] sm:$0xf]
    %v1871 = vld [vmem:[%s1868 + $0x8] sm:$0xf]
    %v1872 = vld [vmem:[%s1868 + $0xc] sm:$0xf]
    %v1873 = vld [vmem:[%s1868 + $0x10] sm:$0xf]
    %v1874 = vld [vmem:[%s1868 + $0x14] sm:$0xf]
    %v1875 = vld [vmem:[%s1868 + $0x18] sm:$0xf]
    %v1876 = vld [vmem:[%s1868 + $0x1c] sm:$0xf]
    %v1878 = vrot.slane %v1707, 1
    %v1887 = vunpack.c.l.b16 %v1869
    %v1888 = vunpack.c.l.b16 %v1870
    %v1889 = vunpack.c.l.b16 %v1871
    %v1890 = vunpack.c.l.b16 %v1872
    %v1891 = vunpack.c.l.b16 %v1873
    %v1892 = vunpack.c.l.b16 %v1874
    %v1893 = vunpack.c.l.b16 %v1875
    %v1894 = vunpack.c.l.b16 %v1876
    %v1895 = vpack.c.b16 %v1888, %v1887
    %v1896 = vpack.c.b16 %v1890, %v1889
    %v1897 = vpack.c.b16 %v1892, %v1891
    %v1898 = vpack.c.b16 %v1894, %v1893
    %v1904 = vsel %vm1756, %v1878, 0
    %1906 = vmatprep.subr.bf16.mxu0 0
    %1907 = vmatpush1.bf16.msra.mxu0 0
    %1908 = vmatprep.subr.bf16.mxu0 0
    %1909 = vmatpush1.bf16.msra.mxu0 0
    %1910 = vmatprep.subr.bf16.mxu0 0
    %1911 = vmatpush1.bf16.msra.mxu0 0
    %1912 = vmatprep.subr.bf16.mxu0 0
    %1913 = vmatpush1.bf16.msra.mxu0 0
    %1914 = vmatprep.subr.bf16.mxu0 0
    %1915 = vmatpush1.bf16.msra.mxu0 %v1898
    %1916 = vmatprep.subr.bf16.mxu0 0
    %1917 = vmatpush1.bf16.msra.mxu0 %v1897
    %1918 = vmatprep.subr.bf16.mxu0 0
    %1919 = vmatpush1.bf16.msra.mxu0 %v1896
    %1920 = vmatprep.subr.bf16.mxu0 0
    %1921 = vmatpush1.bf16.msra.mxu0 %v1895
    %1922 = vmatprep.subr.bf16.mxu0 0
    %1923 = vmatpush2.bf16.msra.mxu0 0
    %1924 = vmatprep.subr.bf16.mxu0 0
    %1925 = vmatpush2.bf16.msra.mxu0 0
    %1926 = vmatprep.subr.bf16.mxu0 0
    %1927 = vmatpush2.bf16.msra.mxu0 0
    %1928 = vmatprep.subr.bf16.mxu0 0
    %1929 = vmatpush2.bf16.msra.mxu0 0
    %1930 = vmatprep.subr.bf16.mxu0 0
    %1931 = vmatpush2.bf16.msra.mxu0 0
    %1932 = vmatprep.subr.bf16.mxu0 0
    %1933 = vmatpush2.bf16.msra.mxu0 0
    %1934 = vmatprep.subr.bf16.mxu0 0
    %1935 = vmatpush2.bf16.msra.mxu0 0
    %1936 = vmatprep.subr.bf16.mxu0 0
    %1937 = vmatpush2.bf16.msra.mxu0 0
    %1938 = vmatprep.mubr.bf16.mxu0 0
    %1939 = vmatmul.mubr.bf16.gmra.mxu0 %v1904
    %v1940 = vpop.f32.mrf.mxu0
    %v1941 = vadd.f32 0.0, %v1940
    %v1942 = vpop.f32.mrf.mxu0
    %v1943 = vpop.f32.mrf.mxu0
    %v1944 = vadd.f32 0.0, %v1943
    %v1945 = vpop.f32.mrf.mxu0
    %1946 = vdwg.mxu0
    %v1947 = vadd.f32 %v1862, %v1941
    %v1948 = vadd.f32 %v1865, %v1944
    %s1949 = scalar_lea.vmem %s3, 96
    %v1950 = vld [vmem:[%s1949] sm:$0xf]
    %v1951 = vld [vmem:[%s1949 + $0x4] sm:$0xf]
    %v1952 = vld [vmem:[%s1949 + $0x8] sm:$0xf]
    %v1953 = vld [vmem:[%s1949 + $0xc] sm:$0xf]
    %v1954 = vld [vmem:[%s1949 + $0x10] sm:$0xf]
    %v1955 = vld [vmem:[%s1949 + $0x14] sm:$0xf]
    %v1956 = vld [vmem:[%s1949 + $0x18] sm:$0xf]
    %v1957 = vld [vmem:[%s1949 + $0x1c] sm:$0xf]
    %v1958 = vrot.slane %v1726, 1
    %v1959 = vrot.slane %v1728, 2
    %v1960 = vor.u32 %v1958, %v1959
    %v1969 = vunpack.c.l.b16 %v1950
    %v1970 = vunpack.c.l.b16 %v1951
    %v1971 = vunpack.c.l.b16 %v1952
    %v1972 = vunpack.c.l.b16 %v1953
    %v1973 = vunpack.c.l.b16 %v1954
    %v1974 = vunpack.c.l.b16 %v1955
    %v1975 = vunpack.c.l.b16 %v1956
    %v1976 = vunpack.c.l.b16 %v1957
    %v1977 = vpack.c.b16 %v1970, %v1969
    %v1978 = vpack.c.b16 %v1972, %v1971
    %v1979 = vpack.c.b16 %v1974, %v1973
    %v1980 = vpack.c.b16 %v1976, %v1975
    %v1986 = vsel %vm1756, %v1960, 0
    %1988 = vmatprep.subr.bf16.mxu0 0
    %1989 = vmatpush1.bf16.msra.mxu0 0
    %1990 = vmatprep.subr.bf16.mxu0 0
    %1991 = vmatpush1.bf16.msra.mxu0 0
    %1992 = vmatprep.subr.bf16.mxu0 0
    %1993 = vmatpush1.bf16.msra.mxu0 0
    %1994 = vmatprep.subr.bf16.mxu0 0
    %1995 = vmatpush1.bf16.msra.mxu0 0
    %1996 = vmatprep.subr.bf16.mxu0 0
    %1997 = vmatpush1.bf16.msra.mxu0 %v1980
    %1998 = vmatprep.subr.bf16.mxu0 0
    %1999 = vmatpush1.bf16.msra.mxu0 %v1979
    %2000 = vmatprep.subr.bf16.mxu0 0
    %2001 = vmatpush1.bf16.msra.mxu0 %v1978
    %2002 = vmatprep.subr.bf16.mxu0 0
    %2003 = vmatpush1.bf16.msra.mxu0 %v1977
    %2004 = vmatprep.subr.bf16.mxu0 0
    %2005 = vmatpush2.bf16.msra.mxu0 0
    %2006 = vmatprep.subr.bf16.mxu0 0
    %2007 = vmatpush2.bf16.msra.mxu0 0
    %2008 = vmatprep.subr.bf16.mxu0 0
    %2009 = vmatpush2.bf16.msra.mxu0 0
    %2010 = vmatprep.subr.bf16.mxu0 0
    %2011 = vmatpush2.bf16.msra.mxu0 0
    %2012 = vmatprep.subr.bf16.mxu0 0
    %2013 = vmatpush2.bf16.msra.mxu0 0
    %2014 = vmatprep.subr.bf16.mxu0 0
    %2015 = vmatpush2.bf16.msra.mxu0 0
    %2016 = vmatprep.subr.bf16.mxu0 0
    %2017 = vmatpush2.bf16.msra.mxu0 0
    %2018 = vmatprep.subr.bf16.mxu0 0
    %2019 = vmatpush2.bf16.msra.mxu0 0
    %2020 = vmatprep.mubr.bf16.mxu0 0
    %2021 = vmatmul.mubr.bf16.gmra.mxu0 %v1986
    %v2022 = vpop.f32.mrf.mxu0
    %v2023 = vadd.f32 0.0, %v2022
    %v2024 = vpop.f32.mrf.mxu0
    %v2025 = vpop.f32.mrf.mxu0
    %v2026 = vadd.f32 0.0, %v2025
    %v2027 = vpop.f32.mrf.mxu0
    %2028 = vdwg.mxu0
    %v2029 = vadd.f32 %v1947, %v2023
    %v2030 = vadd.f32 %v1948, %v2026
    %s2031 = scalar_lea.vmem %s3, 128
    %v2032 = vld [vmem:[%s2031] sm:$0xf]
    %v2033 = vld [vmem:[%s2031 + $0x4] sm:$0xf]
    %v2034 = vld [vmem:[%s2031 + $0x8] sm:$0xf]
    %v2035 = vld [vmem:[%s2031 + $0xc] sm:$0xf]
    %v2036 = vld [vmem:[%s2031 + $0x10] sm:$0xf]
    %v2037 = vld [vmem:[%s2031 + $0x14] sm:$0xf]
    %v2038 = vld [vmem:[%s2031 + $0x18] sm:$0xf]
    %v2039 = vld [vmem:[%s2031 + $0x1c] sm:$0xf]
    %v2040 = vrot.slane %v1707, 2
    %v2049 = vunpack.c.l.b16 %v2032
    %v2050 = vunpack.c.l.b16 %v2033
    %v2051 = vunpack.c.l.b16 %v2034
    %v2052 = vunpack.c.l.b16 %v2035
    %v2053 = vunpack.c.l.b16 %v2036
    %v2054 = vunpack.c.l.b16 %v2037
    %v2055 = vunpack.c.l.b16 %v2038
    %v2056 = vunpack.c.l.b16 %v2039
    %v2057 = vpack.c.b16 %v2050, %v2049
    %v2058 = vpack.c.b16 %v2052, %v2051
    %v2059 = vpack.c.b16 %v2054, %v2053
    %v2060 = vpack.c.b16 %v2056, %v2055
    %v2066 = vsel %vm1756, %v2040, 0
    %2068 = vmatprep.subr.bf16.mxu0 0
    %2069 = vmatpush1.bf16.msra.mxu0 0
    %2070 = vmatprep.subr.bf16.mxu0 0
    %2071 = vmatpush1.bf16.msra.mxu0 0
    %2072 = vmatprep.subr.bf16.mxu0 0
    %2073 = vmatpush1.bf16.msra.mxu0 0
    %2074 = vmatprep.subr.bf16.mxu0 0
    %2075 = vmatpush1.bf16.msra.mxu0 0
    %2076 = vmatprep.subr.bf16.mxu0 0
    %2077 = vmatpush1.bf16.msra.mxu0 %v2060
    %2078 = vmatprep.subr.bf16.mxu0 0
    %2079 = vmatpush1.bf16.msra.mxu0 %v2059
    %2080 = vmatprep.subr.bf16.mxu0 0
    %2081 = vmatpush1.bf16.msra.mxu0 %v2058
    %2082 = vmatprep.subr.bf16.mxu0 0
    %2083 = vmatpush1.bf16.msra.mxu0 %v2057
    %2084 = vmatprep.subr.bf16.mxu0 0
    %2085 = vmatpush2.bf16.msra.mxu0 0
    %2086 = vmatprep.subr.bf16.mxu0 0
    %2087 = vmatpush2.bf16.msra.mxu0 0
    %2088 = vmatprep.subr.bf16.mxu0 0
    %2089 = vmatpush2.bf16.msra.mxu0 0
    %2090 = vmatprep.subr.bf16.mxu0 0
    %2091 = vmatpush2.bf16.msra.mxu0 0
    %2092 = vmatprep.subr.bf16.mxu0 0
    %2093 = vmatpush2.bf16.msra.mxu0 0
    %2094 = vmatprep.subr.bf16.mxu0 0
    %2095 = vmatpush2.bf16.msra.mxu0 0
    %2096 = vmatprep.subr.bf16.mxu0 0
    %2097 = vmatpush2.bf16.msra.mxu0 0
    %2098 = vmatprep.subr.bf16.mxu0 0
    %2099 = vmatpush2.bf16.msra.mxu0 0
    %2100 = vmatprep.mubr.bf16.mxu0 0
    %2101 = vmatmul.mubr.bf16.gmra.mxu0 %v2066
    %v2102 = vpop.f32.mrf.mxu0
    %v2103 = vadd.f32 0.0, %v2102
    %v2104 = vpop.f32.mrf.mxu0
    %v2105 = vpop.f32.mrf.mxu0
    %v2106 = vadd.f32 0.0, %v2105
    %v2107 = vpop.f32.mrf.mxu0
    %2108 = vdwg.mxu0
    %v2109 = vadd.f32 %v2029, %v2103
    %v2110 = vadd.f32 %v2030, %v2106
    %v2111 = vld [vmem:[%s9 + $0x2] ss:$0 sm:$0xff]
    %v2112 = vadd.f32 %v2109, %v2111
    %v2113 = vadd.f32 %v2110, %v2111
    %v2114 = vmax.f32 %v2112, 0.0
    %v2115 = vmax.f32 %v2113, 0.0
    %v2116 = vld [vmem:[#allocation16 + $0x20] sm:$0x3]
    %v2117 = vpack.c.bf16 %v2115, %v2114
    %vm2118 = vcmask 97280
    %v2120 = vsel %vm2118, %v2116, 0
    %vm2122 = vcmask 1045504
    %v2124 = vsel %vm2122, %v2117, 0
    %2126 = vmatprep.subr.bf16.mxu0 0
    %2127 = vmatpush1.bf16.msra.mxu0 0
    %2128 = vmatprep.subr.bf16.mxu0 0
    %2129 = vmatpush1.bf16.msra.mxu0 0
    %2130 = vmatprep.subr.bf16.mxu0 0
    %2131 = vmatpush1.bf16.msra.mxu0 0
    %2132 = vmatprep.subr.bf16.mxu0 0
    %2133 = vmatpush1.bf16.msra.mxu0 0
    %2134 = vmatprep.subr.bf16.mxu0 0
    %2135 = vmatpush1.bf16.msra.mxu0 0
    %2136 = vmatprep.subr.bf16.mxu0 0
    %2137 = vmatpush1.bf16.msra.mxu0 0
    %2138 = vmatprep.subr.bf16.mxu0 0
    %2139 = vmatpush1.bf16.msra.mxu0 0
    %2140 = vmatprep.subr.bf16.mxu0 0
    %2141 = vmatpush1.bf16.msra.mxu0 %v2124
    %2142 = vmatprep.subr.bf16.mxu0 0
    %2143 = vmatpush2.bf16.msra.mxu0 0
    %2144 = vmatprep.subr.bf16.mxu0 0
    %2145 = vmatpush2.bf16.msra.mxu0 0
    %2146 = vmatprep.subr.bf16.mxu0 0
    %2147 = vmatpush2.bf16.msra.mxu0 0
    %2148 = vmatprep.subr.bf16.mxu0 0
    %2149 = vmatpush2.bf16.msra.mxu0 0
    %2150 = vmatprep.subr.bf16.mxu0 0
    %2151 = vmatpush2.bf16.msra.mxu0 0
    %2152 = vmatprep.subr.bf16.mxu0 0
    %2153 = vmatpush2.bf16.msra.mxu0 0
    %2154 = vmatprep.subr.bf16.mxu0 0
    %2155 = vmatpush2.bf16.msra.mxu0 0
    %2156 = vmatprep.subr.bf16.mxu0 0
    %2157 = vmatpush2.bf16.msra.mxu0 0
    %2158 = vmatprep.mubr.bf16.mxu0 0
    %2159 = vmatmul.mubr.bf16.gmra.mxu0 %v2120
    %v2160 = vpop.f32.mrf.mxu0
    %v2161 = vadd.f32 0.0, %v2160
    %v2162 = vpop.f32.mrf.mxu0
    %v2163 = vpop.f32.mrf.mxu0
    %v2164 = vpop.f32.mrf.mxu0
    %2165 = vdwg.mxu0
    %v2166 = vld [vmem:[#allocation16 + $0x28] sm:$0xf]
    %v2167 = vld [vmem:[#allocation16 + $0x2c] sm:$0xf]
    %v2168 = vld [vmem:[#allocation16 + $0x30] sm:$0xf]
    %v2169 = vld [vmem:[#allocation16 + $0x34] sm:$0xf]
    %v2170 = vld [vmem:[#allocation16 + $0x38] sm:$0xf]
    %v2171 = vld [vmem:[#allocation16 + $0x3c] sm:$0xf]
    %v2172 = vld [vmem:[#allocation16 + $0x40] sm:$0xf]
    %v2173 = vld [vmem:[#allocation16 + $0x44] sm:$0xf]
    %v2174 = vpack.c.bf16 %v2161, %v2161
    %v2183 = vunpack.c.l.b16 %v2166
    %v2184 = vunpack.c.l.b16 %v2167
    %v2185 = vunpack.c.l.b16 %v2168
    %v2186 = vunpack.c.l.b16 %v2169
    %v2187 = vunpack.c.l.b16 %v2170
    %v2188 = vunpack.c.l.b16 %v2171
    %v2189 = vunpack.c.l.b16 %v2172
    %v2190 = vunpack.c.l.b16 %v2173
    %v2191 = vpack.c.b16 %v2184, %v2183
    %v2192 = vpack.c.b16 %v2186, %v2185
    %v2193 = vpack.c.b16 %v2188, %v2187
    %v2194 = vpack.c.b16 %v2190, %v2189
    %v2200 = vsel %vm1756, %v2174, 0
    %2202 = vmatprep.subr.bf16.mxu0 0
    %2203 = vmatpush1.bf16.msra.mxu0 0
    %2204 = vmatprep.subr.bf16.mxu0 0
    %2205 = vmatpush1.bf16.msra.mxu0 0
    %2206 = vmatprep.subr.bf16.mxu0 0
    %2207 = vmatpush1.bf16.msra.mxu0 0
    %2208 = vmatprep.subr.bf16.mxu0 0
    %2209 = vmatpush1.bf16.msra.mxu0 0
    %2210 = vmatprep.subr.bf16.mxu0 0
    %2211 = vmatpush1.bf16.msra.mxu0 %v2194
    %2212 = vmatprep.subr.bf16.mxu0 0
    %2213 = vmatpush1.bf16.msra.mxu0 %v2193
    %2214 = vmatprep.subr.bf16.mxu0 0
    %2215 = vmatpush1.bf16.msra.mxu0 %v2192
    %2216 = vmatprep.subr.bf16.mxu0 0
    %2217 = vmatpush1.bf16.msra.mxu0 %v2191
    %2218 = vmatprep.subr.bf16.mxu0 0
    %2219 = vmatpush2.bf16.msra.mxu0 0
    %2220 = vmatprep.subr.bf16.mxu0 0
    %2221 = vmatpush2.bf16.msra.mxu0 0
    %2222 = vmatprep.subr.bf16.mxu0 0
    %2223 = vmatpush2.bf16.msra.mxu0 0
    %2224 = vmatprep.subr.bf16.mxu0 0
    %2225 = vmatpush2.bf16.msra.mxu0 0
    %2226 = vmatprep.subr.bf16.mxu0 0
    %2227 = vmatpush2.bf16.msra.mxu0 0
    %2228 = vmatprep.subr.bf16.mxu0 0
    %2229 = vmatpush2.bf16.msra.mxu0 0
    %2230 = vmatprep.subr.bf16.mxu0 0
    %2231 = vmatpush2.bf16.msra.mxu0 0
    %2232 = vmatprep.subr.bf16.mxu0 0
    %2233 = vmatpush2.bf16.msra.mxu0 0
    %2234 = vmatprep.mubr.bf16.mxu0 0
    %2235 = vmatmul.mubr.bf16.gmra.mxu0 %v2200
    %v2236 = vpop.f32.mrf.mxu0
    %v2237 = vadd.f32 0.0, %v2236
    %v2238 = vpop.f32.mrf.mxu0
    %v2239 = vpop.f32.mrf.mxu0
    %v2240 = vpop.f32.mrf.mxu0
    %2241 = vdwg.mxu0
    %2242 = vst.msk [vmem:[#allocation4 + $0x2] sm:$0x3] %vm140, %v2237
    %vm2243 = vcmask 257026
    %2244 = vst.msk [vmem:[#allocation4 + $0x6] sm:$0xc] %vm2243, %v2237
    %v2245 = vld [vmem:[#allocation4] sm:$0xff]
    %v2246 = vld [vmem:[#allocation4 + $0x8] sm:$0xf]
    %v2247 = vpack.c.bf16 %v2246, %v2245
    %v2248 = vld [vmem:[#allocation10] sm:$0xf]
    %v2249 = vld [vmem:[#allocation10 + $0x4] sm:$0xf]
    %v2250 = vld [vmem:[#allocation10 + $0x8] sm:$0xf]
    %v2251 = vld [vmem:[#allocation10 + $0xc] sm:$0xf]
    %s2252 = scalar_lea.vmem [#allocation10], 16
    %v2253 = vld [vmem:[%s2252] sm:$0xf]
    %v2254 = vld [vmem:[%s2252 + $0x4] sm:$0xf]
    %v2255 = vld [vmem:[%s2252 + $0x8] sm:$0xf]
    %v2256 = vld [vmem:[%s2252 + $0xc] sm:$0xf]
    %v2258 = vshrl.u32 %v2247, 16
    %v2260 = vshll.u32 %v2247, 16
    %v2262 = vrot.slane %v2260, 1
    %v2263 = vor.u32 %v2258, %v2262
    %v2268 = vunpack.c.l.b16 %v2253
    %v2269 = vunpack.c.l.b16 %v2254
    %v2270 = vunpack.c.l.b16 %v2255
    %v2271 = vunpack.c.l.b16 %v2256
    %v2272 = vpack.c.b16 %v2269, %v2268
    %v2273 = vpack.c.b16 %v2271, %v2270
    %vm2276 = vcmask 261120
    %v2278 = vsel %vm2276, %v2263, 0
    %2280 = vmatprep.subr.bf16.mxu0 0
    %2281 = vmatpush1.bf16.msra.mxu0 0
    %2282 = vmatprep.subr.bf16.mxu0 0
    %2283 = vmatpush1.bf16.msra.mxu0 0
    %2284 = vmatprep.subr.bf16.mxu0 0
    %2285 = vmatpush1.bf16.msra.mxu0 0
    %2286 = vmatprep.subr.bf16.mxu0 0
    %2287 = vmatpush1.bf16.msra.mxu0 0
    %2288 = vmatprep.subr.bf16.mxu0 0
    %2289 = vmatpush1.bf16.msra.mxu0 0
    %2290 = vmatprep.subr.bf16.mxu0 0
    %2291 = vmatpush1.bf16.msra.mxu0 0
    %2292 = vmatprep.subr.bf16.mxu0 0
    %2293 = vmatpush1.bf16.msra.mxu0 %v2273
    %2294 = vmatprep.subr.bf16.mxu0 0
    %2295 = vmatpush1.bf16.msra.mxu0 %v2272
    %2296 = vmatprep.subr.bf16.mxu0 0
    %2297 = vmatpush2.bf16.msra.mxu0 0
    %2298 = vmatprep.subr.bf16.mxu0 0
    %2299 = vmatpush2.bf16.msra.mxu0 0
    %2300 = vmatprep.subr.bf16.mxu0 0
    %2301 = vmatpush2.bf16.msra.mxu0 0
    %2302 = vmatprep.subr.bf16.mxu0 0
    %2303 = vmatpush2.bf16.msra.mxu0 0
    %2304 = vmatprep.subr.bf16.mxu0 0
    %2305 = vmatpush2.bf16.msra.mxu0 0
    %2306 = vmatprep.subr.bf16.mxu0 0
    %2307 = vmatpush2.bf16.msra.mxu0 0
    %2308 = vmatprep.subr.bf16.mxu0 0
    %2309 = vmatpush2.bf16.msra.mxu0 0
    %2310 = vmatprep.subr.bf16.mxu0 0
    %2311 = vmatpush2.bf16.msra.mxu0 0
    %2312 = vmatprep.mubr.bf16.mxu0 0
    %2313 = vmatmul.mubr.bf16.gmra.mxu0 %v2278
    %v2314 = vpop.f32.mrf.mxu0
    %v2315 = vadd.f32 0.0, %v2314
    %v2316 = vpop.f32.mrf.mxu0
    %v2317 = vpop.f32.mrf.mxu0
    %v2318 = vpop.f32.mrf.mxu0
    %2319 = vdwg.mxu0
    %v2324 = vunpack.c.l.b16 %v2248
    %v2325 = vunpack.c.l.b16 %v2249
    %v2326 = vunpack.c.l.b16 %v2250
    %v2327 = vunpack.c.l.b16 %v2251
    %v2328 = vpack.c.b16 %v2325, %v2324
    %v2329 = vpack.c.b16 %v2327, %v2326
    %v2332 = vsel %vm2276, %v2247, 0
    %2334 = vmatprep.subr.bf16.mxu0 0
    %2335 = vmatpush1.bf16.msra.mxu0 0
    %2336 = vmatprep.subr.bf16.mxu0 0
    %2337 = vmatpush1.bf16.msra.mxu0 0
    %2338 = vmatprep.subr.bf16.mxu0 0
    %2339 = vmatpush1.bf16.msra.mxu0 0
    %2340 = vmatprep.subr.bf16.mxu0 0
    %2341 = vmatpush1.bf16.msra.mxu0 0
    %2342 = vmatprep.subr.bf16.mxu0 0
    %2343 = vmatpush1.bf16.msra.mxu0 0
    %2344 = vmatprep.subr.bf16.mxu0 0
    %2345 = vmatpush1.bf16.msra.mxu0 0
    %2346 = vmatprep.subr.bf16.mxu0 0
    %2347 = vmatpush1.bf16.msra.mxu0 %v2329
    %2348 = vmatprep.subr.bf16.mxu0 0
    %2349 = vmatpush1.bf16.msra.mxu0 %v2328
    %2350 = vmatprep.subr.bf16.mxu0 0
    %2351 = vmatpush2.bf16.msra.mxu0 0
    %2352 = vmatprep.subr.bf16.mxu0 0
    %2353 = vmatpush2.bf16.msra.mxu0 0
    %2354 = vmatprep.subr.bf16.mxu0 0
    %2355 = vmatpush2.bf16.msra.mxu0 0
    %2356 = vmatprep.subr.bf16.mxu0 0
    %2357 = vmatpush2.bf16.msra.mxu0 0
    %2358 = vmatprep.subr.bf16.mxu0 0
    %2359 = vmatpush2.bf16.msra.mxu0 0
    %2360 = vmatprep.subr.bf16.mxu0 0
    %2361 = vmatpush2.bf16.msra.mxu0 0
    %2362 = vmatprep.subr.bf16.mxu0 0
    %2363 = vmatpush2.bf16.msra.mxu0 0
    %2364 = vmatprep.subr.bf16.mxu0 0
    %2365 = vmatpush2.bf16.msra.mxu0 0
    %2366 = vmatprep.mubr.bf16.mxu0 0
    %2367 = vmatmul.mubr.bf16.gmra.mxu0 %v2332
    %v2368 = vpop.f32.mrf.mxu0
    %v2369 = vadd.f32 %v2315, %v2368
    %v2370 = vpop.f32.mrf.mxu0
    %v2371 = vpop.f32.mrf.mxu0
    %v2372 = vpop.f32.mrf.mxu0
    %2373 = vdwg.mxu0
    %s2374 = scalar_lea.vmem [#allocation10], 32
    %v2375 = vld [vmem:[%s2374] sm:$0xf]
    %v2376 = vld [vmem:[%s2374 + $0x4] sm:$0xf]
    %v2377 = vld [vmem:[%s2374 + $0x8] sm:$0xf]
    %v2378 = vld [vmem:[%s2374 + $0xc] sm:$0xf]
    %v2380 = vrot.slane %v2247, 1
    %v2385 = vunpack.c.l.b16 %v2375
    %v2386 = vunpack.c.l.b16 %v2376
    %v2387 = vunpack.c.l.b16 %v2377
    %v2388 = vunpack.c.l.b16 %v2378
    %v2389 = vpack.c.b16 %v2386, %v2385
    %v2390 = vpack.c.b16 %v2388, %v2387
    %v2394 = vsel %vm2276, %v2380, 0
    %2396 = vmatprep.subr.bf16.mxu0 0
    %2397 = vmatpush1.bf16.msra.mxu0 0
    %2398 = vmatprep.subr.bf16.mxu0 0
    %2399 = vmatpush1.bf16.msra.mxu0 0
    %2400 = vmatprep.subr.bf16.mxu0 0
    %2401 = vmatpush1.bf16.msra.mxu0 0
    %2402 = vmatprep.subr.bf16.mxu0 0
    %2403 = vmatpush1.bf16.msra.mxu0 0
    %2404 = vmatprep.subr.bf16.mxu0 0
    %2405 = vmatpush1.bf16.msra.mxu0 0
    %2406 = vmatprep.subr.bf16.mxu0 0
    %2407 = vmatpush1.bf16.msra.mxu0 0
    %2408 = vmatprep.subr.bf16.mxu0 0
    %2409 = vmatpush1.bf16.msra.mxu0 %v2390
    %2410 = vmatprep.subr.bf16.mxu0 0
    %2411 = vmatpush1.bf16.msra.mxu0 %v2389
    %2412 = vmatprep.subr.bf16.mxu0 0
    %2413 = vmatpush2.bf16.msra.mxu0 0
    %2414 = vmatprep.subr.bf16.mxu0 0
    %2415 = vmatpush2.bf16.msra.mxu0 0
    %2416 = vmatprep.subr.bf16.mxu0 0
    %2417 = vmatpush2.bf16.msra.mxu0 0
    %2418 = vmatprep.subr.bf16.mxu0 0
    %2419 = vmatpush2.bf16.msra.mxu0 0
    %2420 = vmatprep.subr.bf16.mxu0 0
    %2421 = vmatpush2.bf16.msra.mxu0 0
    %2422 = vmatprep.subr.bf16.mxu0 0
    %2423 = vmatpush2.bf16.msra.mxu0 0
    %2424 = vmatprep.subr.bf16.mxu0 0
    %2425 = vmatpush2.bf16.msra.mxu0 0
    %2426 = vmatprep.subr.bf16.mxu0 0
    %2427 = vmatpush2.bf16.msra.mxu0 0
    %2428 = vmatprep.mubr.bf16.mxu0 0
    %2429 = vmatmul.mubr.bf16.gmra.mxu0 %v2394
    %v2430 = vpop.f32.mrf.mxu0
    %v2431 = vadd.f32 0.0, %v2430
    %v2432 = vpop.f32.mrf.mxu0
    %v2433 = vpop.f32.mrf.mxu0
    %v2434 = vpop.f32.mrf.mxu0
    %2435 = vdwg.mxu0
    %v2436 = vadd.f32 %v2369, %v2431
    %s2437 = scalar_lea.vmem [#allocation10], 48
    %v2438 = vld [vmem:[%s2437] sm:$0xf]
    %v2439 = vld [vmem:[%s2437 + $0x4] sm:$0xf]
    %v2440 = vld [vmem:[%s2437 + $0x8] sm:$0xf]
    %v2441 = vld [vmem:[%s2437 + $0xc] sm:$0xf]
    %v2442 = vrot.slane %v2258, 1
    %v2443 = vrot.slane %v2260, 2
    %v2444 = vor.u32 %v2442, %v2443
    %v2449 = vunpack.c.l.b16 %v2438
    %v2450 = vunpack.c.l.b16 %v2439
    %v2451 = vunpack.c.l.b16 %v2440
    %v2452 = vunpack.c.l.b16 %v2441
    %v2453 = vpack.c.b16 %v2450, %v2449
    %v2454 = vpack.c.b16 %v2452, %v2451
    %v2458 = vsel %vm2276, %v2444, 0
    %2460 = vmatprep.subr.bf16.mxu0 0
    %2461 = vmatpush1.bf16.msra.mxu0 0
    %2462 = vmatprep.subr.bf16.mxu0 0
    %2463 = vmatpush1.bf16.msra.mxu0 0
    %2464 = vmatprep.subr.bf16.mxu0 0
    %2465 = vmatpush1.bf16.msra.mxu0 0
    %2466 = vmatprep.subr.bf16.mxu0 0
    %2467 = vmatpush1.bf16.msra.mxu0 0
    %2468 = vmatprep.subr.bf16.mxu0 0
    %2469 = vmatpush1.bf16.msra.mxu0 0
    %2470 = vmatprep.subr.bf16.mxu0 0
    %2471 = vmatpush1.bf16.msra.mxu0 0
    %2472 = vmatprep.subr.bf16.mxu0 0
    %2473 = vmatpush1.bf16.msra.mxu0 %v2454
    %2474 = vmatprep.subr.bf16.mxu0 0
    %2475 = vmatpush1.bf16.msra.mxu0 %v2453
    %2476 = vmatprep.subr.bf16.mxu0 0
    %2477 = vmatpush2.bf16.msra.mxu0 0
    %2478 = vmatprep.subr.bf16.mxu0 0
    %2479 = vmatpush2.bf16.msra.mxu0 0
    %2480 = vmatprep.subr.bf16.mxu0 0
    %2481 = vmatpush2.bf16.msra.mxu0 0
    %2482 = vmatprep.subr.bf16.mxu0 0
    %2483 = vmatpush2.bf16.msra.mxu0 0
    %2484 = vmatprep.subr.bf16.mxu0 0
    %2485 = vmatpush2.bf16.msra.mxu0 0
    %2486 = vmatprep.subr.bf16.mxu0 0
    %2487 = vmatpush2.bf16.msra.mxu0 0
    %2488 = vmatprep.subr.bf16.mxu0 0
    %2489 = vmatpush2.bf16.msra.mxu0 0
    %2490 = vmatprep.subr.bf16.mxu0 0
    %2491 = vmatpush2.bf16.msra.mxu0 0
    %2492 = vmatprep.mubr.bf16.mxu0 0
    %2493 = vmatmul.mubr.bf16.gmra.mxu0 %v2458
    %v2494 = vpop.f32.mrf.mxu0
    %v2495 = vadd.f32 0.0, %v2494
    %v2496 = vpop.f32.mrf.mxu0
    %v2497 = vpop.f32.mrf.mxu0
    %v2498 = vpop.f32.mrf.mxu0
    %2499 = vdwg.mxu0
    %v2500 = vadd.f32 %v2436, %v2495
    %s2501 = scalar_lea.vmem [#allocation10], 64
    %v2502 = vld [vmem:[%s2501] sm:$0xf]
    %v2503 = vld [vmem:[%s2501 + $0x4] sm:$0xf]
    %v2504 = vld [vmem:[%s2501 + $0x8] sm:$0xf]
    %v2505 = vld [vmem:[%s2501 + $0xc] sm:$0xf]
    %v2506 = vrot.slane %v2247, 2
    %v2511 = vunpack.c.l.b16 %v2502
    %v2512 = vunpack.c.l.b16 %v2503
    %v2513 = vunpack.c.l.b16 %v2504
    %v2514 = vunpack.c.l.b16 %v2505
    %v2515 = vpack.c.b16 %v2512, %v2511
    %v2516 = vpack.c.b16 %v2514, %v2513
    %v2520 = vsel %vm2276, %v2506, 0
    %2522 = vmatprep.subr.bf16.mxu0 0
    %2523 = vmatpush1.bf16.msra.mxu0 0
    %2524 = vmatprep.subr.bf16.mxu0 0
    %2525 = vmatpush1.bf16.msra.mxu0 0
    %2526 = vmatprep.subr.bf16.mxu0 0
    %2527 = vmatpush1.bf16.msra.mxu0 0
    %2528 = vmatprep.subr.bf16.mxu0 0
    %2529 = vmatpush1.bf16.msra.mxu0 0
    %2530 = vmatprep.subr.bf16.mxu0 0
    %2531 = vmatpush1.bf16.msra.mxu0 0
    %2532 = vmatprep.subr.bf16.mxu0 0
    %2533 = vmatpush1.bf16.msra.mxu0 0
    %2534 = vmatprep.subr.bf16.mxu0 0
    %2535 = vmatpush1.bf16.msra.mxu0 %v2516
    %2536 = vmatprep.subr.bf16.mxu0 0
    %2537 = vmatpush1.bf16.msra.mxu0 %v2515
    %2538 = vmatprep.subr.bf16.mxu0 0
    %2539 = vmatpush2.bf16.msra.mxu0 0
    %2540 = vmatprep.subr.bf16.mxu0 0
    %2541 = vmatpush2.bf16.msra.mxu0 0
    %2542 = vmatprep.subr.bf16.mxu0 0
    %2543 = vmatpush2.bf16.msra.mxu0 0
    %2544 = vmatprep.subr.bf16.mxu0 0
    %2545 = vmatpush2.bf16.msra.mxu0 0
    %2546 = vmatprep.subr.bf16.mxu0 0
    %2547 = vmatpush2.bf16.msra.mxu0 0
    %2548 = vmatprep.subr.bf16.mxu0 0
    %2549 = vmatpush2.bf16.msra.mxu0 0
    %2550 = vmatprep.subr.bf16.mxu0 0
    %2551 = vmatpush2.bf16.msra.mxu0 0
    %2552 = vmatprep.subr.bf16.mxu0 0
    %2553 = vmatpush2.bf16.msra.mxu0 0
    %2554 = vmatprep.mubr.bf16.mxu0 0
    %2555 = vmatmul.mubr.bf16.gmra.mxu0 %v2520
    %v2556 = vpop.f32.mrf.mxu0
    %v2557 = vadd.f32 0.0, %v2556
    %v2558 = vpop.f32.mrf.mxu0
    %v2559 = vpop.f32.mrf.mxu0
    %v2560 = vpop.f32.mrf.mxu0
    %2561 = vdwg.mxu0
    %v2562 = vadd.f32 %v2500, %v2557
    %v2563 = vld [vmem:[%s9 + $0x3] ss:$0 sm:$0xff]
    %v2564 = vadd.f32 %v2562, %v2563
    %v2565 = vmax.f32 %v2564, 0.0
    %v2566 = vld [vmem:[#allocation16 + $0x48] sm:$0x3]
    %v2567 = vpack.c.bf16 %v2565, %v2565
    %vm2568 = vcmask 64512
    %v2570 = vsel %vm2568, %v2566, 0
    %vm2572 = vcmask 1043456
    %v2574 = vsel %vm2572, %v2567, 0
    %2576 = vmatprep.subr.bf16.mxu0 0
    %2577 = vmatpush1.bf16.msra.mxu0 0
    %2578 = vmatprep.subr.bf16.mxu0 0
    %2579 = vmatpush1.bf16.msra.mxu0 0
    %2580 = vmatprep.subr.bf16.mxu0 0
    %2581 = vmatpush1.bf16.msra.mxu0 0
    %2582 = vmatprep.subr.bf16.mxu0 0
    %2583 = vmatpush1.bf16.msra.mxu0 0
    %2584 = vmatprep.subr.bf16.mxu0 0
    %2585 = vmatpush1.bf16.msra.mxu0 0
    %2586 = vmatprep.subr.bf16.mxu0 0
    %2587 = vmatpush1.bf16.msra.mxu0 0
    %2588 = vmatprep.subr.bf16.mxu0 0
    %2589 = vmatpush1.bf16.msra.mxu0 0
    %2590 = vmatprep.subr.bf16.mxu0 0
    %2591 = vmatpush1.bf16.msra.mxu0 %v2574
    %2592 = vmatprep.subr.bf16.mxu0 0
    %2593 = vmatpush2.bf16.msra.mxu0 0
    %2594 = vmatprep.subr.bf16.mxu0 0
    %2595 = vmatpush2.bf16.msra.mxu0 0
    %2596 = vmatprep.subr.bf16.mxu0 0
    %2597 = vmatpush2.bf16.msra.mxu0 0
    %2598 = vmatprep.subr.bf16.mxu0 0
    %2599 = vmatpush2.bf16.msra.mxu0 0
    %2600 = vmatprep.subr.bf16.mxu0 0
    %2601 = vmatpush2.bf16.msra.mxu0 0
    %2602 = vmatprep.subr.bf16.mxu0 0
    %2603 = vmatpush2.bf16.msra.mxu0 0
    %2604 = vmatprep.subr.bf16.mxu0 0
    %2605 = vmatpush2.bf16.msra.mxu0 0
    %2606 = vmatprep.subr.bf16.mxu0 0
    %2607 = vmatpush2.bf16.msra.mxu0 0
    %2608 = vmatprep.mubr.bf16.mxu0 0
    %2609 = vmatmul.mubr.bf16.gmra.mxu0 %v2570
    %v2610 = vpop.f32.mrf.mxu0
    %v2611 = vadd.f32 0.0, %v2610
    %v2612 = vpop.f32.mrf.mxu0
    %v2613 = vpop.f32.mrf.mxu0
    %v2614 = vpop.f32.mrf.mxu0
    %2615 = vdwg.mxu0
    %v2616 = vld [vmem:[#allocation16 + $0x58] sm:$0x1]
    %v2617 = vpack.c.bf16 %v2611, %v2611
    %vm2618 = vcmask 31744
    %v2620 = vsel %vm2618, %v2616, 0
    %v2623 = vsel %vm700, %v2617, 0
    %2625 = vmatprep.subr.bf16.mxu0 0
    %2626 = vmatpush1.bf16.msra.mxu0 0
    %2627 = vmatprep.subr.bf16.mxu0 0
    %2628 = vmatpush1.bf16.msra.mxu0 0
    %2629 = vmatprep.subr.bf16.mxu0 0
    %2630 = vmatpush1.bf16.msra.mxu0 0
    %2631 = vmatprep.subr.bf16.mxu0 0
    %2632 = vmatpush1.bf16.msra.mxu0 0
    %2633 = vmatprep.subr.bf16.mxu0 0
    %2634 = vmatpush1.bf16.msra.mxu0 0
    %2635 = vmatprep.subr.bf16.mxu0 0
    %2636 = vmatpush1.bf16.msra.mxu0 0
    %2637 = vmatprep.subr.bf16.mxu0 0
    %2638 = vmatpush1.bf16.msra.mxu0 0
    %2639 = vmatprep.subr.bf16.mxu0 0
    %2640 = vmatpush1.bf16.msra.mxu0 %v2623
    %2641 = vmatprep.subr.bf16.mxu0 0
    %2642 = vmatpush2.bf16.msra.mxu0 0
    %2643 = vmatprep.subr.bf16.mxu0 0
    %2644 = vmatpush2.bf16.msra.mxu0 0
    %2645 = vmatprep.subr.bf16.mxu0 0
    %2646 = vmatpush2.bf16.msra.mxu0 0
    %2647 = vmatprep.subr.bf16.mxu0 0
    %2648 = vmatpush2.bf16.msra.mxu0 0
    %2649 = vmatprep.subr.bf16.mxu0 0
    %2650 = vmatpush2.bf16.msra.mxu0 0
    %2651 = vmatprep.subr.bf16.mxu0 0
    %2652 = vmatpush2.bf16.msra.mxu0 0
    %2653 = vmatprep.subr.bf16.mxu0 0
    %2654 = vmatpush2.bf16.msra.mxu0 0
    %2655 = vmatprep.subr.bf16.mxu0 0
    %2656 = vmatpush2.bf16.msra.mxu0 0
    %2657 = vmatprep.mubr.bf16.mxu0 0
    %2658 = vmatmul.mubr.bf16.gmra.mxu0 %v2620
    %v2659 = vpop.f32.mrf.mxu0
    %v2660 = vadd.f32 0.0, %v2659
    %v2661 = vpop.f32.mrf.mxu0
    %v2662 = vpop.f32.mrf.mxu0
    %v2663 = vpop.f32.mrf.mxu0
    %2664 = vdwg.mxu0
    %v2665 = vld [vmem:[#allocation16 + $0x68] sm:$0xf]
    %v2666 = vld [vmem:[#allocation16 + $0x6c] sm:$0xf]
    %v2667 = vld [vmem:[#allocation16 + $0x70] sm:$0xf]
    %v2668 = vld [vmem:[#allocation16 + $0x74] sm:$0xf]
    %v2669 = vpack.c.bf16 %v2660, %v2660
    %v2674 = vunpack.c.l.b16 %v2665
    %v2675 = vunpack.c.l.b16 %v2666
    %v2676 = vunpack.c.l.b16 %v2667
    %v2677 = vunpack.c.l.b16 %v2668
    %v2678 = vpack.c.b16 %v2675, %v2674
    %v2679 = vpack.c.b16 %v2677, %v2676
    %v2683 = vsel %vm2276, %v2669, 0
    %2685 = vmatprep.subr.bf16.mxu0 0
    %2686 = vmatpush1.bf16.msra.mxu0 0
    %2687 = vmatprep.subr.bf16.mxu0 0
    %2688 = vmatpush1.bf16.msra.mxu0 0
    %2689 = vmatprep.subr.bf16.mxu0 0
    %2690 = vmatpush1.bf16.msra.mxu0 0
    %2691 = vmatprep.subr.bf16.mxu0 0
    %2692 = vmatpush1.bf16.msra.mxu0 0
    %2693 = vmatprep.subr.bf16.mxu0 0
    %2694 = vmatpush1.bf16.msra.mxu0 0
    %2695 = vmatprep.subr.bf16.mxu0 0
    %2696 = vmatpush1.bf16.msra.mxu0 0
    %2697 = vmatprep.subr.bf16.mxu0 0
    %2698 = vmatpush1.bf16.msra.mxu0 %v2679
    %2699 = vmatprep.subr.bf16.mxu0 0
    %2700 = vmatpush1.bf16.msra.mxu0 %v2678
    %2701 = vmatprep.subr.bf16.mxu0 0
    %2702 = vmatpush2.bf16.msra.mxu0 0
    %2703 = vmatprep.subr.bf16.mxu0 0
    %2704 = vmatpush2.bf16.msra.mxu0 0
    %2705 = vmatprep.subr.bf16.mxu0 0
    %2706 = vmatpush2.bf16.msra.mxu0 0
    %2707 = vmatprep.subr.bf16.mxu0 0
    %2708 = vmatpush2.bf16.msra.mxu0 0
    %2709 = vmatprep.subr.bf16.mxu0 0
    %2710 = vmatpush2.bf16.msra.mxu0 0
    %2711 = vmatprep.subr.bf16.mxu0 0
    %2712 = vmatpush2.bf16.msra.mxu0 0
    %2713 = vmatprep.subr.bf16.mxu0 0
    %2714 = vmatpush2.bf16.msra.mxu0 0
    %2715 = vmatprep.subr.bf16.mxu0 0
    %2716 = vmatpush2.bf16.msra.mxu0 0
    %2717 = vmatprep.mubr.bf16.mxu0 0
    %2718 = vmatmul.mubr.bf16.gmra.mxu0 %v2683
    %v2719 = vpop.f32.mrf.mxu0
    %v2720 = vadd.f32 0.0, %v2719
    %v2721 = vpop.f32.mrf.mxu0
    %v2722 = vpop.f32.mrf.mxu0
    %v2723 = vpop.f32.mrf.mxu0
    %2724 = vdwg.mxu0
    %2726 = vrot.lane.b32.xlu0 %v2611, 112
    %v2727 = vpop.permute.xlu0 %2726
    %v2729 = vmax.f32 %v2611, %v2727
    %v2731 = vrot.slane %v2729, 1
    %v2733 = vmax.f32 %v2729, %v2731
    %v2734 = vld [vmem:[#allocation16 + $0x60] sm:$0x1]
    %v2735 = vpack.c.bf16 %v2733, %v2733
    %vm2736 = vcmask 23552
    %v2738 = vsel %vm2736, %v2734, 0
    %vm2740 = vcmask 1040384
    %v2741 = vsel %vm2740, 4294967295, 65535
    %v2742 = vsel %vm700, %v2741, 0
    %v2744 = vand.u32 %v2735, %v2742
    %2746 = vmatprep.subr.bf16.mxu0 0
    %2747 = vmatpush1.bf16.msra.mxu0 0
    %2748 = vmatprep.subr.bf16.mxu0 0
    %2749 = vmatpush1.bf16.msra.mxu0 0
    %2750 = vmatprep.subr.bf16.mxu0 0
    %2751 = vmatpush1.bf16.msra.mxu0 0
    %2752 = vmatprep.subr.bf16.mxu0 0
    %2753 = vmatpush1.bf16.msra.mxu0 0
    %2754 = vmatprep.subr.bf16.mxu0 0
    %2755 = vmatpush1.bf16.msra.mxu0 0
    %2756 = vmatprep.subr.bf16.mxu0 0
    %2757 = vmatpush1.bf16.msra.mxu0 0
    %2758 = vmatprep.subr.bf16.mxu0 0
    %2759 = vmatpush1.bf16.msra.mxu0 0
    %2760 = vmatprep.subr.bf16.mxu0 0
    %2761 = vmatpush1.bf16.msra.mxu0 %v2744
    %2762 = vmatprep.subr.bf16.mxu0 0
    %2763 = vmatpush2.bf16.msra.mxu0 0
    %2764 = vmatprep.subr.bf16.mxu0 0
    %2765 = vmatpush2.bf16.msra.mxu0 0
    %2766 = vmatprep.subr.bf16.mxu0 0
    %2767 = vmatpush2.bf16.msra.mxu0 0
    %2768 = vmatprep.subr.bf16.mxu0 0
    %2769 = vmatpush2.bf16.msra.mxu0 0
    %2770 = vmatprep.subr.bf16.mxu0 0
    %2771 = vmatpush2.bf16.msra.mxu0 0
    %2772 = vmatprep.subr.bf16.mxu0 0
    %2773 = vmatpush2.bf16.msra.mxu0 0
    %2774 = vmatprep.subr.bf16.mxu0 0
    %2775 = vmatpush2.bf16.msra.mxu0 0
    %2776 = vmatprep.subr.bf16.mxu0 0
    %2777 = vmatpush2.bf16.msra.mxu0 0
    %2778 = vmatprep.mubr.bf16.mxu0 0
    %2779 = vmatmul.mubr.bf16.gmra.mxu0 %v2738
    %v2780 = vpop.f32.mrf.mxu0
    %v2781 = vadd.f32 0.0, %v2780
    %v2782 = vpop.f32.mrf.mxu0
    %v2783 = vpop.f32.mrf.mxu0
    %v2784 = vpop.f32.mrf.mxu0
    %2785 = vdwg.mxu0
    %v2786 = vld [vmem:[#allocation16 + $0x78] sm:$0xf]
    %v2787 = vld [vmem:[#allocation16 + $0x7c] sm:$0xf]
    %v2788 = vpack.c.bf16 %v2720, %v2720
    %v2791 = vunpack.c.l.b16 %v2786
    %v2792 = vunpack.c.l.b16 %v2787
    %v2793 = vpack.c.b16 %v2792, %v2791
    %v2796 = vsel %vm197, %v2788, 0
    %2798 = vmatprep.subr.bf16.mxu0 0
    %2799 = vmatpush1.bf16.msra.mxu0 0
    %2800 = vmatprep.subr.bf16.mxu0 0
    %2801 = vmatpush1.bf16.msra.mxu0 0
    %2802 = vmatprep.subr.bf16.mxu0 0
    %2803 = vmatpush1.bf16.msra.mxu0 0
    %2804 = vmatprep.subr.bf16.mxu0 0
    %2805 = vmatpush1.bf16.msra.mxu0 0
    %2806 = vmatprep.subr.bf16.mxu0 0
    %2807 = vmatpush1.bf16.msra.mxu0 0
    %2808 = vmatprep.subr.bf16.mxu0 0
    %2809 = vmatpush1.bf16.msra.mxu0 0
    %2810 = vmatprep.subr.bf16.mxu0 0
    %2811 = vmatpush1.bf16.msra.mxu0 0
    %2812 = vmatprep.subr.bf16.mxu0 0
    %2813 = vmatpush1.bf16.msra.mxu0 %v2793
    %2814 = vmatprep.subr.bf16.mxu0 0
    %2815 = vmatpush2.bf16.msra.mxu0 0
    %2816 = vmatprep.subr.bf16.mxu0 0
    %2817 = vmatpush2.bf16.msra.mxu0 0
    %2818 = vmatprep.subr.bf16.mxu0 0
    %2819 = vmatpush2.bf16.msra.mxu0 0
    %2820 = vmatprep.subr.bf16.mxu0 0
    %2821 = vmatpush2.bf16.msra.mxu0 0
    %2822 = vmatprep.subr.bf16.mxu0 0
    %2823 = vmatpush2.bf16.msra.mxu0 0
    %2824 = vmatprep.subr.bf16.mxu0 0
    %2825 = vmatpush2.bf16.msra.mxu0 0
    %2826 = vmatprep.subr.bf16.mxu0 0
    %2827 = vmatpush2.bf16.msra.mxu0 0
    %2828 = vmatprep.subr.bf16.mxu0 0
    %2829 = vmatpush2.bf16.msra.mxu0 0
    %2830 = vmatprep.mubr.bf16.mxu0 0
    %2831 = vmatmul.mubr.bf16.gmra.mxu0 %v2796
    %v2832 = vpop.f32.mrf.mxu0
    %v2833 = vadd.f32 0.0, %v2832
    %v2834 = vpop.f32.mrf.mxu0
    %v2835 = vpop.f32.mrf.mxu0
    %v2836 = vpop.f32.mrf.mxu0
    %2837 = vdwg.mxu0
    %v2838 = vmax.f32 %v2833, 0.0
    %v2839 = vld [vmem:[#allocation16 + $0x80] sm:$0x1]
    %v2840 = vpack.c.bf16 %v2838, %v2838
    %v2841 = vpack.c.bf16 %v2781, %v2781
    %v2843 = vsel %vm197, %v2841, 0
    %2845 = vmatprep.subr.bf16.mxu0 0
    %2846 = vmatpush1.bf16.msra.mxu0 0
    %2847 = vmatprep.subr.bf16.mxu0 0
    %2848 = vmatpush1.bf16.msra.mxu0 0
    %2849 = vmatprep.subr.bf16.mxu0 0
    %2850 = vmatpush1.bf16.msra.mxu0 0
    %2851 = vmatprep.subr.bf16.mxu0 0
    %2852 = vmatpush1.bf16.msra.mxu0 0
    %2853 = vmatprep.subr.bf16.mxu0 0
    %2854 = vmatpush1.bf16.msra.mxu0 0
    %2855 = vmatprep.subr.bf16.mxu0 0
    %2856 = vmatpush1.bf16.msra.mxu0 0
    %2857 = vmatprep.subr.bf16.mxu0 0
    %2858 = vmatpush1.bf16.msra.mxu0 0
    %2859 = vmatprep.subr.bf16.mxu0 0
    %2860 = vmatpush1.bf16.msra.mxu0 %v2793
    %2861 = vmatprep.subr.bf16.mxu0 0
    %2862 = vmatpush2.bf16.msra.mxu0 0
    %2863 = vmatprep.subr.bf16.mxu0 0
    %2864 = vmatpush2.bf16.msra.mxu0 0
    %2865 = vmatprep.subr.bf16.mxu0 0
    %2866 = vmatpush2.bf16.msra.mxu0 0
    %2867 = vmatprep.subr.bf16.mxu0 0
    %2868 = vmatpush2.bf16.msra.mxu0 0
    %2869 = vmatprep.subr.bf16.mxu0 0
    %2870 = vmatpush2.bf16.msra.mxu0 0
    %2871 = vmatprep.subr.bf16.mxu0 0
    %2872 = vmatpush2.bf16.msra.mxu0 0
    %2873 = vmatprep.subr.bf16.mxu0 0
    %2874 = vmatpush2.bf16.msra.mxu0 0
    %2875 = vmatprep.subr.bf16.mxu0 0
    %2876 = vmatpush2.bf16.msra.mxu0 0
    %2877 = vmatprep.mubr.bf16.mxu0 0
    %2878 = vmatmul.mubr.bf16.gmra.mxu0 %v2843
    %v2879 = vpop.f32.mrf.mxu0
    %v2880 = vadd.f32 0.0, %v2879
    %v2881 = vpop.f32.mrf.mxu0
    %v2882 = vpop.f32.mrf.mxu0
    %v2883 = vpop.f32.mrf.mxu0
    %2884 = vdwg.mxu0
    %v2885 = vmax.f32 %v2880, 0.0
    %v2886 = vpack.c.bf16 %v2885, %v2885
    %vm2887 = vcmask 15360
    %v2889 = vsel %vm2887, %v2886, 0
    %v2892 = vsel %vm2740, %v2839, 0
    %2894 = vmatprep.subr.bf16.mxu0 0
    %2895 = vmatpush1.bf16.msra.mxu0 0
    %2896 = vmatprep.subr.bf16.mxu0 0
    %2897 = vmatpush1.bf16.msra.mxu0 0
    %2898 = vmatprep.subr.bf16.mxu0 0
    %2899 = vmatpush1.bf16.msra.mxu0 0
    %2900 = vmatprep.subr.bf16.mxu0 0
    %2901 = vmatpush1.bf16.msra.mxu0 0
    %2902 = vmatprep.subr.bf16.mxu0 0
    %2903 = vmatpush1.bf16.msra.mxu0 0
    %2904 = vmatprep.subr.bf16.mxu0 0
    %2905 = vmatpush1.bf16.msra.mxu0 0
    %2906 = vmatprep.subr.bf16.mxu0 0
    %2907 = vmatpush1.bf16.msra.mxu0 0
    %2908 = vmatprep.subr.bf16.mxu0 0
    %2909 = vmatpush1.bf16.msra.mxu0 %v2892
    %2910 = vmatprep.subr.bf16.mxu0 0
    %2911 = vmatpush2.bf16.msra.mxu0 0
    %2912 = vmatprep.subr.bf16.mxu0 0
    %2913 = vmatpush2.bf16.msra.mxu0 0
    %2914 = vmatprep.subr.bf16.mxu0 0
    %2915 = vmatpush2.bf16.msra.mxu0 0
    %2916 = vmatprep.subr.bf16.mxu0 0
    %2917 = vmatpush2.bf16.msra.mxu0 0
    %2918 = vmatprep.subr.bf16.mxu0 0
    %2919 = vmatpush2.bf16.msra.mxu0 0
    %2920 = vmatprep.subr.bf16.mxu0 0
    %2921 = vmatpush2.bf16.msra.mxu0 0
    %2922 = vmatprep.subr.bf16.mxu0 0
    %2923 = vmatpush2.bf16.msra.mxu0 0
    %2924 = vmatprep.subr.bf16.mxu0 0
    %2925 = vmatpush2.bf16.msra.mxu0 0
    %2926 = vmatprep.mubr.bf16.mxu0 0
    %2927 = vmatmul.mubr.bf16.gmra.mxu0 %v2889
    %v2928 = vpop.f32.mrf.mxu0
    %v2929 = vadd.f32 0.0, %v2928
    %v2930 = vpop.f32.mrf.mxu0
    %v2931 = vpop.f32.mrf.mxu0
    %v2932 = vpop.f32.mrf.mxu0
    %2933 = vdwg.mxu0
    %v2935 = vsel %vm2887, %v2840, 0
    %2937 = vmatprep.subr.bf16.mxu0 0
    %2938 = vmatpush1.bf16.msra.mxu0 0
    %2939 = vmatprep.subr.bf16.mxu0 0
    %2940 = vmatpush1.bf16.msra.mxu0 0
    %2941 = vmatprep.subr.bf16.mxu0 0
    %2942 = vmatpush1.bf16.msra.mxu0 0
    %2943 = vmatprep.subr.bf16.mxu0 0
    %2944 = vmatpush1.bf16.msra.mxu0 0
    %2945 = vmatprep.subr.bf16.mxu0 0
    %2946 = vmatpush1.bf16.msra.mxu0 0
    %2947 = vmatprep.subr.bf16.mxu0 0
    %2948 = vmatpush1.bf16.msra.mxu0 0
    %2949 = vmatprep.subr.bf16.mxu0 0
    %2950 = vmatpush1.bf16.msra.mxu0 0
    %2951 = vmatprep.subr.bf16.mxu0 0
    %2952 = vmatpush1.bf16.msra.mxu0 %v2892
    %2953 = vmatprep.subr.bf16.mxu0 0
    %2954 = vmatpush2.bf16.msra.mxu0 0
    %2955 = vmatprep.subr.bf16.mxu0 0
    %2956 = vmatpush2.bf16.msra.mxu0 0
    %2957 = vmatprep.subr.bf16.mxu0 0
    %2958 = vmatpush2.bf16.msra.mxu0 0
    %2959 = vmatprep.subr.bf16.mxu0 0
    %2960 = vmatpush2.bf16.msra.mxu0 0
    %2961 = vmatprep.subr.bf16.mxu0 0
    %2962 = vmatpush2.bf16.msra.mxu0 0
    %2963 = vmatprep.subr.bf16.mxu0 0
    %2964 = vmatpush2.bf16.msra.mxu0 0
    %2965 = vmatprep.subr.bf16.mxu0 0
    %2966 = vmatpush2.bf16.msra.mxu0 0
    %2967 = vmatprep.subr.bf16.mxu0 0
    %2968 = vmatpush2.bf16.msra.mxu0 0
    %2969 = vmatprep.mubr.bf16.mxu0 0
    %2970 = vmatmul.mubr.bf16.gmra.mxu0 %v2935
    %v2971 = vpop.f32.mrf.mxu0
    %v2972 = vadd.f32 %v2929, %v2971
    %v2973 = vpop.f32.mrf.mxu0
    %v2974 = vpop.f32.mrf.mxu0
    %v2975 = vpop.f32.mrf.mxu0
    %2976 = vdwg.mxu0
    %v2977 = vsub.f32 0.0, %v2972
    %v2978 = vmul.f32 %v2977, 1.442695
    %v2979 = vpow.pop %v2978
    %v2980 = vadd.f32 %v2979, 1.0
    %v2981 = vrcp.pop %v2980
    %v2982 = vld [vmem:[#allocation16 + $0x90] sm:$0x3]
    %v2983 = vld [vmem:[#allocation16 + $0x88] sm:$0xf]
    %v2984 = vld [vmem:[#allocation16 + $0x8c] sm:$0xf]
    %v2985 = vpack.c.bf16 %v2981, %v2981
    %v2988 = vunpack.c.l.b16 %v2983
    %v2989 = vunpack.c.l.b16 %v2984
    %v2990 = vpack.c.b16 %v2989, %v2988
    %v2993 = vsel %vm197, %v2985, 0
    %2995 = vmatprep.subr.bf16.mxu0 0
    %2996 = vmatpush1.bf16.msra.mxu0 0
    %2997 = vmatprep.subr.bf16.mxu0 0
    %2998 = vmatpush1.bf16.msra.mxu0 0
    %2999 = vmatprep.subr.bf16.mxu0 0
    %3000 = vmatpush1.bf16.msra.mxu0 0
    %3001 = vmatprep.subr.bf16.mxu0 0
    %3002 = vmatpush1.bf16.msra.mxu0 0
    %3003 = vmatprep.subr.bf16.mxu0 0
    %3004 = vmatpush1.bf16.msra.mxu0 0
    %3005 = vmatprep.subr.bf16.mxu0 0
    %3006 = vmatpush1.bf16.msra.mxu0 0
    %3007 = vmatprep.subr.bf16.mxu0 0
    %3008 = vmatpush1.bf16.msra.mxu0 0
    %3009 = vmatprep.subr.bf16.mxu0 0
    %3010 = vmatpush1.bf16.msra.mxu0 %v2990
    %3011 = vmatprep.subr.bf16.mxu0 0
    %3012 = vmatpush2.bf16.msra.mxu0 0
    %3013 = vmatprep.subr.bf16.mxu0 0
    %3014 = vmatpush2.bf16.msra.mxu0 0
    %3015 = vmatprep.subr.bf16.mxu0 0
    %3016 = vmatpush2.bf16.msra.mxu0 0
    %3017 = vmatprep.subr.bf16.mxu0 0
    %3018 = vmatpush2.bf16.msra.mxu0 0
    %3019 = vmatprep.subr.bf16.mxu0 0
    %3020 = vmatpush2.bf16.msra.mxu0 0
    %3021 = vmatprep.subr.bf16.mxu0 0
    %3022 = vmatpush2.bf16.msra.mxu0 0
    %3023 = vmatprep.subr.bf16.mxu0 0
    %3024 = vmatpush2.bf16.msra.mxu0 0
    %3025 = vmatprep.subr.bf16.mxu0 0
    %3026 = vmatpush2.bf16.msra.mxu0 0
    %3027 = vmatprep.mubr.bf16.mxu0 0
    %3028 = vmatmul.mubr.bf16.gmra.mxu0 %v2993
    %v3029 = vpop.f32.mrf.mxu0
    %v3030 = vadd.f32 0.0, %v3029
    %v3031 = vpop.f32.mrf.mxu0
    %v3032 = vpop.f32.mrf.mxu0
    %v3033 = vpop.f32.mrf.mxu0
    %3034 = vdwg.mxu0
    %v3035 = vpack.c.bf16 %v3030, %v3030
    %v3037 = vsel %vm2887, %v2982, 0
    %v3040 = vsel %vm2740, %v3035, 0
    %3042 = vmatprep.subr.bf16.mxu0 0
    %3043 = vmatpush1.bf16.msra.mxu0 0
    %3044 = vmatprep.subr.bf16.mxu0 0
    %3045 = vmatpush1.bf16.msra.mxu0 0
    %3046 = vmatprep.subr.bf16.mxu0 0
    %3047 = vmatpush1.bf16.msra.mxu0 0
    %3048 = vmatprep.subr.bf16.mxu0 0
    %3049 = vmatpush1.bf16.msra.mxu0 0
    %3050 = vmatprep.subr.bf16.mxu0 0
    %3051 = vmatpush1.bf16.msra.mxu0 0
    %3052 = vmatprep.subr.bf16.mxu0 0
    %3053 = vmatpush1.bf16.msra.mxu0 0
    %3054 = vmatprep.subr.bf16.mxu0 0
    %3055 = vmatpush1.bf16.msra.mxu0 0
    %3056 = vmatprep.subr.bf16.mxu0 0
    %3057 = vmatpush1.bf16.msra.mxu0 %v3040
    %3058 = vmatprep.subr.bf16.mxu0 0
    %3059 = vmatpush2.bf16.msra.mxu0 0
    %3060 = vmatprep.subr.bf16.mxu0 0
    %3061 = vmatpush2.bf16.msra.mxu0 0
    %3062 = vmatprep.subr.bf16.mxu0 0
    %3063 = vmatpush2.bf16.msra.mxu0 0
    %3064 = vmatprep.subr.bf16.mxu0 0
    %3065 = vmatpush2.bf16.msra.mxu0 0
    %3066 = vmatprep.subr.bf16.mxu0 0
    %3067 = vmatpush2.bf16.msra.mxu0 0
    %3068 = vmatprep.subr.bf16.mxu0 0
    %3069 = vmatpush2.bf16.msra.mxu0 0
    %3070 = vmatprep.subr.bf16.mxu0 0
    %3071 = vmatpush2.bf16.msra.mxu0 0
    %3072 = vmatprep.subr.bf16.mxu0 0
    %3073 = vmatpush2.bf16.msra.mxu0 0
    %3074 = vmatprep.mubr.bf16.mxu0 0
    %3075 = vmatmul.mubr.bf16.gmra.mxu0 %v3037
    %v3076 = vpop.f32.mrf.mxu0
    %v3077 = vadd.f32 0.0, %v3076
    %v3078 = vpop.f32.mrf.mxu0
    %v3079 = vpop.f32.mrf.mxu0
    %v3080 = vpop.f32.mrf.mxu0
    %3081 = vdwg.mxu0
    %v3082 = vmul.f32 %v2611, %v3077
    %v3083 = vld [vmem:[#allocation16 + $0x98] sm:$0xf]
    %v3084 = vld [vmem:[#allocation16 + $0x9c] sm:$0xf]
    %v3085 = vld [vmem:[#allocation16 + $0xa0] sm:$0xf]
    %v3086 = vld [vmem:[#allocation16 + $0xa4] sm:$0xf]
    %v3087 = vpack.c.bf16 %v3082, %v3082
    %v3092 = vunpack.c.l.b16 %v3083
    %v3093 = vunpack.c.l.b16 %v3084
    %v3094 = vunpack.c.l.b16 %v3085
    %v3095 = vunpack.c.l.b16 %v3086
    %v3096 = vpack.c.b16 %v3093, %v3092
    %v3097 = vpack.c.b16 %v3095, %v3094
    %v3101 = vsel %vm2276, %v3087, 0
    %3103 = vmatprep.subr.bf16.mxu0 0
    %3104 = vmatpush1.bf16.msra.mxu0 0
    %3105 = vmatprep.subr.bf16.mxu0 0
    %3106 = vmatpush1.bf16.msra.mxu0 0
    %3107 = vmatprep.subr.bf16.mxu0 0
    %3108 = vmatpush1.bf16.msra.mxu0 0
    %3109 = vmatprep.subr.bf16.mxu0 0
    %3110 = vmatpush1.bf16.msra.mxu0 0
    %3111 = vmatprep.subr.bf16.mxu0 0
    %3112 = vmatpush1.bf16.msra.mxu0 0
    %3113 = vmatprep.subr.bf16.mxu0 0
    %3114 = vmatpush1.bf16.msra.mxu0 0
    %3115 = vmatprep.subr.bf16.mxu0 0
    %3116 = vmatpush1.bf16.msra.mxu0 %v3097
    %3117 = vmatprep.subr.bf16.mxu0 0
    %3118 = vmatpush1.bf16.msra.mxu0 %v3096
    %3119 = vmatprep.subr.bf16.mxu0 0
    %3120 = vmatpush2.bf16.msra.mxu0 0
    %3121 = vmatprep.subr.bf16.mxu0 0
    %3122 = vmatpush2.bf16.msra.mxu0 0
    %3123 = vmatprep.subr.bf16.mxu0 0
    %3124 = vmatpush2.bf16.msra.mxu0 0
    %3125 = vmatprep.subr.bf16.mxu0 0
    %3126 = vmatpush2.bf16.msra.mxu0 0
    %3127 = vmatprep.subr.bf16.mxu0 0
    %3128 = vmatpush2.bf16.msra.mxu0 0
    %3129 = vmatprep.subr.bf16.mxu0 0
    %3130 = vmatpush2.bf16.msra.mxu0 0
    %3131 = vmatprep.subr.bf16.mxu0 0
    %3132 = vmatpush2.bf16.msra.mxu0 0
    %3133 = vmatprep.subr.bf16.mxu0 0
    %3134 = vmatpush2.bf16.msra.mxu0 0
    %3135 = vmatprep.mubr.bf16.mxu0 0
    %3136 = vmatmul.mubr.bf16.gmra.mxu0 %v3101
    %v3137 = vpop.f32.mrf.mxu0
    %v3138 = vadd.f32 0.0, %v3137
    %v3139 = vpop.f32.mrf.mxu0
    %v3140 = vpop.f32.mrf.mxu0
    %v3141 = vpop.f32.mrf.mxu0
    %3142 = vdwg.mxu0
    %vm3143 = vcmask 125952
    %v3144 = vsel %vm3143, %v3082, -inf
    %3145 = vmax.xlane.f32.xlu0 %v3144
    %v3146 = vpop.xlane.xlu0 %3145
    %vm3147 = vcmask 257152
    %v3148 = vsel %vm3147, %v3082, -inf
    %3149 = vmax.xlane.f32.xlu0 %v3148
    %v3150 = vpop.xlane.xlu0 %3149
    %v3151 = vsel %vm2887, %v3138, %v3146
    %v3152 = vsel %vm2736, %v3151, %v3150
    %vm3153 = vcmask 25600
    %3154 = vst.msk [vmem:[#allocation5 + $0x3] sm:$0x3] %vm3153, %v3152
    %vm3155 = vcmask 27650
    %3156 = vst.msk [vmem:[#allocation5 + $0x9] sm:$0xc] %vm3155, %v3152
    %v3157 = vld [vmem:[#allocation5] sm:$0xff]
    %v3158 = vld [vmem:[#allocation5 + $0x8] sm:$0xff]
    %v3159 = vpack.c.bf16 %v3158, %v3157
    %v3160 = vld [vmem:[#allocation16] sm:$0x3]
    %v3161 = vld [vmem:[#allocation16] sm:$0xc]
    %v3163 = vshrl.u32 %v3159, 16
    %v3165 = vshll.u32 %v3159, 16
    %v3167 = vrot.slane %v3165, 1
    %v3168 = vor.u32 %v3163, %v3167
    %v3170 = vunpack.c.l.b16 %v3161
    %v3171 = vpack.c.b16 %v3170, %v3170
    %v3172 = vrot.slane %v3171, 2
    %v3174 = vsel %vm2618, %v3168, 0
    %v3177 = vsel %vm700, %v3172, 0
    %3179 = vmatprep.subr.bf16.mxu0 0
    %3180 = vmatpush1.bf16.msra.mxu0 0
    %3181 = vmatprep.subr.bf16.mxu0 0
    %3182 = vmatpush1.bf16.msra.mxu0 0
    %3183 = vmatprep.subr.bf16.mxu0 0
    %3184 = vmatpush1.bf16.msra.mxu0 0
    %3185 = vmatprep.subr.bf16.mxu0 0
    %3186 = vmatpush1.bf16.msra.mxu0 0
    %3187 = vmatprep.subr.bf16.mxu0 0
    %3188 = vmatpush1.bf16.msra.mxu0 0
    %3189 = vmatprep.subr.bf16.mxu0 0
    %3190 = vmatpush1.bf16.msra.mxu0 0
    %3191 = vmatprep.subr.bf16.mxu0 0
    %3192 = vmatpush1.bf16.msra.mxu0 0
    %3193 = vmatprep.subr.bf16.mxu0 0
    %3194 = vmatpush1.bf16.msra.mxu0 %v3177
    %3195 = vmatprep.subr.bf16.mxu0 0
    %3196 = vmatpush2.bf16.msra.mxu0 0
    %3197 = vmatprep.subr.bf16.mxu0 0
    %3198 = vmatpush2.bf16.msra.mxu0 0
    %3199 = vmatprep.subr.bf16.mxu0 0
    %3200 = vmatpush2.bf16.msra.mxu0 0
    %3201 = vmatprep.subr.bf16.mxu0 0
    %3202 = vmatpush2.bf16.msra.mxu0 0
    %3203 = vmatprep.subr.bf16.mxu0 0
    %3204 = vmatpush2.bf16.msra.mxu0 0
    %3205 = vmatprep.subr.bf16.mxu0 0
    %3206 = vmatpush2.bf16.msra.mxu0 0
    %3207 = vmatprep.subr.bf16.mxu0 0
    %3208 = vmatpush2.bf16.msra.mxu0 0
    %3209 = vmatprep.subr.bf16.mxu0 0
    %3210 = vmatpush2.bf16.msra.mxu0 0
    %3211 = vmatprep.mubr.bf16.mxu0 0
    %3212 = vmatmul.mubr.bf16.gmra.mxu0 %v3174
    %v3213 = vpop.f32.mrf.mxu0
    %v3214 = vadd.f32 0.0, %v3213
    %v3215 = vpop.f32.mrf.mxu0
    %v3216 = vpop.f32.mrf.mxu0
    %v3217 = vadd.f32 0.0, %v3216
    %v3218 = vpop.f32.mrf.mxu0
    %3219 = vdwg.mxu0
    %v3220 = vsel %vm2618, %v3159, 0
    %v3223 = vsel %vm700, %v3160, 0
    %3225 = vmatprep.subr.bf16.mxu0 0
    %3226 = vmatpush1.bf16.msra.mxu0 0
    %3227 = vmatprep.subr.bf16.mxu0 0
    %3228 = vmatpush1.bf16.msra.mxu0 0
    %3229 = vmatprep.subr.bf16.mxu0 0
    %3230 = vmatpush1.bf16.msra.mxu0 0
    %3231 = vmatprep.subr.bf16.mxu0 0
    %3232 = vmatpush1.bf16.msra.mxu0 0
    %3233 = vmatprep.subr.bf16.mxu0 0
    %3234 = vmatpush1.bf16.msra.mxu0 0
    %3235 = vmatprep.subr.bf16.mxu0 0
    %3236 = vmatpush1.bf16.msra.mxu0 0
    %3237 = vmatprep.subr.bf16.mxu0 0
    %3238 = vmatpush1.bf16.msra.mxu0 0
    %3239 = vmatprep.subr.bf16.mxu0 0
    %3240 = vmatpush1.bf16.msra.mxu0 %v3223
    %3241 = vmatprep.subr.bf16.mxu0 0
    %3242 = vmatpush2.bf16.msra.mxu0 0
    %3243 = vmatprep.subr.bf16.mxu0 0
    %3244 = vmatpush2.bf16.msra.mxu0 0
    %3245 = vmatprep.subr.bf16.mxu0 0
    %3246 = vmatpush2.bf16.msra.mxu0 0
    %3247 = vmatprep.subr.bf16.mxu0 0
    %3248 = vmatpush2.bf16.msra.mxu0 0
    %3249 = vmatprep.subr.bf16.mxu0 0
    %3250 = vmatpush2.bf16.msra.mxu0 0
    %3251 = vmatprep.subr.bf16.mxu0 0
    %3252 = vmatpush2.bf16.msra.mxu0 0
    %3253 = vmatprep.subr.bf16.mxu0 0
    %3254 = vmatpush2.bf16.msra.mxu0 0
    %3255 = vmatprep.subr.bf16.mxu0 0
    %3256 = vmatpush2.bf16.msra.mxu0 0
    %3257 = vmatprep.mubr.bf16.mxu0 0
    %3258 = vmatmul.mubr.bf16.gmra.mxu0 %v3220
    %v3259 = vpop.f32.mrf.mxu0
    %v3260 = vadd.f32 %v3214, %v3259
    %v3261 = vpop.f32.mrf.mxu0
    %v3262 = vpop.f32.mrf.mxu0
    %v3263 = vadd.f32 %v3217, %v3262
    %v3264 = vpop.f32.mrf.mxu0
    %3265 = vdwg.mxu0
    %v3266 = vld [vmem:[#allocation16 + $0x4] sm:$0x3]
    %v3268 = vrot.slane %v3159, 1
    %v3270 = vsel %vm2618, %v3268, 0
    %v3273 = vsel %vm700, %v3266, 0
    %3275 = vmatprep.subr.bf16.mxu0 0
    %3276 = vmatpush1.bf16.msra.mxu0 0
    %3277 = vmatprep.subr.bf16.mxu0 0
    %3278 = vmatpush1.bf16.msra.mxu0 0
    %3279 = vmatprep.subr.bf16.mxu0 0
    %3280 = vmatpush1.bf16.msra.mxu0 0
    %3281 = vmatprep.subr.bf16.mxu0 0
    %3282 = vmatpush1.bf16.msra.mxu0 0
    %3283 = vmatprep.subr.bf16.mxu0 0
    %3284 = vmatpush1.bf16.msra.mxu0 0
    %3285 = vmatprep.subr.bf16.mxu0 0
    %3286 = vmatpush1.bf16.msra.mxu0 0
    %3287 = vmatprep.subr.bf16.mxu0 0
    %3288 = vmatpush1.bf16.msra.mxu0 0
    %3289 = vmatprep.subr.bf16.mxu0 0
    %3290 = vmatpush1.bf16.msra.mxu0 %v3273
    %3291 = vmatprep.subr.bf16.mxu0 0
    %3292 = vmatpush2.bf16.msra.mxu0 0
    %3293 = vmatprep.subr.bf16.mxu0 0
    %3294 = vmatpush2.bf16.msra.mxu0 0
    %3295 = vmatprep.subr.bf16.mxu0 0
    %3296 = vmatpush2.bf16.msra.mxu0 0
    %3297 = vmatprep.subr.bf16.mxu0 0
    %3298 = vmatpush2.bf16.msra.mxu0 0
    %3299 = vmatprep.subr.bf16.mxu0 0
    %3300 = vmatpush2.bf16.msra.mxu0 0
    %3301 = vmatprep.subr.bf16.mxu0 0
    %3302 = vmatpush2.bf16.msra.mxu0 0
    %3303 = vmatprep.subr.bf16.mxu0 0
    %3304 = vmatpush2.bf16.msra.mxu0 0
    %3305 = vmatprep.subr.bf16.mxu0 0
    %3306 = vmatpush2.bf16.msra.mxu0 0
    %3307 = vmatprep.mubr.bf16.mxu0 0
    %3308 = vmatmul.mubr.bf16.gmra.mxu0 %v3270
    %v3309 = vpop.f32.mrf.mxu0
    %v3310 = vadd.f32 0.0, %v3309
    %v3311 = vpop.f32.mrf.mxu0
    %v3312 = vpop.f32.mrf.mxu0
    %v3313 = vadd.f32 0.0, %v3312
    %v3314 = vpop.f32.mrf.mxu0
    %3315 = vdwg.mxu0
    %v3316 = vadd.f32 %v3260, %v3310
    %v3317 = vadd.f32 %v3263, %v3313
    %v3318 = vld [vmem:[#allocation16 + $0x4] sm:$0xc]
    %v3319 = vrot.slane %v3163, 1
    %v3320 = vrot.slane %v3165, 2
    %v3321 = vor.u32 %v3319, %v3320
    %v3323 = vunpack.c.l.b16 %v3318
    %v3324 = vpack.c.b16 %v3323, %v3323
    %v3325 = vrot.slane %v3324, 2
    %v3327 = vsel %vm2618, %v3321, 0
    %v3330 = vsel %vm700, %v3325, 0
    %3332 = vmatprep.subr.bf16.mxu0 0
    %3333 = vmatpush1.bf16.msra.mxu0 0
    %3334 = vmatprep.subr.bf16.mxu0 0
    %3335 = vmatpush1.bf16.msra.mxu0 0
    %3336 = vmatprep.subr.bf16.mxu0 0
    %3337 = vmatpush1.bf16.msra.mxu0 0
    %3338 = vmatprep.subr.bf16.mxu0 0
    %3339 = vmatpush1.bf16.msra.mxu0 0
    %3340 = vmatprep.subr.bf16.mxu0 0
    %3341 = vmatpush1.bf16.msra.mxu0 0
    %3342 = vmatprep.subr.bf16.mxu0 0
    %3343 = vmatpush1.bf16.msra.mxu0 0
    %3344 = vmatprep.subr.bf16.mxu0 0
    %3345 = vmatpush1.bf16.msra.mxu0 0
    %3346 = vmatprep.subr.bf16.mxu0 0
    %3347 = vmatpush1.bf16.msra.mxu0 %v3330
    %3348 = vmatprep.subr.bf16.mxu0 0
    %3349 = vmatpush2.bf16.msra.mxu0 0
    %3350 = vmatprep.subr.bf16.mxu0 0
    %3351 = vmatpush2.bf16.msra.mxu0 0
    %3352 = vmatprep.subr.bf16.mxu0 0
    %3353 = vmatpush2.bf16.msra.mxu0 0
    %3354 = vmatprep.subr.bf16.mxu0 0
    %3355 = vmatpush2.bf16.msra.mxu0 0
    %3356 = vmatprep.subr.bf16.mxu0 0
    %3357 = vmatpush2.bf16.msra.mxu0 0
    %3358 = vmatprep.subr.bf16.mxu0 0
    %3359 = vmatpush2.bf16.msra.mxu0 0
    %3360 = vmatprep.subr.bf16.mxu0 0
    %3361 = vmatpush2.bf16.msra.mxu0 0
    %3362 = vmatprep.subr.bf16.mxu0 0
    %3363 = vmatpush2.bf16.msra.mxu0 0
    %3364 = vmatprep.mubr.bf16.mxu0 0
    %3365 = vmatmul.mubr.bf16.gmra.mxu0 %v3327
    %v3366 = vpop.f32.mrf.mxu0
    %v3367 = vadd.f32 0.0, %v3366
    %v3368 = vpop.f32.mrf.mxu0
    %v3369 = vpop.f32.mrf.mxu0
    %v3370 = vadd.f32 0.0, %v3369
    %v3371 = vpop.f32.mrf.mxu0
    %3372 = vdwg.mxu0
    %v3373 = vadd.f32 %v3316, %v3367
    %v3374 = vadd.f32 %v3317, %v3370
    %v3375 = vld [vmem:[#allocation16 + $0x8] sm:$0x3]
    %v3376 = vrot.slane %v3159, 2
    %v3378 = vsel %vm2618, %v3376, 0
    %v3381 = vsel %vm700, %v3375, 0
    %3383 = vmatprep.subr.bf16.mxu0 0
    %3384 = vmatpush1.bf16.msra.mxu0 0
    %3385 = vmatprep.subr.bf16.mxu0 0
    %3386 = vmatpush1.bf16.msra.mxu0 0
    %3387 = vmatprep.subr.bf16.mxu0 0
    %3388 = vmatpush1.bf16.msra.mxu0 0
    %3389 = vmatprep.subr.bf16.mxu0 0
    %3390 = vmatpush1.bf16.msra.mxu0 0
    %3391 = vmatprep.subr.bf16.mxu0 0
    %3392 = vmatpush1.bf16.msra.mxu0 0
    %3393 = vmatprep.subr.bf16.mxu0 0
    %3394 = vmatpush1.bf16.msra.mxu0 0
    %3395 = vmatprep.subr.bf16.mxu0 0
    %3396 = vmatpush1.bf16.msra.mxu0 0
    %3397 = vmatprep.subr.bf16.mxu0 0
    %3398 = vmatpush1.bf16.msra.mxu0 %v3381
    %3399 = vmatprep.subr.bf16.mxu0 0
    %3400 = vmatpush2.bf16.msra.mxu0 0
    %3401 = vmatprep.subr.bf16.mxu0 0
    %3402 = vmatpush2.bf16.msra.mxu0 0
    %3403 = vmatprep.subr.bf16.mxu0 0
    %3404 = vmatpush2.bf16.msra.mxu0 0
    %3405 = vmatprep.subr.bf16.mxu0 0
    %3406 = vmatpush2.bf16.msra.mxu0 0
    %3407 = vmatprep.subr.bf16.mxu0 0
    %3408 = vmatpush2.bf16.msra.mxu0 0
    %3409 = vmatprep.subr.bf16.mxu0 0
    %3410 = vmatpush2.bf16.msra.mxu0 0
    %3411 = vmatprep.subr.bf16.mxu0 0
    %3412 = vmatpush2.bf16.msra.mxu0 0
    %3413 = vmatprep.subr.bf16.mxu0 0
    %3414 = vmatpush2.bf16.msra.mxu0 0
    %3415 = vmatprep.mubr.bf16.mxu0 0
    %3416 = vmatmul.mubr.bf16.gmra.mxu0 %v3378
    %v3417 = vpop.f32.mrf.mxu0
    %v3418 = vadd.f32 0.0, %v3417
    %v3419 = vpop.f32.mrf.mxu0
    %v3420 = vpop.f32.mrf.mxu0
    %v3421 = vadd.f32 0.0, %v3420
    %v3422 = vpop.f32.mrf.mxu0
    %3423 = vdwg.mxu0
    %v3424 = vadd.f32 %v3373, %v3418
    %v3425 = vadd.f32 %v3374, %v3421
    %v3426 = vld [vmem:[#allocation16 + $0x8] sm:$0xc]
    %v3427 = vrot.slane %v3163, 2
    %v3428 = vrot.slane %v3165, 3
    %v3429 = vor.u32 %v3427, %v3428
    %v3431 = vunpack.c.l.b16 %v3426
    %v3432 = vpack.c.b16 %v3431, %v3431
    %v3433 = vrot.slane %v3432, 2
    %v3435 = vsel %vm2618, %v3429, 0
    %v3438 = vsel %vm700, %v3433, 0
    %3440 = vmatprep.subr.bf16.mxu0 0
    %3441 = vmatpush1.bf16.msra.mxu0 0
    %3442 = vmatprep.subr.bf16.mxu0 0
    %3443 = vmatpush1.bf16.msra.mxu0 0
    %3444 = vmatprep.subr.bf16.mxu0 0
    %3445 = vmatpush1.bf16.msra.mxu0 0
    %3446 = vmatprep.subr.bf16.mxu0 0
    %3447 = vmatpush1.bf16.msra.mxu0 0
    %3448 = vmatprep.subr.bf16.mxu0 0
    %3449 = vmatpush1.bf16.msra.mxu0 0
    %3450 = vmatprep.subr.bf16.mxu0 0
    %3451 = vmatpush1.bf16.msra.mxu0 0
    %3452 = vmatprep.subr.bf16.mxu0 0
    %3453 = vmatpush1.bf16.msra.mxu0 0
    %3454 = vmatprep.subr.bf16.mxu0 0
    %3455 = vmatpush1.bf16.msra.mxu0 %v3438
    %3456 = vmatprep.subr.bf16.mxu0 0
    %3457 = vmatpush2.bf16.msra.mxu0 0
    %3458 = vmatprep.subr.bf16.mxu0 0
    %3459 = vmatpush2.bf16.msra.mxu0 0
    %3460 = vmatprep.subr.bf16.mxu0 0
    %3461 = vmatpush2.bf16.msra.mxu0 0
    %3462 = vmatprep.subr.bf16.mxu0 0
    %3463 = vmatpush2.bf16.msra.mxu0 0
    %3464 = vmatprep.subr.bf16.mxu0 0
    %3465 = vmatpush2.bf16.msra.mxu0 0
    %3466 = vmatprep.subr.bf16.mxu0 0
    %3467 = vmatpush2.bf16.msra.mxu0 0
    %3468 = vmatprep.subr.bf16.mxu0 0
    %3469 = vmatpush2.bf16.msra.mxu0 0
    %3470 = vmatprep.subr.bf16.mxu0 0
    %3471 = vmatpush2.bf16.msra.mxu0 0
    %3472 = vmatprep.mubr.bf16.mxu0 0
    %3473 = vmatmul.mubr.bf16.gmra.mxu0 %v3435
    %v3474 = vpop.f32.mrf.mxu0
    %v3475 = vadd.f32 0.0, %v3474
    %v3476 = vpop.f32.mrf.mxu0
    %v3477 = vpop.f32.mrf.mxu0
    %v3478 = vadd.f32 0.0, %v3477
    %v3479 = vpop.f32.mrf.mxu0
    %3480 = vdwg.mxu0
    %v3481 = vadd.f32 %v3424, %v3475
    %v3482 = vadd.f32 %v3425, %v3478
    %v3483 = vld [vmem:[#allocation16 + $0xc] sm:$0x3]
    %v3484 = vrot.slane %v3159, 3
    %v3486 = vsel %vm2618, %v3484, 0
    %v3489 = vsel %vm700, %v3483, 0
    %3491 = vmatprep.subr.bf16.mxu0 0
    %3492 = vmatpush1.bf16.msra.mxu0 0
    %3493 = vmatprep.subr.bf16.mxu0 0
    %3494 = vmatpush1.bf16.msra.mxu0 0
    %3495 = vmatprep.subr.bf16.mxu0 0
    %3496 = vmatpush1.bf16.msra.mxu0 0
    %3497 = vmatprep.subr.bf16.mxu0 0
    %3498 = vmatpush1.bf16.msra.mxu0 0
    %3499 = vmatprep.subr.bf16.mxu0 0
    %3500 = vmatpush1.bf16.msra.mxu0 0
    %3501 = vmatprep.subr.bf16.mxu0 0
    %3502 = vmatpush1.bf16.msra.mxu0 0
    %3503 = vmatprep.subr.bf16.mxu0 0
    %3504 = vmatpush1.bf16.msra.mxu0 0
    %3505 = vmatprep.subr.bf16.mxu0 0
    %3506 = vmatpush1.bf16.msra.mxu0 %v3489
    %3507 = vmatprep.subr.bf16.mxu0 0
    %3508 = vmatpush2.bf16.msra.mxu0 0
    %3509 = vmatprep.subr.bf16.mxu0 0
    %3510 = vmatpush2.bf16.msra.mxu0 0
    %3511 = vmatprep.subr.bf16.mxu0 0
    %3512 = vmatpush2.bf16.msra.mxu0 0
    %3513 = vmatprep.subr.bf16.mxu0 0
    %3514 = vmatpush2.bf16.msra.mxu0 0
    %3515 = vmatprep.subr.bf16.mxu0 0
    %3516 = vmatpush2.bf16.msra.mxu0 0
    %3517 = vmatprep.subr.bf16.mxu0 0
    %3518 = vmatpush2.bf16.msra.mxu0 0
    %3519 = vmatprep.subr.bf16.mxu0 0
    %3520 = vmatpush2.bf16.msra.mxu0 0
    %3521 = vmatprep.subr.bf16.mxu0 0
    %3522 = vmatpush2.bf16.msra.mxu0 0
    %3523 = vmatprep.mubr.bf16.mxu0 0
    %3524 = vmatmul.mubr.bf16.gmra.mxu0 %v3486
    %v3525 = vpop.f32.mrf.mxu0
    %v3526 = vadd.f32 0.0, %v3525
    %v3527 = vpop.f32.mrf.mxu0
    %v3528 = vpop.f32.mrf.mxu0
    %v3529 = vadd.f32 0.0, %v3528
    %v3530 = vpop.f32.mrf.mxu0
    %3531 = vdwg.mxu0
    %v3532 = vadd.f32 %v3481, %v3526
    %v3533 = vadd.f32 %v3482, %v3529
    %v3534 = vld [vmem:[#allocation16 + $0x50] sm:$0x3]
    %v3535 = vpack.c.bf16 %v3533, %v3532
    %vm3536 = vcmask 80896
    %v3538 = vsel %vm3536, %v3534, 0
    %vm3540 = vcmask 1044480
    %v3542 = vsel %vm3540, %v3535, 0
    %3544 = vmatprep.subr.bf16.mxu0 0
    %3545 = vmatpush1.bf16.msra.mxu0 0
    %3546 = vmatprep.subr.bf16.mxu0 0
    %3547 = vmatpush1.bf16.msra.mxu0 0
    %3548 = vmatprep.subr.bf16.mxu0 0
    %3549 = vmatpush1.bf16.msra.mxu0 0
    %3550 = vmatprep.subr.bf16.mxu0 0
    %3551 = vmatpush1.bf16.msra.mxu0 0
    %3552 = vmatprep.subr.bf16.mxu0 0
    %3553 = vmatpush1.bf16.msra.mxu0 0
    %3554 = vmatprep.subr.bf16.mxu0 0
    %3555 = vmatpush1.bf16.msra.mxu0 0
    %3556 = vmatprep.subr.bf16.mxu0 0
    %3557 = vmatpush1.bf16.msra.mxu0 0
    %3558 = vmatprep.subr.bf16.mxu0 0
    %3559 = vmatpush1.bf16.msra.mxu0 %v3542
    %3560 = vmatprep.subr.bf16.mxu0 0
    %3561 = vmatpush2.bf16.msra.mxu0 0
    %3562 = vmatprep.subr.bf16.mxu0 0
    %3563 = vmatpush2.bf16.msra.mxu0 0
    %3564 = vmatprep.subr.bf16.mxu0 0
    %3565 = vmatpush2.bf16.msra.mxu0 0
    %3566 = vmatprep.subr.bf16.mxu0 0
    %3567 = vmatpush2.bf16.msra.mxu0 0
    %3568 = vmatprep.subr.bf16.mxu0 0
    %3569 = vmatpush2.bf16.msra.mxu0 0
    %3570 = vmatprep.subr.bf16.mxu0 0
    %3571 = vmatpush2.bf16.msra.mxu0 0
    %3572 = vmatprep.subr.bf16.mxu0 0
    %3573 = vmatpush2.bf16.msra.mxu0 0
    %3574 = vmatprep.subr.bf16.mxu0 0
    %3575 = vmatpush2.bf16.msra.mxu0 0
    %3576 = vmatprep.mubr.bf16.mxu0 0
    %3577 = vmatmul.mubr.bf16.gmra.mxu0 %v3538
    %v3578 = vpop.f32.mrf.mxu0
    %v3579 = vadd.f32 0.0, %v3578
    %v3580 = vpop.f32.mrf.mxu0
    %v3581 = vpop.f32.mrf.mxu0
    %v3582 = vpop.f32.mrf.mxu0
    %3583 = vdwg.mxu0
    %v3584 = vsub.f32 0.0, %v3579
    %v3585 = vmul.f32 %v3584, 1.442695
    %v3586 = vpow.pop %v3585
    %v3587 = vadd.f32 %v3586, 1.0
    %v3588 = vrcp.pop %v3587
    %v3589 = vmul.f32 %v3588, %v3082
    %v3590 = vld [vmem:[#allocation14] sm:$0xff]
    %v3591 = vld [vmem:[#allocation14 + $0x8] sm:$0xff]
    %v3592 = vld [vmem:[#allocation14 + $0x10] sm:$0xff]
    %v3593 = vld [vmem:[#allocation14 + $0x18] sm:$0xff]
    %v3594 = vpack.c.bf16 %v3589, %v3589
    %v3599 = vunpack.c.l.b16 %v3590
    %v3600 = vunpack.c.h.b16 %v3590
    %v3601 = vunpack.c.l.b16 %v3591
    %v3602 = vunpack.c.h.b16 %v3591
    %v3603 = vunpack.c.l.b16 %v3592
    %v3604 = vunpack.c.h.b16 %v3592
    %v3605 = vunpack.c.l.b16 %v3593
    %v3606 = vunpack.c.h.b16 %v3593
    %v3607 = vpack.c.b16 %v3601, %v3599
    %v3608 = vpack.c.b16 %v3602, %v3600
    %v3609 = vpack.c.b16 %v3605, %v3603
    %v3610 = vpack.c.b16 %v3606, %v3604
    %v3616 = vsel %vm2276, %v3594, 0
    %3618 = vmatprep.subr.bf16.mxu0 0
    %3619 = vmatpush1.bf16.msra.mxu0 0
    %3620 = vmatprep.subr.bf16.mxu0 0
    %3621 = vmatpush1.bf16.msra.mxu0 0
    %3622 = vmatprep.subr.bf16.mxu0 0
    %3623 = vmatpush1.bf16.msra.mxu0 0
    %3624 = vmatprep.subr.bf16.mxu0 0
    %3625 = vmatpush1.bf16.msra.mxu0 0
    %3626 = vmatprep.subr.bf16.mxu0 0
    %3627 = vmatpush1.bf16.msra.mxu0 0
    %3628 = vmatprep.subr.bf16.mxu0 0
    %3629 = vmatpush1.bf16.msra.mxu0 0
    %3630 = vmatprep.subr.bf16.mxu0 %v3610
    %3631 = vmatpush1.bf16.msra.mxu0 %v3609
    %3632 = vmatprep.subr.bf16.mxu0 %v3608
    %3633 = vmatpush1.bf16.msra.mxu0 %v3607
    %3634 = vmatprep.subr.bf16.mxu0 0
    %3635 = vmatpush2.bf16.msra.mxu0 0
    %3636 = vmatprep.subr.bf16.mxu0 0
    %3637 = vmatpush2.bf16.msra.mxu0 0
    %3638 = vmatprep.subr.bf16.mxu0 0
    %3639 = vmatpush2.bf16.msra.mxu0 0
    %3640 = vmatprep.subr.bf16.mxu0 0
    %3641 = vmatpush2.bf16.msra.mxu0 0
    %3642 = vmatprep.subr.bf16.mxu0 0
    %3643 = vmatpush2.bf16.msra.mxu0 0
    %3644 = vmatprep.subr.bf16.mxu0 0
    %3645 = vmatpush2.bf16.msra.mxu0 0
    %3646 = vmatprep.subr.bf16.mxu0 0
    %3647 = vmatpush2.bf16.msra.mxu0 0
    %3648 = vmatprep.subr.bf16.mxu0 0
    %3649 = vmatpush2.bf16.msra.mxu0 0
    %3650 = vmatprep.mubr.bf16.mxu0 0
    %3651 = vmatmul.mubr.bf16.gmra.mxu0 %v3616
    %v3652 = vpop.f32.mrf.mxu0
    %v3653 = vadd.f32 0.0, %v3652
    %v3654 = vpop.f32.mrf.mxu0
    %v3655 = vadd.f32 0.0, %v3654
    %v3656 = vpop.f32.mrf.mxu0
    %v3657 = vpop.f32.mrf.mxu0
    %3658 = vdwg.mxu0
    %v3659 = vld [vmem:[#allocation16 + $0xa8] sm:$0x3]
    %v3660 = vpack.c.bf16 %v3653, %v3653
    %v3661 = vpack.c.bf16 %v3655, %v3655
    %v3663 = vunpack.c.l.b16 %v3659
    %v3664 = vpack.c.b16 %v3663, %v3663
    %v3665 = vrot.slane %v3664, 1
    %v3667 = vsel %vm2618, %v3665, 0
    %v3670 = vsel %vm700, %v3661, 0
    %3672 = vmatprep.subr.bf16.mxu0 0
    %3673 = vmatpush1.bf16.msra.mxu0 0
    %3674 = vmatprep.subr.bf16.mxu0 0
    %3675 = vmatpush1.bf16.msra.mxu0 0
    %3676 = vmatprep.subr.bf16.mxu0 0
    %3677 = vmatpush1.bf16.msra.mxu0 0
    %3678 = vmatprep.subr.bf16.mxu0 0
    %3679 = vmatpush1.bf16.msra.mxu0 0
    %3680 = vmatprep.subr.bf16.mxu0 0
    %3681 = vmatpush1.bf16.msra.mxu0 0
    %3682 = vmatprep.subr.bf16.mxu0 0
    %3683 = vmatpush1.bf16.msra.mxu0 0
    %3684 = vmatprep.subr.bf16.mxu0 0
    %3685 = vmatpush1.bf16.msra.mxu0 0
    %3686 = vmatprep.subr.bf16.mxu0 0
    %3687 = vmatpush1.bf16.msra.mxu0 %v3670
    %3688 = vmatprep.subr.bf16.mxu0 0
    %3689 = vmatpush2.bf16.msra.mxu0 0
    %3690 = vmatprep.subr.bf16.mxu0 0
    %3691 = vmatpush2.bf16.msra.mxu0 0
    %3692 = vmatprep.subr.bf16.mxu0 0
    %3693 = vmatpush2.bf16.msra.mxu0 0
    %3694 = vmatprep.subr.bf16.mxu0 0
    %3695 = vmatpush2.bf16.msra.mxu0 0
    %3696 = vmatprep.subr.bf16.mxu0 0
    %3697 = vmatpush2.bf16.msra.mxu0 0
    %3698 = vmatprep.subr.bf16.mxu0 0
    %3699 = vmatpush2.bf16.msra.mxu0 0
    %3700 = vmatprep.subr.bf16.mxu0 0
    %3701 = vmatpush2.bf16.msra.mxu0 0
    %3702 = vmatprep.subr.bf16.mxu0 0
    %3703 = vmatpush2.bf16.msra.mxu0 0
    %3704 = vmatprep.mubr.bf16.mxu0 0
    %3705 = vmatmul.mubr.bf16.gmra.mxu0 %v3667
    %v3706 = vpop.f32.mrf.mxu0
    %v3707 = vadd.f32 0.0, %v3706
    %v3708 = vpop.f32.mrf.mxu0
    %v3709 = vpop.f32.mrf.mxu0
    %v3710 = vpop.f32.mrf.mxu0
    %3711 = vdwg.mxu0
    %v3713 = vsel %vm2618, %v3659, 0
    %v3716 = vsel %vm700, %v3660, 0
    %3718 = vmatprep.subr.bf16.mxu0 0
    %3719 = vmatpush1.bf16.msra.mxu0 0
    %3720 = vmatprep.subr.bf16.mxu0 0
    %3721 = vmatpush1.bf16.msra.mxu0 0
    %3722 = vmatprep.subr.bf16.mxu0 0
    %3723 = vmatpush1.bf16.msra.mxu0 0
    %3724 = vmatprep.subr.bf16.mxu0 0
    %3725 = vmatpush1.bf16.msra.mxu0 0
    %3726 = vmatprep.subr.bf16.mxu0 0
    %3727 = vmatpush1.bf16.msra.mxu0 0
    %3728 = vmatprep.subr.bf16.mxu0 0
    %3729 = vmatpush1.bf16.msra.mxu0 0
    %3730 = vmatprep.subr.bf16.mxu0 0
    %3731 = vmatpush1.bf16.msra.mxu0 0
    %3732 = vmatprep.subr.bf16.mxu0 0
    %3733 = vmatpush1.bf16.msra.mxu0 %v3716
    %3734 = vmatprep.subr.bf16.mxu0 0
    %3735 = vmatpush2.bf16.msra.mxu0 0
    %3736 = vmatprep.subr.bf16.mxu0 0
    %3737 = vmatpush2.bf16.msra.mxu0 0
    %3738 = vmatprep.subr.bf16.mxu0 0
    %3739 = vmatpush2.bf16.msra.mxu0 0
    %3740 = vmatprep.subr.bf16.mxu0 0
    %3741 = vmatpush2.bf16.msra.mxu0 0
    %3742 = vmatprep.subr.bf16.mxu0 0
    %3743 = vmatpush2.bf16.msra.mxu0 0
    %3744 = vmatprep.subr.bf16.mxu0 0
    %3745 = vmatpush2.bf16.msra.mxu0 0
    %3746 = vmatprep.subr.bf16.mxu0 0
    %3747 = vmatpush2.bf16.msra.mxu0 0
    %3748 = vmatprep.subr.bf16.mxu0 0
    %3749 = vmatpush2.bf16.msra.mxu0 0
    %3750 = vmatprep.mubr.bf16.mxu0 0
    %3751 = vmatmul.mubr.bf16.gmra.mxu0 %v3713
    %v3752 = vpop.f32.mrf.mxu0
    %v3753 = vadd.f32 %v3707, %v3752
    %v3754 = vpop.f32.mrf.mxu0
    %v3755 = vpop.f32.mrf.mxu0
    %v3756 = vpop.f32.mrf.mxu0
    %3757 = vdwg.mxu0
    %v3758 = vld [vmem:[%s9 + $0x4] ss:$0 sm:$0xff]
    %v3759 = vadd.f32 %v3753, %v3758
    %v3760 = vtanh.pop %v3759
    %v3761 = vld [vmem:[#allocation16 + $0xb0] sm:$0xf]
    %v3762 = vld [vmem:[#allocation16 + $0xb4] sm:$0xf]
    %v3763 = vld [vmem:[#allocation16 + $0xb8] sm:$0xf]
    %v3764 = vld [vmem:[#allocation16 + $0xbc] sm:$0xf]
    %v3765 = vld [vmem:[#allocation16 + $0xc0] sm:$0xf]
    %v3766 = vld [vmem:[#allocation16 + $0xc4] sm:$0xf]
    %v3767 = vld [vmem:[#allocation16 + $0xc8] sm:$0xf]
    %v3768 = vld [vmem:[#allocation16 + $0xcc] sm:$0xf]
    %v3769 = vld [vmem:[#allocation16 + $0xd0] sm:$0xf]
    %v3770 = vld [vmem:[#allocation16 + $0xd4] sm:$0xf]
    %v3771 = vld [vmem:[#allocation16 + $0xd8] sm:$0xf]
    %v3772 = vld [vmem:[#allocation16 + $0xdc] sm:$0xf]
    %v3773 = vld [vmem:[#allocation16 + $0xe0] sm:$0xf]
    %v3774 = vld [vmem:[#allocation16 + $0xe4] sm:$0xf]
    %v3775 = vld [vmem:[#allocation16 + $0xe8] sm:$0xf]
    %v3776 = vld [vmem:[#allocation16 + $0xec] sm:$0xf]
    %v3777 = vpack.c.bf16 %v3760, %v3760
    %v3778 = vld [vmem:[%s9 + $0x5] ss:$0 sm:$0xff]
    %v3795 = vunpack.c.l.b16 %v3761
    %v3796 = vunpack.c.l.b16 %v3762
    %v3797 = vunpack.c.l.b16 %v3763
    %v3798 = vunpack.c.l.b16 %v3764
    %v3799 = vunpack.c.l.b16 %v3765
    %v3800 = vunpack.c.l.b16 %v3766
    %v3801 = vunpack.c.l.b16 %v3767
    %v3802 = vunpack.c.l.b16 %v3768
    %v3803 = vunpack.c.l.b16 %v3769
    %v3804 = vunpack.c.l.b16 %v3770
    %v3805 = vunpack.c.l.b16 %v3771
    %v3806 = vunpack.c.l.b16 %v3772
    %v3807 = vunpack.c.l.b16 %v3773
    %v3808 = vunpack.c.l.b16 %v3774
    %v3809 = vunpack.c.l.b16 %v3775
    %v3810 = vunpack.c.l.b16 %v3776
    %v3811 = vpack.c.b16 %v3796, %v3795
    %v3812 = vpack.c.b16 %v3798, %v3797
    %v3813 = vpack.c.b16 %v3800, %v3799
    %v3814 = vpack.c.b16 %v3802, %v3801
    %v3815 = vpack.c.b16 %v3804, %v3803
    %v3816 = vpack.c.b16 %v3806, %v3805
    %v3817 = vpack.c.b16 %v3808, %v3807
    %v3818 = vpack.c.b16 %v3810, %v3809
    %3827 = vmatprep.subr.bf16.mxu0 0
    %3828 = vmatpush1.bf16.msra.mxu0 %v3818
    %3829 = vmatprep.subr.bf16.mxu0 0
    %3830 = vmatpush1.bf16.msra.mxu0 %v3817
    %3831 = vmatprep.subr.bf16.mxu0 0
    %3832 = vmatpush1.bf16.msra.mxu0 %v3816
    %3833 = vmatprep.subr.bf16.mxu0 0
    %3834 = vmatpush1.bf16.msra.mxu0 %v3815
    %3835 = vmatprep.subr.bf16.mxu0 0
    %3836 = vmatpush1.bf16.msra.mxu0 %v3814
    %3837 = vmatprep.subr.bf16.mxu0 0
    %3838 = vmatpush1.bf16.msra.mxu0 %v3813
    %3839 = vmatprep.subr.bf16.mxu0 0
    %3840 = vmatpush1.bf16.msra.mxu0 %v3812
    %3841 = vmatprep.subr.bf16.mxu0 0
    %3842 = vmatpush1.bf16.msra.mxu0 %v3811
    %3843 = vmatprep.subr.bf16.mxu0 0
    %3844 = vmatpush2.bf16.msra.mxu0 0
    %3845 = vmatprep.subr.bf16.mxu0 0
    %3846 = vmatpush2.bf16.msra.mxu0 0
    %3847 = vmatprep.subr.bf16.mxu0 0
    %3848 = vmatpush2.bf16.msra.mxu0 0
    %3849 = vmatprep.subr.bf16.mxu0 0
    %3850 = vmatpush2.bf16.msra.mxu0 0
    %3851 = vmatprep.subr.bf16.mxu0 0
    %3852 = vmatpush2.bf16.msra.mxu0 0
    %3853 = vmatprep.subr.bf16.mxu0 0
    %3854 = vmatpush2.bf16.msra.mxu0 0
    %3855 = vmatprep.subr.bf16.mxu0 0
    %3856 = vmatpush2.bf16.msra.mxu0 0
    %3857 = vmatprep.subr.bf16.mxu0 0
    %3858 = vmatpush2.bf16.msra.mxu0 0
    %3859 = vmatprep.mubr.bf16.mxu0 0
    %3860 = vmatmul.mubr.bf16.gmra.mxu0 %v3777
    %v3861 = vpop.f32.mrf.mxu0
    %v3862 = vadd.f32 %v3778, %v3861
    %v3863 = vpop.f32.mrf.mxu0
    %v3864 = vpop.f32.mrf.mxu0
    %v3865 = vpop.f32.mrf.mxu0
    %3866 = vdwg.mxu0
    %v3867 = vsub.f32 0.0, %v3862
    %v3868 = vmul.f32 %v3867, 1.442695
    %v3869 = vpow.pop %v3868
    %v3870 = vadd.f32 %v3869, 1.0
    %v3871 = vrcp.pop %v3870
    %v3872 = vmul.f32 1.0, %v3871
    %vm3873 = vcmask 1024
    %3874 = vst.msk [vmem:[%s10] sm:$0x3] %vm3873, %v3872
    // Predicated region
    $region70: #{forward.1} parent=1 // pred_check
      _
    $region71: #{forward.1} parent=1 // pred_check_branch
      %3876 = sbr.rel (0) target = $region73
    $region72: #{forward.1} parent=1 // pred_region
      _
    $region73: #{forward.1} parent=1 // pred_fallthru
      _
    // Predicated region
    $region74: #{forward.1} parent=1 // pred_check
      _
    $region75: #{forward.1} parent=1 // pred_check_branch
      %3878 = sbr.rel (0) target = $region77
    $region76: #{forward.1} parent=1 // pred_region
      _
    $region77: #{forward.1} parent=1 // pred_fallthru
      _
    %3879 = vsyncpa [#allocation7], 1
    %3880 = vsyncpa [#allocation9], 1
    %3881 = vsyncpa [#allocation12], 1
    %3882 = vsyncpa [#allocation15], 1

</llo_original>
